<compile_context>
chip_gen: v6e
topology: v6e:2x2x1
jax: 0.10.0
libtpu: 0.0.40
codegen_flags: <defaults>
</compile_context>

<pallas_src>
import math

import jax
import jax.numpy as jnp
from jax.experimental import pallas as pl
from jax.experimental.pallas import tpu as pltpu

# ---- scaled-down SciBERT config (real: hidden=768, layers=12, heads=12) ----
VOCAB = 100
TYPE_VOCAB = 2
MAX_POS = 64
HIDDEN = 32
N_HEADS = 4
HEAD_DIM = HIDDEN // N_HEADS
N_LAYERS = 2
INTERMEDIATE = 64
NUM_LABELS = 124           # kept from torch.nn.Linear(768, 124)
NUM_LABELS_PAD = 128       # pad classifier N to a full lane group; slice back to 124
LN_EPS = 1e-12


# ----------------------------- shared math helpers -----------------------------

def _gelu(x):
    # TODO(synk): HF BERT uses exact erf-GELU; tanh approximation used for TPU-safe lowering.
    c = math.sqrt(2.0 / math.pi)
    return 0.5 * x * (1.0 + jnp.tanh(c * (x + 0.044715 * x * x * x)))


def _layernorm(y, g, b):
    # f32 statistics (eps=1e-12 is below bf16 resolution).
    mu = jnp.mean(y, axis=-1, keepdims=True)
    yc = y - mu
    var = jnp.mean(yc * yc, axis=-1, keepdims=True)
    return yc * jax.lax.rsqrt(var + LN_EPS) * g + b


def _bf16(x):
    return x.astype(jnp.bfloat16)


# ----------------------------- fused forward kernel -----------------------------

def _bert_forward_kernel(emb_ref, bias_ref, eg_ref, ebeta_ref,
                         wqkv_ref, bqkv_ref, wo_ref, bo_ref, g1_ref, be1_ref,
                         w1_ref, bf1_ref, w2_ref, bf2_ref, g2_ref, be2_ref,
                         pw_ref, pb_ref, cw_ref, cb_ref, o_ref):
    """One grid step = one batch element: embeddings LN -> encoder layers ->
    pooler -> dropout(p=0) -> classifier.  Everything stays in VMEM/vregs."""
    H, nH, dH = HIDDEN, N_HEADS, HEAD_DIM
    S = emb_ref.shape[1]

    # Embedding LayerNorm (word+pos+type sum is pre-added in JAX glue).
    x = _layernorm(emb_ref[0], eg_ref[...], ebeta_ref[...])              # (S, H) f32

    # Additive attention mask, broadcast hoisted out of the layer loop.
    bias_b = jnp.broadcast_to(bias_ref[0], (nH, S, S))                   # 0 / -10000

    for l in range(N_LAYERS):                                            # static unroll
        # ---------------- self-attention block ----------------
        # Fused QKV projection (1/sqrt(dH) already folded into Q weights/bias).
        qkv = jnp.dot(_bf16(x), _bf16(wqkv_ref[l]),
                      preferred_element_type=jnp.float32) + bqkv_ref[l]  # (S, 3H)

        # Head split: static lane slices stacked along a new leading head axis.
        qh = jnp.stack([qkv[:, h * dH:(h + 1) * dH] for h in range(nH)])              # (nH,S,dH)
        kh = jnp.stack([qkv[:, H + h * dH:H + (h + 1) * dH] for h in range(nH)])
        vh = jnp.stack([qkv[:, 2 * H + h * dH:2 * H + (h + 1) * dH] for h in range(nH)])

        # All-head scores / context with batched einsums (no per-head matmul loop).
        s = jnp.einsum("hqd,hkd->hqk", _bf16(qh), _bf16(kh),
                       preferred_element_type=jnp.float32)               # (nH,S,S)
        s = s + bias_b
        s = s - jnp.max(s, axis=-1, keepdims=True)                       # f32 stable softmax
        p = jnp.exp(s)
        p = p * pl.reciprocal(jnp.sum(p, axis=-1, keepdims=True), approx=True)

        ctx = jnp.einsum("hqk,hkd->hqd", _bf16(p), _bf16(vh),
                         preferred_element_type=jnp.float32)             # (nH,S,dH)
        ctx_flat = jnp.concatenate([ctx[h] for h in range(nH)], axis=-1)  # (S, H)

        attn = jnp.dot(_bf16(ctx_flat), _bf16(wo_ref[l]),
                       preferred_element_type=jnp.float32) + bo_ref[l]
        x = _layernorm(attn + x, g1_ref[l], be1_ref[l])

        # ---------------- feed-forward block ----------------
        h1 = jnp.dot(_bf16(x), _bf16(w1_ref[l]),
                     preferred_element_type=jnp.float32) + bf1_ref[l]
        h1 = _gelu(h1)
        h2 = jnp.dot(_bf16(h1), _bf16(w2_ref[l]),
                     preferred_element_type=jnp.float32) + bf2_ref[l]
        x = _layernorm(h2 + x, g2_ref[l], be2_ref[l])

    # ---------------- pooler + dropout(p=0.0) + classifier ----------------
    cls_tok = x[0:1, :]                                                   # (1, H) [CLS]
    pooled = jnp.tanh(jnp.dot(_bf16(cls_tok), _bf16(pw_ref[...]),
                              preferred_element_type=jnp.float32) + pb_ref[...])
    logits = jnp.dot(_bf16(pooled), _bf16(cw_ref[...]),
                     preferred_element_type=jnp.float32) + cb_ref[...]    # (1, 128) lane-dense
    o_ref[0] = logits.astype(o_ref.dtype)


def bert_encoder_classify(emb, mask_bias, params):
    """emb: (B,S,H) summed embeddings; mask_bias: (B,1,S) additive mask.
    Returns padded logits (B, NUM_LABELS_PAD)."""
    B, S, H = emb.shape
    L, I, NP = N_LAYERS, INTERMEDIATE, NUM_LABELS_PAD
    lyr = params["layers_stacked"]

    def rep2(a):   # (N,)   -> (1, N)
        return a.reshape(1, -1)

    def rep3(a):   # (L, N) -> (L, 1, N)
        return a.reshape(L, 1, -1)

    inputs = [
        emb,                                                  # (B,S,H)
        mask_bias,                                            # (B,1,S)
        rep2(params["emb_ln_g"]), rep2(params["emb_ln_b"]),
        lyr["wqkv"], rep3(lyr["bqkv"]),
        lyr["wo"],   rep3(lyr["bo"]),
        rep3(lyr["ln1_g"]), rep3(lyr["ln1_b"]),
        lyr["w1"],   rep3(lyr["b1"]),
        lyr["w2"],   rep3(lyr["b2"]),
        rep3(lyr["ln2_g"]), rep3(lyr["ln2_b"]),
        params["pool_w"], rep2(params["pool_b"]),
        params["cls_w_pad"], rep2(params["cls_b_pad"]),
    ]

    def batch_spec(shape):
        return pl.BlockSpec(shape, lambda b, _n=len(shape): (b,) + (0,) * (_n - 1))

    def const_spec(shape):
        return pl.BlockSpec(shape, lambda b, _n=len(shape): (0,) * _n)

    in_specs = [batch_spec((1, S, H)), batch_spec((1, 1, S))]
    in_specs += [const_spec(a.shape) for a in inputs[2:]]

    flops_layer = (2 * S * H * 3 * H                      # qkv projection
                   + 2 * (2 * N_HEADS * S * S * HEAD_DIM)  # scores + context
                   + 2 * S * H * H                         # output projection
                   + 2 * (2 * S * H * I)                   # FFN up + down
                   + 20 * S * H)                           # adds / LayerNorms
    flops = B * (L * flops_layer + 2 * H * H + 2 * H * NP)
    trans = B * (L * (N_HEADS * S * S + N_HEADS * S + S * I + 4 * S) + S + H)
    bytes_accessed = 4 * (sum(int(a.size) for a in inputs) + B * NP)

    out = pl.pallas_call(
        _bert_forward_kernel,
        out_shape=jax.ShapeDtypeStruct((B, 1, NP), jnp.float32),
        grid=(B,),
        in_specs=in_specs,
        out_specs=pl.BlockSpec((1, 1, NP), lambda b: (b, 0, 0)),
        compiler_params=pltpu.CompilerParams(
            dimension_semantics=("parallel",)),
        cost_estimate=pl.CostEstimate(flops=flops, transcendentals=trans,
                                      bytes_accessed=bytes_accessed),
    )(*inputs)
    return out[:, 0, :]                                       # (B, NUM_LABELS_PAD)


# --------------------------- parameters (synthetic) ---------------------------

class _KeyGen:
    def __init__(self, key):
        self._key = key

    def __call__(self):
        self._key, sub = jax.random.split(self._key)
        return sub


def init_params(key):
    kg = _KeyGen(key)

    def nrm(shape, scale=0.02):
        return scale * jax.random.normal(kg(), shape, dtype=jnp.float32)

    assert NUM_LABELS_PAD >= NUM_LABELS and NUM_LABELS_PAD % 128 == 0
    cls_w = nrm((HIDDEN, NUM_LABELS))
    # pad classifier weight/bias columns 124 -> 128 with zeros (sliced back after kernel)
    cls_w_pad = jnp.zeros((HIDDEN, NUM_LABELS_PAD), jnp.float32).at[:, :NUM_LABELS].set(cls_w)
    cls_b_pad = jnp.zeros((NUM_LABELS_PAD,), jnp.float32)   # padded tail must stay zero

    inv_sqrt_dh = 1.0 / math.sqrt(HEAD_DIM)
    layers = []
    for _ in range(N_LAYERS):
        # wqkv / bqkv are the concatenation [wq | wk | wv], [bq | bk | bv].
        wqkv = nrm((HIDDEN, 3 * HIDDEN))
        bqkv = jnp.zeros((3 * HIDDEN,), jnp.float32)
        # Fold 1/sqrt(HEAD_DIM) into the Q projection (one-time host-side transform).
        wqkv = wqkv.at[:, :HIDDEN].multiply(inv_sqrt_dh)
        bqkv = bqkv.at[:HIDDEN].multiply(inv_sqrt_dh)
        layers.append({
            "wqkv": wqkv, "bqkv": bqkv,
            "wo": nrm((HIDDEN, HIDDEN)), "bo": jnp.zeros((HIDDEN,), jnp.float32),
            "ln1_g": jnp.ones((HIDDEN,), jnp.float32),
            "ln1_b": jnp.zeros((HIDDEN,), jnp.float32),
            "w1": nrm((HIDDEN, INTERMEDIATE)),
            "b1": jnp.zeros((INTERMEDIATE,), jnp.float32),
            "w2": nrm((INTERMEDIATE, HIDDEN)),
            "b2": jnp.zeros((HIDDEN,), jnp.float32),
            "ln2_g": jnp.ones((HIDDEN,), jnp.float32),
            "ln2_b": jnp.zeros((HIDDEN,), jnp.float32),
        })
    layers_stacked = {k: jnp.stack([lyr[k] for lyr in layers]) for k in layers[0]}

    return {
        "word_emb": nrm((VOCAB, HIDDEN)),
        "pos_emb": nrm((MAX_POS, HIDDEN)),
        "type_emb": nrm((TYPE_VOCAB, HIDDEN)),
        "emb_ln_g": jnp.ones((HIDDEN,), jnp.float32),
        "emb_ln_b": jnp.zeros((HIDDEN,), jnp.float32),
        "layers_stacked": layers_stacked,
        "pool_w": nrm((HIDDEN, HIDDEN)),
        "pool_b": jnp.zeros((HIDDEN,), jnp.float32),
        "cls_w_pad": cls_w_pad,
        "cls_b_pad": cls_b_pad,
    }


# ------------------------------- forward pass -------------------------------

def bert_class_forward(params, ids, mask, token_type_ids):
    B, S = ids.shape
    # Embedding gathers stay in plain JAX glue at toy scale.
    # TODO(synk): at real scale fuse the gather via PrefetchScalarGridSpec + pl.Element.
    emb = (params["word_emb"][ids]
           + params["pos_emb"][:S][None, :, :]
           + params["type_emb"][token_type_ids])                          # (B,S,H)

    # Additive attention mask: (1 - mask) * -10000, per BERT.
    mask_bias = ((1.0 - mask.astype(jnp.float32)) * -10000.0)[:, None, :]  # (B,1,S)

    logits_pad = bert_encoder_classify(emb, mask_bias, params)            # (B,128)
    return logits_pad[:, :NUM_LABELS]                                      # (B,124)


# ----------------------------------- main -----------------------------------

if __name__ == "__main__":
    B, S = 2, 8
    root = jax.random.PRNGKey(0)
    k_param, k_ids = jax.random.split(root)

    params = init_params(k_param)
    ids = jax.random.randint(k_ids, (B, S), 0, VOCAB, dtype=jnp.int32)
    mask = jnp.ones((B, S), dtype=jnp.int32).at[1, 6:].set(0)   # pad tail of batch 1
    token_type_ids = jnp.zeros((B, S), dtype=jnp.int32)

    logits = bert_class_forward(params, ids, mask, token_type_ids)
    logits = jax.block_until_ready(logits)

    assert logits.shape == (B, NUM_LABELS), logits.shape
    assert bool(jnp.all(jnp.isfinite(logits)))
    print("KERNEL_OK")
</pallas_src>

<mosaic_0001>
module attributes {stable_mosaic.version = 11 : i64} {
  func.func @_bert_forward_kernel(%arg0: i32, %arg1: memref<1x8x32xf32, #tpu.memory_space<vmem>>, %arg2: memref<1x1x8xf32, #tpu.memory_space<vmem>>, %arg3: memref<1x32xf32, #tpu.memory_space<vmem>>, %arg4: memref<1x32xf32, #tpu.memory_space<vmem>>, %arg5: memref<2x32x96xf32, #tpu.memory_space<vmem>>, %arg6: memref<2x1x96xf32, #tpu.memory_space<vmem>>, %arg7: memref<2x32x32xf32, #tpu.memory_space<vmem>>, %arg8: memref<2x1x32xf32, #tpu.memory_space<vmem>>, %arg9: memref<2x1x32xf32, #tpu.memory_space<vmem>>, %arg10: memref<2x1x32xf32, #tpu.memory_space<vmem>>, %arg11: memref<2x32x64xf32, #tpu.memory_space<vmem>>, %arg12: memref<2x1x64xf32, #tpu.memory_space<vmem>>, %arg13: memref<2x64x32xf32, #tpu.memory_space<vmem>>, %arg14: memref<2x1x32xf32, #tpu.memory_space<vmem>>, %arg15: memref<2x1x32xf32, #tpu.memory_space<vmem>>, %arg16: memref<2x1x32xf32, #tpu.memory_space<vmem>>, %arg17: memref<32x32xf32, #tpu.memory_space<vmem>>, %arg18: memref<1x32xf32, #tpu.memory_space<vmem>>, %arg19: memref<32x128xf32, #tpu.memory_space<vmem>>, %arg20: memref<1x128xf32, #tpu.memory_space<vmem>>, %arg21: memref<1x1x128xf32, #tpu.memory_space<vmem>>) attributes {dimension_semantics = [#tpu.dimension_semantics<parallel>], iteration_bounds = array<i64: 2>, scalar_prefetch = 0 : i64, scratch_operands = 0 : i64, tpu.core_type = #tpu.core_type<tc>, window_params = [{transform_indices = @transform_0, window_bounds = array<i64: 1, 8, 32>}, {transform_indices = @transform_1, window_bounds = array<i64: 1, 1, 8>}, {pipeline_mode = #tpu.pipeline_mode<synchronous>, transform_indices = @transform_2, window_bounds = array<i64: 1, 32>}, {pipeline_mode = #tpu.pipeline_mode<synchronous>, transform_indices = @transform_3, window_bounds = array<i64: 1, 32>}, {pipeline_mode = #tpu.pipeline_mode<synchronous>, transform_indices = @transform_4, window_bounds = array<i64: 2, 32, 96>}, {pipeline_mode = #tpu.pipeline_mode<synchronous>, transform_indices = @transform_5, window_bounds = array<i64: 2, 1, 96>}, {pipeline_mode = #tpu.pipeline_mode<synchronous>, transform_indices = @transform_6, window_bounds = array<i64: 2, 32, 32>}, {pipeline_mode = #tpu.pipeline_mode<synchronous>, transform_indices = @transform_7, window_bounds = array<i64: 2, 1, 32>}, {pipeline_mode = #tpu.pipeline_mode<synchronous>, transform_indices = @transform_8, window_bounds = array<i64: 2, 1, 32>}, {pipeline_mode = #tpu.pipeline_mode<synchronous>, transform_indices = @transform_9, window_bounds = array<i64: 2, 1, 32>}, {pipeline_mode = #tpu.pipeline_mode<synchronous>, transform_indices = @transform_10, window_bounds = array<i64: 2, 32, 64>}, {pipeline_mode = #tpu.pipeline_mode<synchronous>, transform_indices = @transform_11, window_bounds = array<i64: 2, 1, 64>}, {pipeline_mode = #tpu.pipeline_mode<synchronous>, transform_indices = @transform_12, window_bounds = array<i64: 2, 64, 32>}, {pipeline_mode = #tpu.pipeline_mode<synchronous>, transform_indices = @transform_13, window_bounds = array<i64: 2, 1, 32>}, {pipeline_mode = #tpu.pipeline_mode<synchronous>, transform_indices = @transform_14, window_bounds = array<i64: 2, 1, 32>}, {pipeline_mode = #tpu.pipeline_mode<synchronous>, transform_indices = @transform_15, window_bounds = array<i64: 2, 1, 32>}, {pipeline_mode = #tpu.pipeline_mode<synchronous>, transform_indices = @transform_16, window_bounds = array<i64: 32, 32>}, {pipeline_mode = #tpu.pipeline_mode<synchronous>, transform_indices = @transform_17, window_bounds = array<i64: 1, 32>}, {pipeline_mode = #tpu.pipeline_mode<synchronous>, transform_indices = @transform_18, window_bounds = array<i64: 32, 128>}, {pipeline_mode = #tpu.pipeline_mode<synchronous>, transform_indices = @transform_19, window_bounds = array<i64: 1, 128>}, {transform_indices = @transform_20, window_bounds = array<i64: 1, 1, 128>}]} {
    %c0 = arith.constant 0 : index
    %c0_0 = arith.constant 0 : index
    %c0_1 = arith.constant 0 : index
    %0 = vector.load %arg1[%c0, %c0_0, %c0_1] : memref<1x8x32xf32, #tpu.memory_space<vmem>>, vector<1x8x32xf32>
    %1 = vector.shape_cast %0 : vector<1x8x32xf32> to vector<8x32xf32>
    %c0_2 = arith.constant 0 : index
    %c0_3 = arith.constant 0 : index
    %2 = vector.load %arg3[%c0_2, %c0_3] : memref<1x32xf32, #tpu.memory_space<vmem>>, vector<1x32xf32>
    %c0_4 = arith.constant 0 : index
    %c0_5 = arith.constant 0 : index
    %3 = vector.load %arg4[%c0_4, %c0_5] : memref<1x32xf32, #tpu.memory_space<vmem>>, vector<1x32xf32>
    %cst = arith.constant dense<0.000000e+00> : vector<8xf32>
    %4 = vector.multi_reduction <add>, %1, %cst [1] : vector<8x32xf32> to vector<8xf32>
    %5 = vector.shape_cast %4 : vector<8xf32> to vector<8x1xf32>
    %cst_6 = arith.constant 3.200000e+01 : f32
    %6 = vector.broadcast %cst_6 : f32 to vector<8x1xf32>
    %7 = arith.divf %5, %6 : vector<8x1xf32>
    %8 = vector.broadcast %7 : vector<8x1xf32> to vector<8x32xf32>
    %9 = arith.subf %1, %8 : vector<8x32xf32>
    %10 = arith.mulf %9, %9 : vector<8x32xf32>
    %cst_7 = arith.constant dense<0.000000e+00> : vector<8xf32>
    %11 = vector.multi_reduction <add>, %10, %cst_7 [1] : vector<8x32xf32> to vector<8xf32>
    %12 = vector.shape_cast %11 : vector<8xf32> to vector<8x1xf32>
    %cst_8 = arith.constant 3.200000e+01 : f32
    %13 = vector.broadcast %cst_8 : f32 to vector<8x1xf32>
    %14 = arith.divf %12, %13 : vector<8x1xf32>
    %cst_9 = arith.constant 9.99999996E-13 : f32
    %15 = vector.broadcast %cst_9 : f32 to vector<8x1xf32>
    %16 = arith.addf %14, %15 : vector<8x1xf32>
    %17 = math.rsqrt %16 : vector<8x1xf32>
    %18 = vector.broadcast %17 : vector<8x1xf32> to vector<8x32xf32>
    %19 = arith.mulf %9, %18 : vector<8x32xf32>
    %20 = vector.broadcast %2 : vector<1x32xf32> to vector<8x32xf32>
    %21 = arith.mulf %19, %20 : vector<8x32xf32>
    %22 = vector.broadcast %3 : vector<1x32xf32> to vector<8x32xf32>
    %23 = arith.addf %21, %22 : vector<8x32xf32>
    %c0_10 = arith.constant 0 : index
    %c0_11 = arith.constant 0 : index
    %c0_12 = arith.constant 0 : index
    %24 = vector.load %arg2[%c0_10, %c0_11, %c0_12] : memref<1x1x8xf32, #tpu.memory_space<vmem>>, vector<1x1x8xf32>
    %25 = vector.shape_cast %24 : vector<1x1x8xf32> to vector<1x8xf32>
    %26 = vector.shape_cast %25 : vector<1x8xf32> to vector<1x1x8xf32>
    %27 = vector.broadcast %26 : vector<1x1x8xf32> to vector<4x8x8xf32>
    %28 = arith.truncf %23 : vector<8x32xf32> to vector<8x32xbf16>
    %c0_13 = arith.constant 0 : index
    %c0_14 = arith.constant 0 : index
    %c0_15 = arith.constant 0 : index
    %29 = vector.load %arg5[%c0_13, %c0_14, %c0_15] : memref<2x32x96xf32, #tpu.memory_space<vmem>>, vector<1x32x96xf32>
    %30 = vector.shape_cast %29 : vector<1x32x96xf32> to vector<32x96xf32>
    %31 = arith.truncf %30 : vector<32x96xf32> to vector<32x96xbf16>
    %cst_16 = arith.constant dense<0.000000e+00> : vector<8x96xf32>
    %32 = tpu.matmul %28, %31, %cst_16 {dimension_numbers = #tpu.dot_dimension_numbers<[1], [0], [0], [1], [0, 0, 1, 1], [], []>} : vector<8x32xbf16>, vector<32x96xbf16>, vector<8x96xf32> -> vector<8x96xf32>
    %c0_17 = arith.constant 0 : index
    %c0_18 = arith.constant 0 : index
    %c0_19 = arith.constant 0 : index
    %33 = vector.load %arg6[%c0_17, %c0_18, %c0_19] : memref<2x1x96xf32, #tpu.memory_space<vmem>>, vector<1x1x96xf32>
    %34 = vector.shape_cast %33 : vector<1x1x96xf32> to vector<1x96xf32>
    %35 = vector.broadcast %34 : vector<1x96xf32> to vector<8x96xf32>
    %36 = arith.addf %32, %35 : vector<8x96xf32>
    %37 = vector.extract_strided_slice %36 {offsets = [0, 0], sizes = [8, 8], strides = [1, 1]} : vector<8x96xf32> to vector<8x8xf32>
    %38 = vector.extract_strided_slice %36 {offsets = [0, 8], sizes = [8, 8], strides = [1, 1]} : vector<8x96xf32> to vector<8x8xf32>
    %39 = vector.extract_strided_slice %36 {offsets = [0, 16], sizes = [8, 8], strides = [1, 1]} : vector<8x96xf32> to vector<8x8xf32>
    %40 = vector.extract_strided_slice %36 {offsets = [0, 24], sizes = [8, 8], strides = [1, 1]} : vector<8x96xf32> to vector<8x8xf32>
    %41 = vector.shape_cast %37 : vector<8x8xf32> to vector<1x8x8xf32>
    %42 = vector.shape_cast %38 : vector<8x8xf32> to vector<1x8x8xf32>
    %43 = vector.shape_cast %39 : vector<8x8xf32> to vector<1x8x8xf32>
    %44 = vector.shape_cast %40 : vector<8x8xf32> to vector<1x8x8xf32>
    %45 = tpu.concatenate %41, %42, %43, %44 in 0 : vector<1x8x8xf32>, vector<1x8x8xf32>, vector<1x8x8xf32>, vector<1x8x8xf32> -> vector<4x8x8xf32>
    %46 = vector.extract_strided_slice %36 {offsets = [0, 32], sizes = [8, 8], strides = [1, 1]} : vector<8x96xf32> to vector<8x8xf32>
    %47 = vector.extract_strided_slice %36 {offsets = [0, 40], sizes = [8, 8], strides = [1, 1]} : vector<8x96xf32> to vector<8x8xf32>
    %48 = vector.extract_strided_slice %36 {offsets = [0, 48], sizes = [8, 8], strides = [1, 1]} : vector<8x96xf32> to vector<8x8xf32>
    %49 = vector.extract_strided_slice %36 {offsets = [0, 56], sizes = [8, 8], strides = [1, 1]} : vector<8x96xf32> to vector<8x8xf32>
    %50 = vector.shape_cast %46 : vector<8x8xf32> to vector<1x8x8xf32>
    %51 = vector.shape_cast %47 : vector<8x8xf32> to vector<1x8x8xf32>
    %52 = vector.shape_cast %48 : vector<8x8xf32> to vector<1x8x8xf32>
    %53 = vector.shape_cast %49 : vector<8x8xf32> to vector<1x8x8xf32>
    %54 = tpu.concatenate %50, %51, %52, %53 in 0 : vector<1x8x8xf32>, vector<1x8x8xf32>, vector<1x8x8xf32>, vector<1x8x8xf32> -> vector<4x8x8xf32>
    %55 = vector.extract_strided_slice %36 {offsets = [0, 64], sizes = [8, 8], strides = [1, 1]} : vector<8x96xf32> to vector<8x8xf32>
    %56 = vector.extract_strided_slice %36 {offsets = [0, 72], sizes = [8, 8], strides = [1, 1]} : vector<8x96xf32> to vector<8x8xf32>
    %57 = vector.extract_strided_slice %36 {offsets = [0, 80], sizes = [8, 8], strides = [1, 1]} : vector<8x96xf32> to vector<8x8xf32>
    %58 = vector.extract_strided_slice %36 {offsets = [0, 88], sizes = [8, 8], strides = [1, 1]} : vector<8x96xf32> to vector<8x8xf32>
    %59 = vector.shape_cast %55 : vector<8x8xf32> to vector<1x8x8xf32>
    %60 = vector.shape_cast %56 : vector<8x8xf32> to vector<1x8x8xf32>
    %61 = vector.shape_cast %57 : vector<8x8xf32> to vector<1x8x8xf32>
    %62 = vector.shape_cast %58 : vector<8x8xf32> to vector<1x8x8xf32>
    %63 = tpu.concatenate %59, %60, %61, %62 in 0 : vector<1x8x8xf32>, vector<1x8x8xf32>, vector<1x8x8xf32>, vector<1x8x8xf32> -> vector<4x8x8xf32>
    %64 = arith.truncf %45 : vector<4x8x8xf32> to vector<4x8x8xbf16>
    %65 = arith.truncf %54 : vector<4x8x8xf32> to vector<4x8x8xbf16>
    "tpu.trace_start"() <{level = 10 : i32, message = "hqd,hkd->hqk"}> : () -> ()
    %cst_20 = arith.constant dense<0.000000e+00> : vector<4x8x8xf32>
    %66 = tpu.matmul %64, %65, %cst_20 {dimension_numbers = #tpu.dot_dimension_numbers<[2], [2], [1], [1], [0, 0, 0, 1, 1, 1], [0], [0]>} : vector<4x8x8xbf16>, vector<4x8x8xbf16>, vector<4x8x8xf32> -> vector<4x8x8xf32>
    "tpu.trace_stop"() : () -> ()
    %67 = arith.addf %66, %27 : vector<4x8x8xf32>
    %cst_21 = arith.constant dense<0xFF800000> : vector<4x8xf32>
    %68 = vector.multi_reduction <maximumf>, %67, %cst_21 [2] : vector<4x8x8xf32> to vector<4x8xf32>
    %69 = vector.shape_cast %68 : vector<4x8xf32> to vector<4x8x1xf32>
    %70 = vector.broadcast %69 : vector<4x8x1xf32> to vector<4x8x8xf32>
    %71 = arith.subf %67, %70 : vector<4x8x8xf32>
    %72 = math.exp %71 : vector<4x8x8xf32>
    %cst_22 = arith.constant dense<0.000000e+00> : vector<4x8xf32>
    %73 = vector.multi_reduction <add>, %72, %cst_22 [2] : vector<4x8x8xf32> to vector<4x8xf32>
    %74 = vector.shape_cast %73 : vector<4x8xf32> to vector<4x8x1xf32>
    %75 = tpu.reciprocal %74 {approx = true} : vector<4x8x1xf32> -> vector<4x8x1xf32>
    %76 = vector.broadcast %75 : vector<4x8x1xf32> to vector<4x8x8xf32>
    %77 = arith.mulf %72, %76 : vector<4x8x8xf32>
    %78 = arith.truncf %77 : vector<4x8x8xf32> to vector<4x8x8xbf16>
    %79 = arith.truncf %63 : vector<4x8x8xf32> to vector<4x8x8xbf16>
    "tpu.trace_start"() <{level = 10 : i32, message = "hqk,hkd->hqd"}> : () -> ()
    %cst_23 = arith.constant dense<0.000000e+00> : vector<4x8x8xf32>
    %80 = tpu.matmul %78, %79, %cst_23 {dimension_numbers = #tpu.dot_dimension_numbers<[2], [1], [1], [2], [0, 0, 0, 1, 1, 2], [0], [0]>} : vector<4x8x8xbf16>, vector<4x8x8xbf16>, vector<4x8x8xf32> -> vector<4x8x8xf32>
    "tpu.trace_stop"() : () -> ()
    %81 = vector.extract_strided_slice %80 {offsets = [0, 0, 0], sizes = [1, 8, 8], strides = [1, 1, 1]} : vector<4x8x8xf32> to vector<1x8x8xf32>
    %82 = vector.shape_cast %81 : vector<1x8x8xf32> to vector<8x8xf32>
    %83 = vector.extract_strided_slice %80 {offsets = [1, 0, 0], sizes = [1, 8, 8], strides = [1, 1, 1]} : vector<4x8x8xf32> to vector<1x8x8xf32>
    %84 = vector.shape_cast %83 : vector<1x8x8xf32> to vector<8x8xf32>
    %85 = vector.extract_strided_slice %80 {offsets = [2, 0, 0], sizes = [1, 8, 8], strides = [1, 1, 1]} : vector<4x8x8xf32> to vector<1x8x8xf32>
    %86 = vector.shape_cast %85 : vector<1x8x8xf32> to vector<8x8xf32>
    %87 = vector.extract_strided_slice %80 {offsets = [3, 0, 0], sizes = [1, 8, 8], strides = [1, 1, 1]} : vector<4x8x8xf32> to vector<1x8x8xf32>
    %88 = vector.shape_cast %87 : vector<1x8x8xf32> to vector<8x8xf32>
    %89 = tpu.concatenate %82, %84, %86, %88 in 1 : vector<8x8xf32>, vector<8x8xf32>, vector<8x8xf32>, vector<8x8xf32> -> vector<8x32xf32>
    %90 = arith.truncf %89 : vector<8x32xf32> to vector<8x32xbf16>
    %c0_24 = arith.constant 0 : index
    %c0_25 = arith.constant 0 : index
    %c0_26 = arith.constant 0 : index
    %91 = vector.load %arg7[%c0_24, %c0_25, %c0_26] : memref<2x32x32xf32, #tpu.memory_space<vmem>>, vector<1x32x32xf32>
    %92 = vector.shape_cast %91 : vector<1x32x32xf32> to vector<32x32xf32>
    %93 = arith.truncf %92 : vector<32x32xf32> to vector<32x32xbf16>
    %cst_27 = arith.constant dense<0.000000e+00> : vector<8x32xf32>
    %94 = tpu.matmul %90, %93, %cst_27 {dimension_numbers = #tpu.dot_dimension_numbers<[1], [0], [0], [1], [0, 0, 1, 1], [], []>} : vector<8x32xbf16>, vector<32x32xbf16>, vector<8x32xf32> -> vector<8x32xf32>
    %c0_28 = arith.constant 0 : index
    %c0_29 = arith.constant 0 : index
    %c0_30 = arith.constant 0 : index
    %95 = vector.load %arg8[%c0_28, %c0_29, %c0_30] : memref<2x1x32xf32, #tpu.memory_space<vmem>>, vector<1x1x32xf32>
    %96 = vector.shape_cast %95 : vector<1x1x32xf32> to vector<1x32xf32>
    %97 = vector.broadcast %96 : vector<1x32xf32> to vector<8x32xf32>
    %98 = arith.addf %94, %97 : vector<8x32xf32>
    %99 = arith.addf %98, %23 : vector<8x32xf32>
    %c0_31 = arith.constant 0 : index
    %c0_32 = arith.constant 0 : index
    %c0_33 = arith.constant 0 : index
    %100 = vector.load %arg9[%c0_31, %c0_32, %c0_33] : memref<2x1x32xf32, #tpu.memory_space<vmem>>, vector<1x1x32xf32>
    %101 = vector.shape_cast %100 : vector<1x1x32xf32> to vector<1x32xf32>
    %c0_34 = arith.constant 0 : index
    %c0_35 = arith.constant 0 : index
    %c0_36 = arith.constant 0 : index
    %102 = vector.load %arg10[%c0_34, %c0_35, %c0_36] : memref<2x1x32xf32, #tpu.memory_space<vmem>>, vector<1x1x32xf32>
    %103 = vector.shape_cast %102 : vector<1x1x32xf32> to vector<1x32xf32>
    %cst_37 = arith.constant dense<0.000000e+00> : vector<8xf32>
    %104 = vector.multi_reduction <add>, %99, %cst_37 [1] : vector<8x32xf32> to vector<8xf32>
    %105 = vector.shape_cast %104 : vector<8xf32> to vector<8x1xf32>
    %cst_38 = arith.constant 3.200000e+01 : f32
    %106 = vector.broadcast %cst_38 : f32 to vector<8x1xf32>
    %107 = arith.divf %105, %106 : vector<8x1xf32>
    %108 = vector.broadcast %107 : vector<8x1xf32> to vector<8x32xf32>
    %109 = arith.subf %99, %108 : vector<8x32xf32>
    %110 = arith.mulf %109, %109 : vector<8x32xf32>
    %cst_39 = arith.constant dense<0.000000e+00> : vector<8xf32>
    %111 = vector.multi_reduction <add>, %110, %cst_39 [1] : vector<8x32xf32> to vector<8xf32>
    %112 = vector.shape_cast %111 : vector<8xf32> to vector<8x1xf32>
    %cst_40 = arith.constant 3.200000e+01 : f32
    %113 = vector.broadcast %cst_40 : f32 to vector<8x1xf32>
    %114 = arith.divf %112, %113 : vector<8x1xf32>
    %cst_41 = arith.constant 9.99999996E-13 : f32
    %115 = vector.broadcast %cst_41 : f32 to vector<8x1xf32>
    %116 = arith.addf %114, %115 : vector<8x1xf32>
    %117 = math.rsqrt %116 : vector<8x1xf32>
    %118 = vector.broadcast %117 : vector<8x1xf32> to vector<8x32xf32>
    %119 = arith.mulf %109, %118 : vector<8x32xf32>
    %120 = vector.broadcast %101 : vector<1x32xf32> to vector<8x32xf32>
    %121 = arith.mulf %119, %120 : vector<8x32xf32>
    %122 = vector.broadcast %103 : vector<1x32xf32> to vector<8x32xf32>
    %123 = arith.addf %121, %122 : vector<8x32xf32>
    %124 = arith.truncf %123 : vector<8x32xf32> to vector<8x32xbf16>
    %c0_42 = arith.constant 0 : index
    %c0_43 = arith.constant 0 : index
    %c0_44 = arith.constant 0 : index
    %125 = vector.load %arg11[%c0_42, %c0_43, %c0_44] : memref<2x32x64xf32, #tpu.memory_space<vmem>>, vector<1x32x64xf32>
    %126 = vector.shape_cast %125 : vector<1x32x64xf32> to vector<32x64xf32>
    %127 = arith.truncf %126 : vector<32x64xf32> to vector<32x64xbf16>
    %cst_45 = arith.constant dense<0.000000e+00> : vector<8x64xf32>
    %128 = tpu.matmul %124, %127, %cst_45 {dimension_numbers = #tpu.dot_dimension_numbers<[1], [0], [0], [1], [0, 0, 1, 1], [], []>} : vector<8x32xbf16>, vector<32x64xbf16>, vector<8x64xf32> -> vector<8x64xf32>
    %c0_46 = arith.constant 0 : index
    %c0_47 = arith.constant 0 : index
    %c0_48 = arith.constant 0 : index
    %129 = vector.load %arg12[%c0_46, %c0_47, %c0_48] : memref<2x1x64xf32, #tpu.memory_space<vmem>>, vector<1x1x64xf32>
    %130 = vector.shape_cast %129 : vector<1x1x64xf32> to vector<1x64xf32>
    %131 = vector.broadcast %130 : vector<1x64xf32> to vector<8x64xf32>
    %132 = arith.addf %128, %131 : vector<8x64xf32>
    %cst_49 = arith.constant 5.000000e-01 : f32
    %133 = vector.broadcast %cst_49 : f32 to vector<8x64xf32>
    %134 = arith.mulf %133, %132 : vector<8x64xf32>
    %cst_50 = arith.constant 4.471500e-02 : f32
    %135 = vector.broadcast %cst_50 : f32 to vector<8x64xf32>
    %136 = arith.mulf %135, %132 : vector<8x64xf32>
    %137 = arith.mulf %136, %132 : vector<8x64xf32>
    %138 = arith.mulf %137, %132 : vector<8x64xf32>
    %139 = arith.addf %132, %138 : vector<8x64xf32>
    %cst_51 = arith.constant 0.797884583 : f32
    %140 = vector.broadcast %cst_51 : f32 to vector<8x64xf32>
    %141 = arith.mulf %140, %139 : vector<8x64xf32>
    %142 = math.tanh %141 : vector<8x64xf32>
    %cst_52 = arith.constant 1.000000e+00 : f32
    %143 = vector.broadcast %cst_52 : f32 to vector<8x64xf32>
    %144 = arith.addf %143, %142 : vector<8x64xf32>
    %145 = arith.mulf %134, %144 : vector<8x64xf32>
    %146 = arith.truncf %145 : vector<8x64xf32> to vector<8x64xbf16>
    %c0_53 = arith.constant 0 : index
    %c0_54 = arith.constant 0 : index
    %c0_55 = arith.constant 0 : index
    %147 = vector.load %arg13[%c0_53, %c0_54, %c0_55] : memref<2x64x32xf32, #tpu.memory_space<vmem>>, vector<1x64x32xf32>
    %148 = vector.shape_cast %147 : vector<1x64x32xf32> to vector<64x32xf32>
    %149 = arith.truncf %148 : vector<64x32xf32> to vector<64x32xbf16>
    %cst_56 = arith.constant dense<0.000000e+00> : vector<8x32xf32>
    %150 = tpu.matmul %146, %149, %cst_56 {dimension_numbers = #tpu.dot_dimension_numbers<[1], [0], [0], [1], [0, 0, 1, 1], [], []>} : vector<8x64xbf16>, vector<64x32xbf16>, vector<8x32xf32> -> vector<8x32xf32>
    %c0_57 = arith.constant 0 : index
    %c0_58 = arith.constant 0 : index
    %c0_59 = arith.constant 0 : index
    %151 = vector.load %arg14[%c0_57, %c0_58, %c0_59] : memref<2x1x32xf32, #tpu.memory_space<vmem>>, vector<1x1x32xf32>
    %152 = vector.shape_cast %151 : vector<1x1x32xf32> to vector<1x32xf32>
    %153 = vector.broadcast %152 : vector<1x32xf32> to vector<8x32xf32>
    %154 = arith.addf %150, %153 : vector<8x32xf32>
    %155 = arith.addf %154, %123 : vector<8x32xf32>
    %c0_60 = arith.constant 0 : index
    %c0_61 = arith.constant 0 : index
    %c0_62 = arith.constant 0 : index
    %156 = vector.load %arg15[%c0_60, %c0_61, %c0_62] : memref<2x1x32xf32, #tpu.memory_space<vmem>>, vector<1x1x32xf32>
    %157 = vector.shape_cast %156 : vector<1x1x32xf32> to vector<1x32xf32>
    %c0_63 = arith.constant 0 : index
    %c0_64 = arith.constant 0 : index
    %c0_65 = arith.constant 0 : index
    %158 = vector.load %arg16[%c0_63, %c0_64, %c0_65] : memref<2x1x32xf32, #tpu.memory_space<vmem>>, vector<1x1x32xf32>
    %159 = vector.shape_cast %158 : vector<1x1x32xf32> to vector<1x32xf32>
    %cst_66 = arith.constant dense<0.000000e+00> : vector<8xf32>
    %160 = vector.multi_reduction <add>, %155, %cst_66 [1] : vector<8x32xf32> to vector<8xf32>
    %161 = vector.shape_cast %160 : vector<8xf32> to vector<8x1xf32>
    %cst_67 = arith.constant 3.200000e+01 : f32
    %162 = vector.broadcast %cst_67 : f32 to vector<8x1xf32>
    %163 = arith.divf %161, %162 : vector<8x1xf32>
    %164 = vector.broadcast %163 : vector<8x1xf32> to vector<8x32xf32>
    %165 = arith.subf %155, %164 : vector<8x32xf32>
    %166 = arith.mulf %165, %165 : vector<8x32xf32>
    %cst_68 = arith.constant dense<0.000000e+00> : vector<8xf32>
    %167 = vector.multi_reduction <add>, %166, %cst_68 [1] : vector<8x32xf32> to vector<8xf32>
    %168 = vector.shape_cast %167 : vector<8xf32> to vector<8x1xf32>
    %cst_69 = arith.constant 3.200000e+01 : f32
    %169 = vector.broadcast %cst_69 : f32 to vector<8x1xf32>
    %170 = arith.divf %168, %169 : vector<8x1xf32>
    %cst_70 = arith.constant 9.99999996E-13 : f32
    %171 = vector.broadcast %cst_70 : f32 to vector<8x1xf32>
    %172 = arith.addf %170, %171 : vector<8x1xf32>
    %173 = math.rsqrt %172 : vector<8x1xf32>
    %174 = vector.broadcast %173 : vector<8x1xf32> to vector<8x32xf32>
    %175 = arith.mulf %165, %174 : vector<8x32xf32>
    %176 = vector.broadcast %157 : vector<1x32xf32> to vector<8x32xf32>
    %177 = arith.mulf %175, %176 : vector<8x32xf32>
    %178 = vector.broadcast %159 : vector<1x32xf32> to vector<8x32xf32>
    %179 = arith.addf %177, %178 : vector<8x32xf32>
    %180 = arith.truncf %179 : vector<8x32xf32> to vector<8x32xbf16>
    %c1 = arith.constant 1 : index
    %c0_71 = arith.constant 0 : index
    %c0_72 = arith.constant 0 : index
    %181 = vector.load %arg5[%c1, %c0_71, %c0_72] : memref<2x32x96xf32, #tpu.memory_space<vmem>>, vector<1x32x96xf32>
    %182 = vector.shape_cast %181 : vector<1x32x96xf32> to vector<32x96xf32>
    %183 = arith.truncf %182 : vector<32x96xf32> to vector<32x96xbf16>
    %cst_73 = arith.constant dense<0.000000e+00> : vector<8x96xf32>
    %184 = tpu.matmul %180, %183, %cst_73 {dimension_numbers = #tpu.dot_dimension_numbers<[1], [0], [0], [1], [0, 0, 1, 1], [], []>} : vector<8x32xbf16>, vector<32x96xbf16>, vector<8x96xf32> -> vector<8x96xf32>
    %c1_74 = arith.constant 1 : index
    %c0_75 = arith.constant 0 : index
    %c0_76 = arith.constant 0 : index
    %185 = vector.load %arg6[%c1_74, %c0_75, %c0_76] : memref<2x1x96xf32, #tpu.memory_space<vmem>>, vector<1x1x96xf32>
    %186 = vector.shape_cast %185 : vector<1x1x96xf32> to vector<1x96xf32>
    %187 = vector.broadcast %186 : vector<1x96xf32> to vector<8x96xf32>
    %188 = arith.addf %184, %187 : vector<8x96xf32>
    %189 = vector.extract_strided_slice %188 {offsets = [0, 0], sizes = [8, 8], strides = [1, 1]} : vector<8x96xf32> to vector<8x8xf32>
    %190 = vector.extract_strided_slice %188 {offsets = [0, 8], sizes = [8, 8], strides = [1, 1]} : vector<8x96xf32> to vector<8x8xf32>
    %191 = vector.extract_strided_slice %188 {offsets = [0, 16], sizes = [8, 8], strides = [1, 1]} : vector<8x96xf32> to vector<8x8xf32>
    %192 = vector.extract_strided_slice %188 {offsets = [0, 24], sizes = [8, 8], strides = [1, 1]} : vector<8x96xf32> to vector<8x8xf32>
    %193 = vector.shape_cast %189 : vector<8x8xf32> to vector<1x8x8xf32>
    %194 = vector.shape_cast %190 : vector<8x8xf32> to vector<1x8x8xf32>
    %195 = vector.shape_cast %191 : vector<8x8xf32> to vector<1x8x8xf32>
    %196 = vector.shape_cast %192 : vector<8x8xf32> to vector<1x8x8xf32>
    %197 = tpu.concatenate %193, %194, %195, %196 in 0 : vector<1x8x8xf32>, vector<1x8x8xf32>, vector<1x8x8xf32>, vector<1x8x8xf32> -> vector<4x8x8xf32>
    %198 = vector.extract_strided_slice %188 {offsets = [0, 32], sizes = [8, 8], strides = [1, 1]} : vector<8x96xf32> to vector<8x8xf32>
    %199 = vector.extract_strided_slice %188 {offsets = [0, 40], sizes = [8, 8], strides = [1, 1]} : vector<8x96xf32> to vector<8x8xf32>
    %200 = vector.extract_strided_slice %188 {offsets = [0, 48], sizes = [8, 8], strides = [1, 1]} : vector<8x96xf32> to vector<8x8xf32>
    %201 = vector.extract_strided_slice %188 {offsets = [0, 56], sizes = [8, 8], strides = [1, 1]} : vector<8x96xf32> to vector<8x8xf32>
    %202 = vector.shape_cast %198 : vector<8x8xf32> to vector<1x8x8xf32>
    %203 = vector.shape_cast %199 : vector<8x8xf32> to vector<1x8x8xf32>
    %204 = vector.shape_cast %200 : vector<8x8xf32> to vector<1x8x8xf32>
    %205 = vector.shape_cast %201 : vector<8x8xf32> to vector<1x8x8xf32>
    %206 = tpu.concatenate %202, %203, %204, %205 in 0 : vector<1x8x8xf32>, vector<1x8x8xf32>, vector<1x8x8xf32>, vector<1x8x8xf32> -> vector<4x8x8xf32>
    %207 = vector.extract_strided_slice %188 {offsets = [0, 64], sizes = [8, 8], strides = [1, 1]} : vector<8x96xf32> to vector<8x8xf32>
    %208 = vector.extract_strided_slice %188 {offsets = [0, 72], sizes = [8, 8], strides = [1, 1]} : vector<8x96xf32> to vector<8x8xf32>
    %209 = vector.extract_strided_slice %188 {offsets = [0, 80], sizes = [8, 8], strides = [1, 1]} : vector<8x96xf32> to vector<8x8xf32>
    %210 = vector.extract_strided_slice %188 {offsets = [0, 88], sizes = [8, 8], strides = [1, 1]} : vector<8x96xf32> to vector<8x8xf32>
    %211 = vector.shape_cast %207 : vector<8x8xf32> to vector<1x8x8xf32>
    %212 = vector.shape_cast %208 : vector<8x8xf32> to vector<1x8x8xf32>
    %213 = vector.shape_cast %209 : vector<8x8xf32> to vector<1x8x8xf32>
    %214 = vector.shape_cast %210 : vector<8x8xf32> to vector<1x8x8xf32>
    %215 = tpu.concatenate %211, %212, %213, %214 in 0 : vector<1x8x8xf32>, vector<1x8x8xf32>, vector<1x8x8xf32>, vector<1x8x8xf32> -> vector<4x8x8xf32>
    %216 = arith.truncf %197 : vector<4x8x8xf32> to vector<4x8x8xbf16>
    %217 = arith.truncf %206 : vector<4x8x8xf32> to vector<4x8x8xbf16>
    "tpu.trace_start"() <{level = 10 : i32, message = "hqd,hkd->hqk"}> : () -> ()
    %cst_77 = arith.constant dense<0.000000e+00> : vector<4x8x8xf32>
    %218 = tpu.matmul %216, %217, %cst_77 {dimension_numbers = #tpu.dot_dimension_numbers<[2], [2], [1], [1], [0, 0, 0, 1, 1, 1], [0], [0]>} : vector<4x8x8xbf16>, vector<4x8x8xbf16>, vector<4x8x8xf32> -> vector<4x8x8xf32>
    "tpu.trace_stop"() : () -> ()
    %219 = arith.addf %218, %27 : vector<4x8x8xf32>
    %cst_78 = arith.constant dense<0xFF800000> : vector<4x8xf32>
    %220 = vector.multi_reduction <maximumf>, %219, %cst_78 [2] : vector<4x8x8xf32> to vector<4x8xf32>
    %221 = vector.shape_cast %220 : vector<4x8xf32> to vector<4x8x1xf32>
    %222 = vector.broadcast %221 : vector<4x8x1xf32> to vector<4x8x8xf32>
    %223 = arith.subf %219, %222 : vector<4x8x8xf32>
    %224 = math.exp %223 : vector<4x8x8xf32>
    %cst_79 = arith.constant dense<0.000000e+00> : vector<4x8xf32>
    %225 = vector.multi_reduction <add>, %224, %cst_79 [2] : vector<4x8x8xf32> to vector<4x8xf32>
    %226 = vector.shape_cast %225 : vector<4x8xf32> to vector<4x8x1xf32>
    %227 = tpu.reciprocal %226 {approx = true} : vector<4x8x1xf32> -> vector<4x8x1xf32>
    %228 = vector.broadcast %227 : vector<4x8x1xf32> to vector<4x8x8xf32>
    %229 = arith.mulf %224, %228 : vector<4x8x8xf32>
    %230 = arith.truncf %229 : vector<4x8x8xf32> to vector<4x8x8xbf16>
    %231 = arith.truncf %215 : vector<4x8x8xf32> to vector<4x8x8xbf16>
    "tpu.trace_start"() <{level = 10 : i32, message = "hqk,hkd->hqd"}> : () -> ()
    %cst_80 = arith.constant dense<0.000000e+00> : vector<4x8x8xf32>
    %232 = tpu.matmul %230, %231, %cst_80 {dimension_numbers = #tpu.dot_dimension_numbers<[2], [1], [1], [2], [0, 0, 0, 1, 1, 2], [0], [0]>} : vector<4x8x8xbf16>, vector<4x8x8xbf16>, vector<4x8x8xf32> -> vector<4x8x8xf32>
    "tpu.trace_stop"() : () -> ()
    %233 = vector.extract_strided_slice %232 {offsets = [0, 0, 0], sizes = [1, 8, 8], strides = [1, 1, 1]} : vector<4x8x8xf32> to vector<1x8x8xf32>
    %234 = vector.shape_cast %233 : vector<1x8x8xf32> to vector<8x8xf32>
    %235 = vector.extract_strided_slice %232 {offsets = [1, 0, 0], sizes = [1, 8, 8], strides = [1, 1, 1]} : vector<4x8x8xf32> to vector<1x8x8xf32>
    %236 = vector.shape_cast %235 : vector<1x8x8xf32> to vector<8x8xf32>
    %237 = vector.extract_strided_slice %232 {offsets = [2, 0, 0], sizes = [1, 8, 8], strides = [1, 1, 1]} : vector<4x8x8xf32> to vector<1x8x8xf32>
    %238 = vector.shape_cast %237 : vector<1x8x8xf32> to vector<8x8xf32>
    %239 = vector.extract_strided_slice %232 {offsets = [3, 0, 0], sizes = [1, 8, 8], strides = [1, 1, 1]} : vector<4x8x8xf32> to vector<1x8x8xf32>
    %240 = vector.shape_cast %239 : vector<1x8x8xf32> to vector<8x8xf32>
    %241 = tpu.concatenate %234, %236, %238, %240 in 1 : vector<8x8xf32>, vector<8x8xf32>, vector<8x8xf32>, vector<8x8xf32> -> vector<8x32xf32>
    %242 = arith.truncf %241 : vector<8x32xf32> to vector<8x32xbf16>
    %c1_81 = arith.constant 1 : index
    %c0_82 = arith.constant 0 : index
    %c0_83 = arith.constant 0 : index
    %243 = vector.load %arg7[%c1_81, %c0_82, %c0_83] : memref<2x32x32xf32, #tpu.memory_space<vmem>>, vector<1x32x32xf32>
    %244 = vector.shape_cast %243 : vector<1x32x32xf32> to vector<32x32xf32>
    %245 = arith.truncf %244 : vector<32x32xf32> to vector<32x32xbf16>
    %cst_84 = arith.constant dense<0.000000e+00> : vector<8x32xf32>
    %246 = tpu.matmul %242, %245, %cst_84 {dimension_numbers = #tpu.dot_dimension_numbers<[1], [0], [0], [1], [0, 0, 1, 1], [], []>} : vector<8x32xbf16>, vector<32x32xbf16>, vector<8x32xf32> -> vector<8x32xf32>
    %c1_85 = arith.constant 1 : index
    %c0_86 = arith.constant 0 : index
    %c0_87 = arith.constant 0 : index
    %247 = vector.load %arg8[%c1_85, %c0_86, %c0_87] : memref<2x1x32xf32, #tpu.memory_space<vmem>>, vector<1x1x32xf32>
    %248 = vector.shape_cast %247 : vector<1x1x32xf32> to vector<1x32xf32>
    %249 = vector.broadcast %248 : vector<1x32xf32> to vector<8x32xf32>
    %250 = arith.addf %246, %249 : vector<8x32xf32>
    %251 = arith.addf %250, %179 : vector<8x32xf32>
    %c1_88 = arith.constant 1 : index
    %c0_89 = arith.constant 0 : index
    %c0_90 = arith.constant 0 : index
    %252 = vector.load %arg9[%c1_88, %c0_89, %c0_90] : memref<2x1x32xf32, #tpu.memory_space<vmem>>, vector<1x1x32xf32>
    %253 = vector.shape_cast %252 : vector<1x1x32xf32> to vector<1x32xf32>
    %c1_91 = arith.constant 1 : index
    %c0_92 = arith.constant 0 : index
    %c0_93 = arith.constant 0 : index
    %254 = vector.load %arg10[%c1_91, %c0_92, %c0_93] : memref<2x1x32xf32, #tpu.memory_space<vmem>>, vector<1x1x32xf32>
    %255 = vector.shape_cast %254 : vector<1x1x32xf32> to vector<1x32xf32>
    %cst_94 = arith.constant dense<0.000000e+00> : vector<8xf32>
    %256 = vector.multi_reduction <add>, %251, %cst_94 [1] : vector<8x32xf32> to vector<8xf32>
    %257 = vector.shape_cast %256 : vector<8xf32> to vector<8x1xf32>
    %cst_95 = arith.constant 3.200000e+01 : f32
    %258 = vector.broadcast %cst_95 : f32 to vector<8x1xf32>
    %259 = arith.divf %257, %258 : vector<8x1xf32>
    %260 = vector.broadcast %259 : vector<8x1xf32> to vector<8x32xf32>
    %261 = arith.subf %251, %260 : vector<8x32xf32>
    %262 = arith.mulf %261, %261 : vector<8x32xf32>
    %cst_96 = arith.constant dense<0.000000e+00> : vector<8xf32>
    %263 = vector.multi_reduction <add>, %262, %cst_96 [1] : vector<8x32xf32> to vector<8xf32>
    %264 = vector.shape_cast %263 : vector<8xf32> to vector<8x1xf32>
    %cst_97 = arith.constant 3.200000e+01 : f32
    %265 = vector.broadcast %cst_97 : f32 to vector<8x1xf32>
    %266 = arith.divf %264, %265 : vector<8x1xf32>
    %cst_98 = arith.constant 9.99999996E-13 : f32
    %267 = vector.broadcast %cst_98 : f32 to vector<8x1xf32>
    %268 = arith.addf %266, %267 : vector<8x1xf32>
    %269 = math.rsqrt %268 : vector<8x1xf32>
    %270 = vector.broadcast %269 : vector<8x1xf32> to vector<8x32xf32>
    %271 = arith.mulf %261, %270 : vector<8x32xf32>
    %272 = vector.broadcast %253 : vector<1x32xf32> to vector<8x32xf32>
    %273 = arith.mulf %271, %272 : vector<8x32xf32>
    %274 = vector.broadcast %255 : vector<1x32xf32> to vector<8x32xf32>
    %275 = arith.addf %273, %274 : vector<8x32xf32>
    %276 = arith.truncf %275 : vector<8x32xf32> to vector<8x32xbf16>
    %c1_99 = arith.constant 1 : index
    %c0_100 = arith.constant 0 : index
    %c0_101 = arith.constant 0 : index
    %277 = vector.load %arg11[%c1_99, %c0_100, %c0_101] : memref<2x32x64xf32, #tpu.memory_space<vmem>>, vector<1x32x64xf32>
    %278 = vector.shape_cast %277 : vector<1x32x64xf32> to vector<32x64xf32>
    %279 = arith.truncf %278 : vector<32x64xf32> to vector<32x64xbf16>
    %cst_102 = arith.constant dense<0.000000e+00> : vector<8x64xf32>
    %280 = tpu.matmul %276, %279, %cst_102 {dimension_numbers = #tpu.dot_dimension_numbers<[1], [0], [0], [1], [0, 0, 1, 1], [], []>} : vector<8x32xbf16>, vector<32x64xbf16>, vector<8x64xf32> -> vector<8x64xf32>
    %c1_103 = arith.constant 1 : index
    %c0_104 = arith.constant 0 : index
    %c0_105 = arith.constant 0 : index
    %281 = vector.load %arg12[%c1_103, %c0_104, %c0_105] : memref<2x1x64xf32, #tpu.memory_space<vmem>>, vector<1x1x64xf32>
    %282 = vector.shape_cast %281 : vector<1x1x64xf32> to vector<1x64xf32>
    %283 = vector.broadcast %282 : vector<1x64xf32> to vector<8x64xf32>
    %284 = arith.addf %280, %283 : vector<8x64xf32>
    %cst_106 = arith.constant 5.000000e-01 : f32
    %285 = vector.broadcast %cst_106 : f32 to vector<8x64xf32>
    %286 = arith.mulf %285, %284 : vector<8x64xf32>
    %cst_107 = arith.constant 4.471500e-02 : f32
    %287 = vector.broadcast %cst_107 : f32 to vector<8x64xf32>
    %288 = arith.mulf %287, %284 : vector<8x64xf32>
    %289 = arith.mulf %288, %284 : vector<8x64xf32>
    %290 = arith.mulf %289, %284 : vector<8x64xf32>
    %291 = arith.addf %284, %290 : vector<8x64xf32>
    %cst_108 = arith.constant 0.797884583 : f32
    %292 = vector.broadcast %cst_108 : f32 to vector<8x64xf32>
    %293 = arith.mulf %292, %291 : vector<8x64xf32>
    %294 = math.tanh %293 : vector<8x64xf32>
    %cst_109 = arith.constant 1.000000e+00 : f32
    %295 = vector.broadcast %cst_109 : f32 to vector<8x64xf32>
    %296 = arith.addf %295, %294 : vector<8x64xf32>
    %297 = arith.mulf %286, %296 : vector<8x64xf32>
    %298 = arith.truncf %297 : vector<8x64xf32> to vector<8x64xbf16>
    %c1_110 = arith.constant 1 : index
    %c0_111 = arith.constant 0 : index
    %c0_112 = arith.constant 0 : index
    %299 = vector.load %arg13[%c1_110, %c0_111, %c0_112] : memref<2x64x32xf32, #tpu.memory_space<vmem>>, vector<1x64x32xf32>
    %300 = vector.shape_cast %299 : vector<1x64x32xf32> to vector<64x32xf32>
    %301 = arith.truncf %300 : vector<64x32xf32> to vector<64x32xbf16>
    %cst_113 = arith.constant dense<0.000000e+00> : vector<8x32xf32>
    %302 = tpu.matmul %298, %301, %cst_113 {dimension_numbers = #tpu.dot_dimension_numbers<[1], [0], [0], [1], [0, 0, 1, 1], [], []>} : vector<8x64xbf16>, vector<64x32xbf16>, vector<8x32xf32> -> vector<8x32xf32>
    %c1_114 = arith.constant 1 : index
    %c0_115 = arith.constant 0 : index
    %c0_116 = arith.constant 0 : index
    %303 = vector.load %arg14[%c1_114, %c0_115, %c0_116] : memref<2x1x32xf32, #tpu.memory_space<vmem>>, vector<1x1x32xf32>
    %304 = vector.shape_cast %303 : vector<1x1x32xf32> to vector<1x32xf32>
    %305 = vector.broadcast %304 : vector<1x32xf32> to vector<8x32xf32>
    %306 = arith.addf %302, %305 : vector<8x32xf32>
    %307 = arith.addf %306, %275 : vector<8x32xf32>
    %c1_117 = arith.constant 1 : index
    %c0_118 = arith.constant 0 : index
    %c0_119 = arith.constant 0 : index
    %308 = vector.load %arg15[%c1_117, %c0_118, %c0_119] : memref<2x1x32xf32, #tpu.memory_space<vmem>>, vector<1x1x32xf32>
    %309 = vector.shape_cast %308 : vector<1x1x32xf32> to vector<1x32xf32>
    %c1_120 = arith.constant 1 : index
    %c0_121 = arith.constant 0 : index
    %c0_122 = arith.constant 0 : index
    %310 = vector.load %arg16[%c1_120, %c0_121, %c0_122] : memref<2x1x32xf32, #tpu.memory_space<vmem>>, vector<1x1x32xf32>
    %311 = vector.shape_cast %310 : vector<1x1x32xf32> to vector<1x32xf32>
    %cst_123 = arith.constant dense<0.000000e+00> : vector<8xf32>
    %312 = vector.multi_reduction <add>, %307, %cst_123 [1] : vector<8x32xf32> to vector<8xf32>
    %313 = vector.shape_cast %312 : vector<8xf32> to vector<8x1xf32>
    %cst_124 = arith.constant 3.200000e+01 : f32
    %314 = vector.broadcast %cst_124 : f32 to vector<8x1xf32>
    %315 = arith.divf %313, %314 : vector<8x1xf32>
    %316 = vector.broadcast %315 : vector<8x1xf32> to vector<8x32xf32>
    %317 = arith.subf %307, %316 : vector<8x32xf32>
    %318 = arith.mulf %317, %317 : vector<8x32xf32>
    %cst_125 = arith.constant dense<0.000000e+00> : vector<8xf32>
    %319 = vector.multi_reduction <add>, %318, %cst_125 [1] : vector<8x32xf32> to vector<8xf32>
    %320 = vector.shape_cast %319 : vector<8xf32> to vector<8x1xf32>
    %cst_126 = arith.constant 3.200000e+01 : f32
    %321 = vector.broadcast %cst_126 : f32 to vector<8x1xf32>
    %322 = arith.divf %320, %321 : vector<8x1xf32>
    %cst_127 = arith.constant 9.99999996E-13 : f32
    %323 = vector.broadcast %cst_127 : f32 to vector<8x1xf32>
    %324 = arith.addf %322, %323 : vector<8x1xf32>
    %325 = math.rsqrt %324 : vector<8x1xf32>
    %326 = vector.broadcast %325 : vector<8x1xf32> to vector<8x32xf32>
    %327 = arith.mulf %317, %326 : vector<8x32xf32>
    %328 = vector.broadcast %309 : vector<1x32xf32> to vector<8x32xf32>
    %329 = arith.mulf %327, %328 : vector<8x32xf32>
    %330 = vector.broadcast %311 : vector<1x32xf32> to vector<8x32xf32>
    %331 = arith.addf %329, %330 : vector<8x32xf32>
    %332 = vector.extract_strided_slice %331 {offsets = [0, 0], sizes = [1, 32], strides = [1, 1]} : vector<8x32xf32> to vector<1x32xf32>
    %333 = arith.truncf %332 : vector<1x32xf32> to vector<1x32xbf16>
    %c0_128 = arith.constant 0 : index
    %c0_129 = arith.constant 0 : index
    %334 = vector.load %arg17[%c0_128, %c0_129] : memref<32x32xf32, #tpu.memory_space<vmem>>, vector<32x32xf32>
    %335 = arith.truncf %334 : vector<32x32xf32> to vector<32x32xbf16>
    %cst_130 = arith.constant dense<0.000000e+00> : vector<1x32xf32>
    %336 = tpu.matmul %333, %335, %cst_130 {dimension_numbers = #tpu.dot_dimension_numbers<[1], [0], [0], [1], [0, 0, 1, 1], [], []>} : vector<1x32xbf16>, vector<32x32xbf16>, vector<1x32xf32> -> vector<1x32xf32>
    %c0_131 = arith.constant 0 : index
    %c0_132 = arith.constant 0 : index
    %337 = vector.load %arg18[%c0_131, %c0_132] : memref<1x32xf32, #tpu.memory_space<vmem>>, vector<1x32xf32>
    %338 = arith.addf %336, %337 : vector<1x32xf32>
    %339 = math.tanh %338 : vector<1x32xf32>
    %340 = arith.truncf %339 : vector<1x32xf32> to vector<1x32xbf16>
    %c0_133 = arith.constant 0 : index
    %c0_134 = arith.constant 0 : index
    %341 = vector.load %arg19[%c0_133, %c0_134] : memref<32x128xf32, #tpu.memory_space<vmem>>, vector<32x128xf32>
    %342 = arith.truncf %341 : vector<32x128xf32> to vector<32x128xbf16>
    %cst_135 = arith.constant dense<0.000000e+00> : vector<1x128xf32>
    %343 = tpu.matmul %340, %342, %cst_135 {dimension_numbers = #tpu.dot_dimension_numbers<[1], [0], [0], [1], [0, 0, 1, 1], [], []>} : vector<1x32xbf16>, vector<32x128xbf16>, vector<1x128xf32> -> vector<1x128xf32>
    %c0_136 = arith.constant 0 : index
    %c0_137 = arith.constant 0 : index
    %344 = vector.load %arg20[%c0_136, %c0_137] : memref<1x128xf32, #tpu.memory_space<vmem>>, vector<1x128xf32>
    %345 = arith.addf %343, %344 : vector<1x128xf32>
    %c0_138 = arith.constant 0 : index
    %c0_139 = arith.constant 0 : index
    %c0_140 = arith.constant 0 : index
    %346 = vector.load %arg21[%c0_138, %c0_139, %c0_140] : memref<1x1x128xf32, #tpu.memory_space<vmem>>, vector<1x1x128xf32>
    %347 = vector.shape_cast %346 : vector<1x1x128xf32> to vector<1x128xf32>
    %348 = vector.shape_cast %345 : vector<1x128xf32> to vector<1x1x128xf32>
    tpu.vector_store %arg21[%c0_138, %c0_139, %c0_140], %348 {strides = array<i32>} : memref<1x1x128xf32, #tpu.memory_space<vmem>>, vector<1x1x128xf32>,
    return
  }
  func.func @transform_0(%arg0: i32) -> (i32, i32, i32) {
    %c0_i32 = arith.constant 0 : i32
    %c0_i32_0 = arith.constant 0 : i32
    %c0_i32_1 = arith.constant 0 : i32
    return %arg0, %c0_i32, %c0_i32_0 : i32, i32, i32
  }
  func.func @transform_1(%arg0: i32) -> (i32, i32, i32) {
    %c0_i32 = arith.constant 0 : i32
    %c0_i32_0 = arith.constant 0 : i32
    %c0_i32_1 = arith.constant 0 : i32
    return %arg0, %c0_i32, %c0_i32_0 : i32, i32, i32
  }
  func.func @transform_2(%arg0: i32) -> (i32, i32) {
    %c0_i32 = arith.constant 0 : i32
    %c0_i32_0 = arith.constant 0 : i32
    %c0_i32_1 = arith.constant 0 : i32
    return %c0_i32, %c0_i32_0 : i32, i32
  }
  func.func @transform_3(%arg0: i32) -> (i32, i32) {
    %c0_i32 = arith.constant 0 : i32
    %c0_i32_0 = arith.constant 0 : i32
    %c0_i32_1 = arith.constant 0 : i32
    return %c0_i32, %c0_i32_0 : i32, i32
  }
  func.func @transform_4(%arg0: i32) -> (i32, i32, i32) {
    %c0_i32 = arith.constant 0 : i32
    %c0_i32_0 = arith.constant 0 : i32
    %c0_i32_1 = arith.constant 0 : i32
    %c0_i32_2 = arith.constant 0 : i32
    return %c0_i32, %c0_i32_0, %c0_i32_1 : i32, i32, i32
  }
  func.func @transform_5(%arg0: i32) -> (i32, i32, i32) {
    %c0_i32 = arith.constant 0 : i32
    %c0_i32_0 = arith.constant 0 : i32
    %c0_i32_1 = arith.constant 0 : i32
    %c0_i32_2 = arith.constant 0 : i32
    return %c0_i32, %c0_i32_0, %c0_i32_1 : i32, i32, i32
  }
  func.func @transform_6(%arg0: i32) -> (i32, i32, i32) {
    %c0_i32 = arith.constant 0 : i32
    %c0_i32_0 = arith.constant 0 : i32
    %c0_i32_1 = arith.constant 0 : i32
    %c0_i32_2 = arith.constant 0 : i32
    return %c0_i32, %c0_i32_0, %c0_i32_1 : i32, i32, i32
  }
  func.func @transform_7(%arg0: i32) -> (i32, i32, i32) {
    %c0_i32 = arith.constant 0 : i32
    %c0_i32_0 = arith.constant 0 : i32
    %c0_i32_1 = arith.constant 0 : i32
    %c0_i32_2 = arith.constant 0 : i32
    return %c0_i32, %c0_i32_0, %c0_i32_1 : i32, i32, i32
  }
  func.func @transform_8(%arg0: i32) -> (i32, i32, i32) {
    %c0_i32 = arith.constant 0 : i32
    %c0_i32_0 = arith.constant 0 : i32
    %c0_i32_1 = arith.constant 0 : i32
    %c0_i32_2 = arith.constant 0 : i32
    return %c0_i32, %c0_i32_0, %c0_i32_1 : i32, i32, i32
  }
  func.func @transform_9(%arg0: i32) -> (i32, i32, i32) {
    %c0_i32 = arith.constant 0 : i32
    %c0_i32_0 = arith.constant 0 : i32
    %c0_i32_1 = arith.constant 0 : i32
    %c0_i32_2 = arith.constant 0 : i32
    return %c0_i32, %c0_i32_0, %c0_i32_1 : i32, i32, i32
  }
  func.func @transform_10(%arg0: i32) -> (i32, i32, i32) {
    %c0_i32 = arith.constant 0 : i32
    %c0_i32_0 = arith.constant 0 : i32
    %c0_i32_1 = arith.constant 0 : i32
    %c0_i32_2 = arith.constant 0 : i32
    return %c0_i32, %c0_i32_0, %c0_i32_1 : i32, i32, i32
  }
  func.func @transform_11(%arg0: i32) -> (i32, i32, i32) {
    %c0_i32 = arith.constant 0 : i32
    %c0_i32_0 = arith.constant 0 : i32
    %c0_i32_1 = arith.constant 0 : i32
    %c0_i32_2 = arith.constant 0 : i32
    return %c0_i32, %c0_i32_0, %c0_i32_1 : i32, i32, i32
  }
  func.func @transform_12(%arg0: i32) -> (i32, i32, i32) {
    %c0_i32 = arith.constant 0 : i32
    %c0_i32_0 = arith.constant 0 : i32
    %c0_i32_1 = arith.constant 0 : i32
    %c0_i32_2 = arith.constant 0 : i32
    return %c0_i32, %c0_i32_0, %c0_i32_1 : i32, i32, i32
  }
  func.func @transform_13(%arg0: i32) -> (i32, i32, i32) {
    %c0_i32 = arith.constant 0 : i32
    %c0_i32_0 = arith.constant 0 : i32
    %c0_i32_1 = arith.constant 0 : i32
    %c0_i32_2 = arith.constant 0 : i32
    return %c0_i32, %c0_i32_0, %c0_i32_1 : i32, i32, i32
  }
  func.func @transform_14(%arg0: i32) -> (i32, i32, i32) {
    %c0_i32 = arith.constant 0 : i32
    %c0_i32_0 = arith.constant 0 : i32
    %c0_i32_1 = arith.constant 0 : i32
    %c0_i32_2 = arith.constant 0 : i32
    return %c0_i32, %c0_i32_0, %c0_i32_1 : i32, i32, i32
  }
  func.func @transform_15(%arg0: i32) -> (i32, i32, i32) {
    %c0_i32 = arith.constant 0 : i32
    %c0_i32_0 = arith.constant 0 : i32
    %c0_i32_1 = arith.constant 0 : i32
    %c0_i32_2 = arith.constant 0 : i32
    return %c0_i32, %c0_i32_0, %c0_i32_1 : i32, i32, i32
  }
  func.func @transform_16(%arg0: i32) -> (i32, i32) {
    %c0_i32 = arith.constant 0 : i32
    %c0_i32_0 = arith.constant 0 : i32
    %c0_i32_1 = arith.constant 0 : i32
    return %c0_i32, %c0_i32_0 : i32, i32
  }
  func.func @transform_17(%arg0: i32) -> (i32, i32) {
    %c0_i32 = arith.constant 0 : i32
    %c0_i32_0 = arith.constant 0 : i32
    %c0_i32_1 = arith.constant 0 : i32
    return %c0_i32, %c0_i32_0 : i32, i32
  }
  func.func @transform_18(%arg0: i32) -> (i32, i32) {
    %c0_i32 = arith.constant 0 : i32
    %c0_i32_0 = arith.constant 0 : i32
    %c0_i32_1 = arith.constant 0 : i32
    return %c0_i32, %c0_i32_0 : i32, i32
  }
  func.func @transform_19(%arg0: i32) -> (i32, i32) {
    %c0_i32 = arith.constant 0 : i32
    %c0_i32_0 = arith.constant 0 : i32
    %c0_i32_1 = arith.constant 0 : i32
    return %c0_i32, %c0_i32_0 : i32, i32
  }
  func.func @transform_20(%arg0: i32) -> (i32, i32, i32) {
    %c0_i32 = arith.constant 0 : i32
    %c0_i32_0 = arith.constant 0 : i32
    %c0_i32_1 = arith.constant 0 : i32
    return %arg0, %c0_i32, %c0_i32_0 : i32, i32, i32
  }
}

</mosaic_0001>

<llo_original>
// kernel: tpu_custom_call.1
$region0: #{tpu_custom_call.1}
  #allocation0 [shape = 'u32[]', space=smem, size = 0x4, offset = 0x4, fixed_abs, tag = 'smem constant byte address 0x4 - core index']
  #allocation1 [shape = 'u32[144,128]{1,0:T(1,128)}', space=vmem, size = 0x12000, scoped, tag = 'internal scratch']
  %s0 = inlined_call_operand.hbm [shape: f32[2,8,32], index: 0, kind: input, shape index: {}]
  %s1 = inlined_call_operand.hbm [shape: f32[2,1,8], index: 1, kind: input, shape index: {}]
  %s2 = inlined_call_operand.hbm [shape: f32[1,32], index: 2, kind: input, shape index: {}]
  %s3 = inlined_call_operand.hbm [shape: f32[1,32], index: 3, kind: input, shape index: {}]
  %s4 = inlined_call_operand.vmem [shape: f32[2,32,96], index: 4, kind: input, shape index: {}]
  %s5 = inlined_call_operand.hbm [shape: f32[2,1,96], index: 5, kind: input, shape index: {}]
  %s6 = inlined_call_operand.vmem [shape: f32[2,32,32], index: 6, kind: input, shape index: {}]
  %s7 = inlined_call_operand.hbm [shape: f32[2,1,32], index: 7, kind: input, shape index: {}]
  %s8 = inlined_call_operand.hbm [shape: f32[2,1,32], index: 8, kind: input, shape index: {}]
  %s9 = inlined_call_operand.hbm [shape: f32[2,1,32], index: 9, kind: input, shape index: {}]
  %s10 = inlined_call_operand.vmem [shape: f32[2,32,64], index: 10, kind: input, shape index: {}]
  %s11 = inlined_call_operand.hbm [shape: f32[2,1,64], index: 11, kind: input, shape index: {}]
  %s12 = inlined_call_operand.vmem [shape: f32[2,64,32], index: 12, kind: input, shape index: {}]
  %s13 = inlined_call_operand.hbm [shape: f32[2,1,32], index: 13, kind: input, shape index: {}]
  %s14 = inlined_call_operand.hbm [shape: f32[2,1,32], index: 14, kind: input, shape index: {}]
  %s15 = inlined_call_operand.hbm [shape: f32[2,1,32], index: 15, kind: input, shape index: {}]
  %s16 = inlined_call_operand.hbm [shape: f32[32,32], index: 16, kind: input, shape index: {}]
  %s17 = inlined_call_operand.hbm [shape: f32[1,32], index: 17, kind: input, shape index: {}]
  %s18 = inlined_call_operand.vmem [shape: f32[32,128], index: 18, kind: input, shape index: {}]
  %s19 = inlined_call_operand.hbm [shape: f32[1,128], index: 19, kind: input, shape index: {}]
  %s20 = inlined_call_operand.hbm [shape: f32[2,1,128], index: 20, kind: output, shape index: {}]
  %s21 = sld [smem:[#allocation0]]
  $region173: #{tpu_custom_call.1} parent=0
    _
  %s23 = ssub.s32 1, %s21
  %s24 = scalar_select 0, %s23, %s21
  $region1: #{tpu_custom_call.1} parent=0
    #allocation2 [shape = 'u8[8192]{0}', space=vmem, size = 0x2000, scoped, tag = 'input window, operand 0']
    #allocation3 [shape = 's32[2]{0}', space=sflag, size = 0x8, scoped, tag = 'scoped memory for tpu_custom_call.1']
    #allocation4 [shape = 's32[2]{0}', space=sflag, size = 0x8, scoped, tag = 'scoped memory for tpu_custom_call.1']
    #allocation5 [shape = 'u8[1024]{0}', space=vmem, size = 0x400, scoped, tag = 'input window, operand 1']
    #allocation6 [shape = 's32[2]{0}', space=sflag, size = 0x8, scoped, tag = 'scoped memory for tpu_custom_call.1']
    #allocation7 [shape = 'u8[512]{0}', space=vmem, size = 0x400, scoped, tag = 'input window, operand 2, single buffered']
    #allocation8 [shape = 'u8[512]{0}', space=vmem, size = 0x400, scoped, tag = 'input window, operand 3, single buffered']
    #allocation9 [shape = 's32[1]{0}', space=sflag, size = 0x4, scoped, tag = 'scoped memory for tpu_custom_call.1']
    #allocation10 [shape = 'u8[1024]{0}', space=vmem, size = 0x400, scoped, tag = 'input window, operand 5, single buffered']
    #allocation11 [shape = 'u8[1024]{0}', space=vmem, size = 0x400, scoped, tag = 'input window, operand 7, single buffered']
    #allocation12 [shape = 's32[1]{0}', space=sflag, size = 0x4, scoped, tag = 'scoped memory for tpu_custom_call.1']
    #allocation13 [shape = 'u8[1024]{0}', space=vmem, size = 0x400, scoped, tag = 'input window, operand 8, single buffered']
    #allocation14 [shape = 'u8[1024]{0}', space=vmem, size = 0x400, scoped, tag = 'input window, operand 9, single buffered']
    #allocation15 [shape = 's32[1]{0}', space=sflag, size = 0x4, scoped, tag = 'scoped memory for tpu_custom_call.1']
    #allocation16 [shape = 'u8[1024]{0}', space=vmem, size = 0x400, scoped, tag = 'input window, operand 11, single buffered']
    #allocation17 [shape = 'u8[1024]{0}', space=vmem, size = 0x400, scoped, tag = 'input window, operand 13, single buffered']
    #allocation18 [shape = 's32[1]{0}', space=sflag, size = 0x4, scoped, tag = 'scoped memory for tpu_custom_call.1']
    #allocation19 [shape = 'u8[1024]{0}', space=vmem, size = 0x400, scoped, tag = 'input window, operand 14, single buffered']
    #allocation20 [shape = 'u8[1024]{0}', space=vmem, size = 0x400, scoped, tag = 'input window, operand 15, single buffered']
    #allocation21 [shape = 's32[1]{0}', space=sflag, size = 0x4, scoped, tag = 'scoped memory for tpu_custom_call.1']
    #allocation22 [shape = 'u8[16384]{0}', space=vmem, size = 0x4000, scoped, tag = 'input window, operand 16, single buffered']
    #allocation23 [shape = 'u8[512]{0}', space=vmem, size = 0x400, scoped, tag = 'input window, operand 17, single buffered']
    #allocation24 [shape = 's32[1]{0}', space=sflag, size = 0x4, scoped, tag = 'scoped memory for tpu_custom_call.1']
    #allocation25 [shape = 'u8[512]{0}', space=vmem, size = 0x400, scoped, tag = 'input window, operand 19, single buffered']
    #allocation26 [shape = 'u8[1024]{0}', space=vmem, size = 0x400, scoped, tag = 'output window, operand 0']
    %25 = vsyncpa [#allocation3], 0
    %s26 = scalar_lea.sflag [#allocation3], 1
    %27 = vsyncpa %s26, 0
    %28 = vsyncpa [#allocation6], 0
    %s29 = scalar_lea.sflag [#allocation6], 1
    %30 = vsyncpa %s29, 0
    %31 = vsyncpa [#allocation9], 0
    %32 = vsyncpa [#allocation12], 0
    %33 = vsyncpa [#allocation15], 0
    %34 = vsyncpa [#allocation18], 0
    %35 = vsyncpa [#allocation21], 0
    %36 = vsyncpa [#allocation24], 0
    %37 = vsyncpa [#allocation4], 0
    %s38 = scalar_lea.sflag [#allocation4], 1
    %39 = vsyncpa %s38, 0
    loop: start=0, step=1, limit=4
    $region2: #{tpu_custom_call.1} parent=1 // loop_pre_header
      _
    $region3: #{tpu_custom_call.1} parent=1 // loop_header
      %s41 = sphi 0, %s45
      %p42 = scmp.ge.s32.totalorder %s41, 4
      %s51 = sphi 0, %s53
      %s54 = sphi 0, %s51
      %s55 = sphi 0, %s54
      %s71 = sphi 0, %s55
      %s77 = sphi 0, %s79
      %s80 = sphi 0, %s77
      %s81 = sphi 0, %s80
      %s97 = sphi 0, %s81
      %s101 = sphi 0, %s101
      %s103 = sphi 0, %s101
      %s104 = sphi 0, %s103
      %s118 = sphi 0, %s104
      %s122 = sphi 0, %s122
      %s124 = sphi 0, %s122
      %s125 = sphi 0, %s124
      %s139 = sphi 0, %s125
      %s143 = sphi 0, %s143
      %s145 = sphi 0, %s143
      %s146 = sphi 0, %s145
      %s160 = sphi 0, %s146
      %s164 = sphi 0, %s164
      %s166 = sphi 0, %s164
      %s167 = sphi 0, %s166
      %s181 = sphi 0, %s167
      %s185 = sphi 0, %s185
      %s187 = sphi 0, %s185
      %s188 = sphi 0, %s187
      %s202 = sphi 0, %s188
      %s206 = sphi 0, %s206
      %s208 = sphi 0, %s206
      %s209 = sphi 0, %s208
      %s223 = sphi 0, %s209
      %s227 = sphi 0, %s227
      %s229 = sphi 0, %s227
      %s230 = sphi 0, %s229
      %s244 = sphi 0, %s230
      %s248 = sphi 0, %s248
      %s250 = sphi 0, %s248
      %s251 = sphi 0, %s250
      %s265 = sphi 0, %s251
      %s269 = sphi 0, %s269
      %s271 = sphi 0, %s269
      %s272 = sphi 0, %s271
      %s286 = sphi 0, %s272
      %s290 = sphi 0, %s290
      %s292 = sphi 0, %s290
      %s293 = sphi 0, %s292
      %s307 = sphi 0, %s293
      %s311 = sphi 0, %s311
      %s313 = sphi 0, %s311
      %s314 = sphi 0, %s313
      %s328 = sphi 0, %s314
      %s332 = sphi 0, %s332
      %s334 = sphi 0, %s332
      %s335 = sphi 0, %s334
      %s349 = sphi 0, %s335
      %s353 = sphi 0, %s353
      %s355 = sphi 0, %s353
      %s356 = sphi 0, %s355
      %s370 = sphi 0, %s356
      %s374 = sphi 0, %s374
      %s376 = sphi 0, %s374
      %s377 = sphi 0, %s376
      %s391 = sphi 0, %s377
      %s395 = sphi 0, %s395
      %s397 = sphi 0, %s395
      %s398 = sphi 0, %s397
      %s412 = sphi 0, %s398
      %s416 = sphi 0, %s416
      %s418 = sphi 0, %s416
      %s419 = sphi 0, %s418
      %s433 = sphi 0, %s419
      %s437 = sphi 0, %s437
      %s439 = sphi 0, %s437
      %s440 = sphi 0, %s439
      %s454 = sphi 0, %s440
      %s458 = sphi 0, %s458
      %s460 = sphi 0, %s458
      %s461 = sphi 0, %s460
      %s475 = sphi 0, %s461
      %s481 = sphi 0, %s483
      %s484 = sphi 0, %s481
      %s485 = sphi 0, %s484
      %s501 = sphi 0, %s485
    $region4: #{tpu_custom_call.1} parent=1 // loop_header_branch
      %44 = sbr.rel (%p42) target = $region8
    $region5: #{tpu_custom_call.1} parent=1 // loop_body
      %s46 = ssub.s32 %s41, 1
      %s47 = ssub.s32 %s41, 2
      %s48 = sadd.s32 %s41, 1
      %s49 = ssub.s32 %s41, %s48
      %p50 = scmp.eq.s32.totalorder %s49, 0
      %s52 = sadd.s32 %s51, 1
      %s53 = scalar_select %p50, %s51, %s52
      %p56 = pneg %p50
      %p57 = scmp.eq.s32.totalorder %s41, 1
      %p58 = por %p56, %p57
      %p59 = scmp.ne.s32.totalorder %s51, %s54
      %p60 = scmp.eq.s32.totalorder %s41, 0
      %p61 = por %p59, %p60
      %p62 = scmp.ne.s32.totalorder %s51, %s54
      %p63 = scmp.eq.s32.totalorder %s46, 1
      %p64 = por %p62, %p63
      %p65 = scmp.ne.s32.totalorder %s54, %s55
      %p66 = scmp.eq.s32.totalorder %s46, 0
      %p67 = por %p65, %p66
      %p68 = scmp.ne.s32.totalorder %s54, %s55
      %p69 = scmp.eq.s32.totalorder %s47, 1
      %p70 = por %p68, %p69
      %p72 = scmp.ne.s32.totalorder %s55, %s71
      %p73 = scmp.eq.s32.totalorder %s47, 0
      %p74 = por %p72, %p73
      %s75 = ssub.s32 %s41, %s48
      %p76 = scmp.eq.s32.totalorder %s75, 0
      %s78 = sadd.s32 %s77, 1
      %s79 = scalar_select %p76, %s77, %s78
      %p82 = pneg %p76
      %p83 = scmp.eq.s32.totalorder %s41, 1
      %p84 = por %p82, %p83
      %p85 = scmp.ne.s32.totalorder %s77, %s80
      %p86 = scmp.eq.s32.totalorder %s41, 0
      %p87 = por %p85, %p86
      %p88 = scmp.ne.s32.totalorder %s77, %s80
      %p89 = scmp.eq.s32.totalorder %s46, 1
      %p90 = por %p88, %p89
      %p91 = scmp.ne.s32.totalorder %s80, %s81
      %p92 = scmp.eq.s32.totalorder %s46, 0
      %p93 = por %p91, %p92
      %p94 = scmp.ne.s32.totalorder %s80, %s81
      %p95 = scmp.eq.s32.totalorder %s47, 1
      %p96 = por %p94, %p95
      %p98 = scmp.ne.s32.totalorder %s81, %s97
      %p99 = scmp.eq.s32.totalorder %s47, 0
      %p100 = por %p98, %p99
      %s102 = sadd.s32 %s101, 1
      %p105 = scmp.eq.s32.totalorder %s41, 1
      %p106 = scmp.ne.s32.totalorder %s101, %s103
      %p107 = scmp.eq.s32.totalorder %s41, 0
      %p108 = por %p106, %p107
      %p109 = scmp.ne.s32.totalorder %s101, %s103
      %p110 = scmp.eq.s32.totalorder %s46, 1
      %p111 = por %p109, %p110
      %p112 = scmp.ne.s32.totalorder %s103, %s104
      %p113 = scmp.eq.s32.totalorder %s46, 0
      %p114 = por %p112, %p113
      %p115 = scmp.ne.s32.totalorder %s103, %s104
      %p116 = scmp.eq.s32.totalorder %s47, 1
      %p117 = por %p115, %p116
      %p119 = scmp.ne.s32.totalorder %s104, %s118
      %p120 = scmp.eq.s32.totalorder %s47, 0
      %p121 = por %p119, %p120
      %s123 = sadd.s32 %s122, 1
      %p126 = scmp.eq.s32.totalorder %s41, 1
      %p127 = scmp.ne.s32.totalorder %s122, %s124
      %p128 = scmp.eq.s32.totalorder %s41, 0
      %p129 = por %p127, %p128
      %p130 = scmp.ne.s32.totalorder %s122, %s124
      %p131 = scmp.eq.s32.totalorder %s46, 1
      %p132 = por %p130, %p131
      %p133 = scmp.ne.s32.totalorder %s124, %s125
      %p134 = scmp.eq.s32.totalorder %s46, 0
      %p135 = por %p133, %p134
      %p136 = scmp.ne.s32.totalorder %s124, %s125
      %p137 = scmp.eq.s32.totalorder %s47, 1
      %p138 = por %p136, %p137
      %p140 = scmp.ne.s32.totalorder %s125, %s139
      %p141 = scmp.eq.s32.totalorder %s47, 0
      %p142 = por %p140, %p141
      %s144 = sadd.s32 %s143, 1
      %p147 = scmp.eq.s32.totalorder %s41, 1
      %p148 = scmp.ne.s32.totalorder %s143, %s145
      %p149 = scmp.eq.s32.totalorder %s41, 0
      %p150 = por %p148, %p149
      %p151 = scmp.ne.s32.totalorder %s143, %s145
      %p152 = scmp.eq.s32.totalorder %s46, 1
      %p153 = por %p151, %p152
      %p154 = scmp.ne.s32.totalorder %s145, %s146
      %p155 = scmp.eq.s32.totalorder %s46, 0
      %p156 = por %p154, %p155
      %p157 = scmp.ne.s32.totalorder %s145, %s146
      %p158 = scmp.eq.s32.totalorder %s47, 1
      %p159 = por %p157, %p158
      %p161 = scmp.ne.s32.totalorder %s146, %s160
      %p162 = scmp.eq.s32.totalorder %s47, 0
      %p163 = por %p161, %p162
      %s165 = sadd.s32 %s164, 1
      %p168 = scmp.eq.s32.totalorder %s41, 1
      %p169 = scmp.ne.s32.totalorder %s164, %s166
      %p170 = scmp.eq.s32.totalorder %s41, 0
      %p171 = por %p169, %p170
      %p172 = scmp.ne.s32.totalorder %s164, %s166
      %p173 = scmp.eq.s32.totalorder %s46, 1
      %p174 = por %p172, %p173
      %p175 = scmp.ne.s32.totalorder %s166, %s167
      %p176 = scmp.eq.s32.totalorder %s46, 0
      %p177 = por %p175, %p176
      %p178 = scmp.ne.s32.totalorder %s166, %s167
      %p179 = scmp.eq.s32.totalorder %s47, 1
      %p180 = por %p178, %p179
      %p182 = scmp.ne.s32.totalorder %s167, %s181
      %p183 = scmp.eq.s32.totalorder %s47, 0
      %p184 = por %p182, %p183
      %s186 = sadd.s32 %s185, 1
      %p189 = scmp.eq.s32.totalorder %s41, 1
      %p190 = scmp.ne.s32.totalorder %s185, %s187
      %p191 = scmp.eq.s32.totalorder %s41, 0
      %p192 = por %p190, %p191
      %p193 = scmp.ne.s32.totalorder %s185, %s187
      %p194 = scmp.eq.s32.totalorder %s46, 1
      %p195 = por %p193, %p194
      %p196 = scmp.ne.s32.totalorder %s187, %s188
      %p197 = scmp.eq.s32.totalorder %s46, 0
      %p198 = por %p196, %p197
      %p199 = scmp.ne.s32.totalorder %s187, %s188
      %p200 = scmp.eq.s32.totalorder %s47, 1
      %p201 = por %p199, %p200
      %p203 = scmp.ne.s32.totalorder %s188, %s202
      %p204 = scmp.eq.s32.totalorder %s47, 0
      %p205 = por %p203, %p204
      %s207 = sadd.s32 %s206, 1
      %p210 = scmp.eq.s32.totalorder %s41, 1
      %p211 = scmp.ne.s32.totalorder %s206, %s208
      %p212 = scmp.eq.s32.totalorder %s41, 0
      %p213 = por %p211, %p212
      %p214 = scmp.ne.s32.totalorder %s206, %s208
      %p215 = scmp.eq.s32.totalorder %s46, 1
      %p216 = por %p214, %p215
      %p217 = scmp.ne.s32.totalorder %s208, %s209
      %p218 = scmp.eq.s32.totalorder %s46, 0
      %p219 = por %p217, %p218
      %p220 = scmp.ne.s32.totalorder %s208, %s209
      %p221 = scmp.eq.s32.totalorder %s47, 1
      %p222 = por %p220, %p221
      %p224 = scmp.ne.s32.totalorder %s209, %s223
      %p225 = scmp.eq.s32.totalorder %s47, 0
      %p226 = por %p224, %p225
      %s228 = sadd.s32 %s227, 1
      %p231 = scmp.eq.s32.totalorder %s41, 1
      %p232 = scmp.ne.s32.totalorder %s227, %s229
      %p233 = scmp.eq.s32.totalorder %s41, 0
      %p234 = por %p232, %p233
      %p235 = scmp.ne.s32.totalorder %s227, %s229
      %p236 = scmp.eq.s32.totalorder %s46, 1
      %p237 = por %p235, %p236
      %p238 = scmp.ne.s32.totalorder %s229, %s230
      %p239 = scmp.eq.s32.totalorder %s46, 0
      %p240 = por %p238, %p239
      %p241 = scmp.ne.s32.totalorder %s229, %s230
      %p242 = scmp.eq.s32.totalorder %s47, 1
      %p243 = por %p241, %p242
      %p245 = scmp.ne.s32.totalorder %s230, %s244
      %p246 = scmp.eq.s32.totalorder %s47, 0
      %p247 = por %p245, %p246
      %s249 = sadd.s32 %s248, 1
      %p252 = scmp.eq.s32.totalorder %s41, 1
      %p253 = scmp.ne.s32.totalorder %s248, %s250
      %p254 = scmp.eq.s32.totalorder %s41, 0
      %p255 = por %p253, %p254
      %p256 = scmp.ne.s32.totalorder %s248, %s250
      %p257 = scmp.eq.s32.totalorder %s46, 1
      %p258 = por %p256, %p257
      %p259 = scmp.ne.s32.totalorder %s250, %s251
      %p260 = scmp.eq.s32.totalorder %s46, 0
      %p261 = por %p259, %p260
      %p262 = scmp.ne.s32.totalorder %s250, %s251
      %p263 = scmp.eq.s32.totalorder %s47, 1
      %p264 = por %p262, %p263
      %p266 = scmp.ne.s32.totalorder %s251, %s265
      %p267 = scmp.eq.s32.totalorder %s47, 0
      %p268 = por %p266, %p267
      %s270 = sadd.s32 %s269, 1
      %p273 = scmp.eq.s32.totalorder %s41, 1
      %p274 = scmp.ne.s32.totalorder %s269, %s271
      %p275 = scmp.eq.s32.totalorder %s41, 0
      %p276 = por %p274, %p275
      %p277 = scmp.ne.s32.totalorder %s269, %s271
      %p278 = scmp.eq.s32.totalorder %s46, 1
      %p279 = por %p277, %p278
      %p280 = scmp.ne.s32.totalorder %s271, %s272
      %p281 = scmp.eq.s32.totalorder %s46, 0
      %p282 = por %p280, %p281
      %p283 = scmp.ne.s32.totalorder %s271, %s272
      %p284 = scmp.eq.s32.totalorder %s47, 1
      %p285 = por %p283, %p284
      %p287 = scmp.ne.s32.totalorder %s272, %s286
      %p288 = scmp.eq.s32.totalorder %s47, 0
      %p289 = por %p287, %p288
      %s291 = sadd.s32 %s290, 1
      %p294 = scmp.eq.s32.totalorder %s41, 1
      %p295 = scmp.ne.s32.totalorder %s290, %s292
      %p296 = scmp.eq.s32.totalorder %s41, 0
      %p297 = por %p295, %p296
      %p298 = scmp.ne.s32.totalorder %s290, %s292
      %p299 = scmp.eq.s32.totalorder %s46, 1
      %p300 = por %p298, %p299
      %p301 = scmp.ne.s32.totalorder %s292, %s293
      %p302 = scmp.eq.s32.totalorder %s46, 0
      %p303 = por %p301, %p302
      %p304 = scmp.ne.s32.totalorder %s292, %s293
      %p305 = scmp.eq.s32.totalorder %s47, 1
      %p306 = por %p304, %p305
      %p308 = scmp.ne.s32.totalorder %s293, %s307
      %p309 = scmp.eq.s32.totalorder %s47, 0
      %p310 = por %p308, %p309
      %s312 = sadd.s32 %s311, 1
      %p315 = scmp.eq.s32.totalorder %s41, 1
      %p316 = scmp.ne.s32.totalorder %s311, %s313
      %p317 = scmp.eq.s32.totalorder %s41, 0
      %p318 = por %p316, %p317
      %p319 = scmp.ne.s32.totalorder %s311, %s313
      %p320 = scmp.eq.s32.totalorder %s46, 1
      %p321 = por %p319, %p320
      %p322 = scmp.ne.s32.totalorder %s313, %s314
      %p323 = scmp.eq.s32.totalorder %s46, 0
      %p324 = por %p322, %p323
      %p325 = scmp.ne.s32.totalorder %s313, %s314
      %p326 = scmp.eq.s32.totalorder %s47, 1
      %p327 = por %p325, %p326
      %p329 = scmp.ne.s32.totalorder %s314, %s328
      %p330 = scmp.eq.s32.totalorder %s47, 0
      %p331 = por %p329, %p330
      %s333 = sadd.s32 %s332, 1
      %p336 = scmp.eq.s32.totalorder %s41, 1
      %p337 = scmp.ne.s32.totalorder %s332, %s334
      %p338 = scmp.eq.s32.totalorder %s41, 0
      %p339 = por %p337, %p338
      %p340 = scmp.ne.s32.totalorder %s332, %s334
      %p341 = scmp.eq.s32.totalorder %s46, 1
      %p342 = por %p340, %p341
      %p343 = scmp.ne.s32.totalorder %s334, %s335
      %p344 = scmp.eq.s32.totalorder %s46, 0
      %p345 = por %p343, %p344
      %p346 = scmp.ne.s32.totalorder %s334, %s335
      %p347 = scmp.eq.s32.totalorder %s47, 1
      %p348 = por %p346, %p347
      %p350 = scmp.ne.s32.totalorder %s335, %s349
      %p351 = scmp.eq.s32.totalorder %s47, 0
      %p352 = por %p350, %p351
      %s354 = sadd.s32 %s353, 1
      %p357 = scmp.eq.s32.totalorder %s41, 1
      %p358 = scmp.ne.s32.totalorder %s353, %s355
      %p359 = scmp.eq.s32.totalorder %s41, 0
      %p360 = por %p358, %p359
      %p361 = scmp.ne.s32.totalorder %s353, %s355
      %p362 = scmp.eq.s32.totalorder %s46, 1
      %p363 = por %p361, %p362
      %p364 = scmp.ne.s32.totalorder %s355, %s356
      %p365 = scmp.eq.s32.totalorder %s46, 0
      %p366 = por %p364, %p365
      %p367 = scmp.ne.s32.totalorder %s355, %s356
      %p368 = scmp.eq.s32.totalorder %s47, 1
      %p369 = por %p367, %p368
      %p371 = scmp.ne.s32.totalorder %s356, %s370
      %p372 = scmp.eq.s32.totalorder %s47, 0
      %p373 = por %p371, %p372
      %s375 = sadd.s32 %s374, 1
      %p378 = scmp.eq.s32.totalorder %s41, 1
      %p379 = scmp.ne.s32.totalorder %s374, %s376
      %p380 = scmp.eq.s32.totalorder %s41, 0
      %p381 = por %p379, %p380
      %p382 = scmp.ne.s32.totalorder %s374, %s376
      %p383 = scmp.eq.s32.totalorder %s46, 1
      %p384 = por %p382, %p383
      %p385 = scmp.ne.s32.totalorder %s376, %s377
      %p386 = scmp.eq.s32.totalorder %s46, 0
      %p387 = por %p385, %p386
      %p388 = scmp.ne.s32.totalorder %s376, %s377
      %p389 = scmp.eq.s32.totalorder %s47, 1
      %p390 = por %p388, %p389
      %p392 = scmp.ne.s32.totalorder %s377, %s391
      %p393 = scmp.eq.s32.totalorder %s47, 0
      %p394 = por %p392, %p393
      %s396 = sadd.s32 %s395, 1
      %p399 = scmp.eq.s32.totalorder %s41, 1
      %p400 = scmp.ne.s32.totalorder %s395, %s397
      %p401 = scmp.eq.s32.totalorder %s41, 0
      %p402 = por %p400, %p401
      %p403 = scmp.ne.s32.totalorder %s395, %s397
      %p404 = scmp.eq.s32.totalorder %s46, 1
      %p405 = por %p403, %p404
      %p406 = scmp.ne.s32.totalorder %s397, %s398
      %p407 = scmp.eq.s32.totalorder %s46, 0
      %p408 = por %p406, %p407
      %p409 = scmp.ne.s32.totalorder %s397, %s398
      %p410 = scmp.eq.s32.totalorder %s47, 1
      %p411 = por %p409, %p410
      %p413 = scmp.ne.s32.totalorder %s398, %s412
      %p414 = scmp.eq.s32.totalorder %s47, 0
      %p415 = por %p413, %p414
      %s417 = sadd.s32 %s416, 1
      %p420 = scmp.eq.s32.totalorder %s41, 1
      %p421 = scmp.ne.s32.totalorder %s416, %s418
      %p422 = scmp.eq.s32.totalorder %s41, 0
      %p423 = por %p421, %p422
      %p424 = scmp.ne.s32.totalorder %s416, %s418
      %p425 = scmp.eq.s32.totalorder %s46, 1
      %p426 = por %p424, %p425
      %p427 = scmp.ne.s32.totalorder %s418, %s419
      %p428 = scmp.eq.s32.totalorder %s46, 0
      %p429 = por %p427, %p428
      %p430 = scmp.ne.s32.totalorder %s418, %s419
      %p431 = scmp.eq.s32.totalorder %s47, 1
      %p432 = por %p430, %p431
      %p434 = scmp.ne.s32.totalorder %s419, %s433
      %p435 = scmp.eq.s32.totalorder %s47, 0
      %p436 = por %p434, %p435
      %s438 = sadd.s32 %s437, 1
      %p441 = scmp.eq.s32.totalorder %s41, 1
      %p442 = scmp.ne.s32.totalorder %s437, %s439
      %p443 = scmp.eq.s32.totalorder %s41, 0
      %p444 = por %p442, %p443
      %p445 = scmp.ne.s32.totalorder %s437, %s439
      %p446 = scmp.eq.s32.totalorder %s46, 1
      %p447 = por %p445, %p446
      %p448 = scmp.ne.s32.totalorder %s439, %s440
      %p449 = scmp.eq.s32.totalorder %s46, 0
      %p450 = por %p448, %p449
      %p451 = scmp.ne.s32.totalorder %s439, %s440
      %p452 = scmp.eq.s32.totalorder %s47, 1
      %p453 = por %p451, %p452
      %p455 = scmp.ne.s32.totalorder %s440, %s454
      %p456 = scmp.eq.s32.totalorder %s47, 0
      %p457 = por %p455, %p456
      %s459 = sadd.s32 %s458, 1
      %p462 = scmp.eq.s32.totalorder %s41, 1
      %p463 = scmp.ne.s32.totalorder %s458, %s460
      %p464 = scmp.eq.s32.totalorder %s41, 0
      %p465 = por %p463, %p464
      %p466 = scmp.ne.s32.totalorder %s458, %s460
      %p467 = scmp.eq.s32.totalorder %s46, 1
      %p468 = por %p466, %p467
      %p469 = scmp.ne.s32.totalorder %s460, %s461
      %p470 = scmp.eq.s32.totalorder %s46, 0
      %p471 = por %p469, %p470
      %p472 = scmp.ne.s32.totalorder %s460, %s461
      %p473 = scmp.eq.s32.totalorder %s47, 1
      %p474 = por %p472, %p473
      %p476 = scmp.ne.s32.totalorder %s461, %s475
      %p477 = scmp.eq.s32.totalorder %s47, 0
      %p478 = por %p476, %p477
      %s479 = ssub.s32 %s41, %s48
      %p480 = scmp.eq.s32.totalorder %s479, 0
      %s482 = sadd.s32 %s481, 1
      %s483 = scalar_select %p480, %s481, %s482
      %p486 = pneg %p480
      %p487 = scmp.eq.s32.totalorder %s41, 1
      %p488 = por %p486, %p487
      %p489 = scmp.ne.s32.totalorder %s481, %s484
      %p490 = scmp.eq.s32.totalorder %s41, 0
      %p491 = por %p489, %p490
      %p492 = scmp.ne.s32.totalorder %s481, %s484
      %p493 = scmp.eq.s32.totalorder %s46, 1
      %p494 = por %p492, %p493
      %p495 = scmp.ne.s32.totalorder %s484, %s485
      %p496 = scmp.eq.s32.totalorder %s46, 0
      %p497 = por %p495, %p496
      %p498 = scmp.ne.s32.totalorder %s484, %s485
      %p499 = scmp.eq.s32.totalorder %s47, 1
      %p500 = por %p498, %p499
      %p502 = scmp.ne.s32.totalorder %s485, %s501
      %p503 = scmp.eq.s32.totalorder %s47, 0
      %p504 = por %p502, %p503
      %p505 = scmp.le.s32.totalorder 1, %s41
      %p506 = scmp.lt.s32.totalorder %s41, 3
      %p507 = pnand %p505, %p506
      %p508 = pneg %p507
      // Predicated region
      $region9: #{tpu_custom_call.1} parent=5 // pred_check
        _
      $region10: #{tpu_custom_call.1} parent=5 // pred_check_branch
        %510 = sbr.rel (%p507) target = $region12
      $region11: #{tpu_custom_call.1} parent=5 // pred_region
        %s511 = ssub.s32 %s41, 1
        // Predicated region
        $region13: #{tpu_custom_call.1} parent=11 // pred_check
          %p512 = pneg %p114
        $region14: #{tpu_custom_call.1} parent=11 // pred_check_branch
          %514 = sbr.rel (%p512) target = $region16
        $region15: #{tpu_custom_call.1} parent=11 // pred_region
          %s516 = ssub.s32 16, 16
          %517 = vsyncadd [#allocation6], %s516
          %s519 = sshll.u32 [#allocation7], 4
          %s520 = int_to_ptr.vmem [resolvable:$true] %s519
          %522 = dma.hbm_to_vmem [thread:$0]  %s2, 16, %s520, [#allocation6]
        $region16: #{tpu_custom_call.1} parent=11 // pred_fallthru
          _
        // Predicated region
        $region17: #{tpu_custom_call.1} parent=11 // pred_check
          %p523 = pneg %p135
        $region18: #{tpu_custom_call.1} parent=11 // pred_check_branch
          %525 = sbr.rel (%p523) target = $region20
        $region19: #{tpu_custom_call.1} parent=11 // pred_region
          %s527 = ssub.s32 16, 16
          %528 = vsyncadd [#allocation9], %s527
          %s530 = sshll.u32 [#allocation8], 4
          %s531 = int_to_ptr.vmem [resolvable:$true] %s530
          %533 = dma.hbm_to_vmem [thread:$0]  %s3, 16, %s531, [#allocation9]
        $region20: #{tpu_custom_call.1} parent=11 // pred_fallthru
          _
        // Predicated region
        $region21: #{tpu_custom_call.1} parent=11 // pred_check
          %p534 = pneg %p156
        $region22: #{tpu_custom_call.1} parent=11 // pred_check_branch
          %536 = sbr.rel (%p534) target = $region24
        $region23: #{tpu_custom_call.1} parent=11 // pred_region
          _
        $region24: #{tpu_custom_call.1} parent=11 // pred_fallthru
          _
        // Predicated region
        $region25: #{tpu_custom_call.1} parent=11 // pred_check
          %p537 = pneg %p177
        $region26: #{tpu_custom_call.1} parent=11 // pred_check_branch
          %539 = sbr.rel (%p537) target = $region28
        $region27: #{tpu_custom_call.1} parent=11 // pred_region
          %s541 = ssub.s32 32, 32
          %542 = vsyncadd [#allocation9], %s541
          %s543 = sshll.u32 [#allocation10], 4
          %s544 = int_to_ptr.vmem [resolvable:$true] %s543
          %549 = dma.hbm_to_vmem [thread:$0]  %s5, 32, %s544, [#allocation9], 16, 16, 1
        $region28: #{tpu_custom_call.1} parent=11 // pred_fallthru
          _
        // Predicated region
        $region29: #{tpu_custom_call.1} parent=11 // pred_check
          %p550 = pneg %p198
        $region30: #{tpu_custom_call.1} parent=11 // pred_check_branch
          %552 = sbr.rel (%p550) target = $region32
        $region31: #{tpu_custom_call.1} parent=11 // pred_region
          _
        $region32: #{tpu_custom_call.1} parent=11 // pred_fallthru
          _
        // Predicated region
        $region33: #{tpu_custom_call.1} parent=11 // pred_check
          %p553 = pneg %p219
        $region34: #{tpu_custom_call.1} parent=11 // pred_check_branch
          %555 = sbr.rel (%p553) target = $region36
        $region35: #{tpu_custom_call.1} parent=11 // pred_region
          %s557 = ssub.s32 32, 32
          %558 = vsyncadd [#allocation12], %s557
          %s559 = sshll.u32 [#allocation11], 4
          %s560 = int_to_ptr.vmem [resolvable:$true] %s559
          %565 = dma.hbm_to_vmem [thread:$0]  %s7, 32, %s560, [#allocation12], 16, 16, 1
        $region36: #{tpu_custom_call.1} parent=11 // pred_fallthru
          _
        // Predicated region
        $region37: #{tpu_custom_call.1} parent=11 // pred_check
          %p566 = pneg %p240
        $region38: #{tpu_custom_call.1} parent=11 // pred_check_branch
          %568 = sbr.rel (%p566) target = $region40
        $region39: #{tpu_custom_call.1} parent=11 // pred_region
          %s570 = ssub.s32 32, 32
          %571 = vsyncadd [#allocation12], %s570
          %s572 = sshll.u32 [#allocation13], 4
          %s573 = int_to_ptr.vmem [resolvable:$true] %s572
          %578 = dma.hbm_to_vmem [thread:$0]  %s8, 32, %s573, [#allocation12], 16, 16, 1
        $region40: #{tpu_custom_call.1} parent=11 // pred_fallthru
          _
        // Predicated region
        $region41: #{tpu_custom_call.1} parent=11 // pred_check
          %p579 = pneg %p261
        $region42: #{tpu_custom_call.1} parent=11 // pred_check_branch
          %581 = sbr.rel (%p579) target = $region44
        $region43: #{tpu_custom_call.1} parent=11 // pred_region
          %s583 = ssub.s32 32, 32
          %584 = vsyncadd [#allocation15], %s583
          %s585 = sshll.u32 [#allocation14], 4
          %s586 = int_to_ptr.vmem [resolvable:$true] %s585
          %591 = dma.hbm_to_vmem [thread:$0]  %s9, 32, %s586, [#allocation15], 16, 16, 1
        $region44: #{tpu_custom_call.1} parent=11 // pred_fallthru
          _
        // Predicated region
        $region45: #{tpu_custom_call.1} parent=11 // pred_check
          %p592 = pneg %p282
        $region46: #{tpu_custom_call.1} parent=11 // pred_check_branch
          %594 = sbr.rel (%p592) target = $region48
        $region47: #{tpu_custom_call.1} parent=11 // pred_region
          _
        $region48: #{tpu_custom_call.1} parent=11 // pred_fallthru
          _
        // Predicated region
        $region49: #{tpu_custom_call.1} parent=11 // pred_check
          %p595 = pneg %p303
        $region50: #{tpu_custom_call.1} parent=11 // pred_check_branch
          %597 = sbr.rel (%p595) target = $region52
        $region51: #{tpu_custom_call.1} parent=11 // pred_region
          %s599 = ssub.s32 32, 32
          %600 = vsyncadd [#allocation15], %s599
          %s601 = sshll.u32 [#allocation16], 4
          %s602 = int_to_ptr.vmem [resolvable:$true] %s601
          %607 = dma.hbm_to_vmem [thread:$0]  %s11, 32, %s602, [#allocation15], 16, 16, 1
        $region52: #{tpu_custom_call.1} parent=11 // pred_fallthru
          _
        // Predicated region
        $region53: #{tpu_custom_call.1} parent=11 // pred_check
          %p608 = pneg %p324
        $region54: #{tpu_custom_call.1} parent=11 // pred_check_branch
          %610 = sbr.rel (%p608) target = $region56
        $region55: #{tpu_custom_call.1} parent=11 // pred_region
          _
        $region56: #{tpu_custom_call.1} parent=11 // pred_fallthru
          _
        // Predicated region
        $region57: #{tpu_custom_call.1} parent=11 // pred_check
          %p611 = pneg %p345
        $region58: #{tpu_custom_call.1} parent=11 // pred_check_branch
          %613 = sbr.rel (%p611) target = $region60
        $region59: #{tpu_custom_call.1} parent=11 // pred_region
          %s615 = ssub.s32 32, 32
          %616 = vsyncadd [#allocation18], %s615
          %s617 = sshll.u32 [#allocation17], 4
          %s618 = int_to_ptr.vmem [resolvable:$true] %s617
          %623 = dma.hbm_to_vmem [thread:$0]  %s13, 32, %s618, [#allocation18], 16, 16, 1
        $region60: #{tpu_custom_call.1} parent=11 // pred_fallthru
          _
        // Predicated region
        $region61: #{tpu_custom_call.1} parent=11 // pred_check
          %p624 = pneg %p366
        $region62: #{tpu_custom_call.1} parent=11 // pred_check_branch
          %626 = sbr.rel (%p624) target = $region64
        $region63: #{tpu_custom_call.1} parent=11 // pred_region
          %s628 = ssub.s32 32, 32
          %629 = vsyncadd [#allocation18], %s628
          %s630 = sshll.u32 [#allocation19], 4
          %s631 = int_to_ptr.vmem [resolvable:$true] %s630
          %636 = dma.hbm_to_vmem [thread:$0]  %s14, 32, %s631, [#allocation18], 16, 16, 1
        $region64: #{tpu_custom_call.1} parent=11 // pred_fallthru
          _
        // Predicated region
        $region65: #{tpu_custom_call.1} parent=11 // pred_check
          %p637 = pneg %p387
        $region66: #{tpu_custom_call.1} parent=11 // pred_check_branch
          %639 = sbr.rel (%p637) target = $region68
        $region67: #{tpu_custom_call.1} parent=11 // pred_region
          %s641 = ssub.s32 32, 32
          %642 = vsyncadd [#allocation21], %s641
          %s643 = sshll.u32 [#allocation20], 4
          %s644 = int_to_ptr.vmem [resolvable:$true] %s643
          %649 = dma.hbm_to_vmem [thread:$0]  %s15, 32, %s644, [#allocation21], 16, 16, 1
        $region68: #{tpu_custom_call.1} parent=11 // pred_fallthru
          _
        // Predicated region
        $region69: #{tpu_custom_call.1} parent=11 // pred_check
          %p650 = pneg %p408
        $region70: #{tpu_custom_call.1} parent=11 // pred_check_branch
          %652 = sbr.rel (%p650) target = $region72
        $region71: #{tpu_custom_call.1} parent=11 // pred_region
          %s654 = ssub.s32 512, 512
          %655 = vsyncadd [#allocation21], %s654
          %s656 = sshll.u32 [#allocation22], 4
          %s657 = int_to_ptr.vmem [resolvable:$true] %s656
          %662 = dma.hbm_to_vmem [thread:$0]  %s16, 512, %s657, [#allocation21], 128, 128, 8
        $region72: #{tpu_custom_call.1} parent=11 // pred_fallthru
          _
        // Predicated region
        $region73: #{tpu_custom_call.1} parent=11 // pred_check
          %p663 = pneg %p429
        $region74: #{tpu_custom_call.1} parent=11 // pred_check_branch
          %665 = sbr.rel (%p663) target = $region76
        $region75: #{tpu_custom_call.1} parent=11 // pred_region
          %s667 = ssub.s32 16, 16
          %668 = vsyncadd [#allocation24], %s667
          %s670 = sshll.u32 [#allocation23], 4
          %s671 = int_to_ptr.vmem [resolvable:$true] %s670
          %673 = dma.hbm_to_vmem [thread:$0]  %s17, 16, %s671, [#allocation24]
        $region76: #{tpu_custom_call.1} parent=11 // pred_fallthru
          _
        // Predicated region
        $region77: #{tpu_custom_call.1} parent=11 // pred_check
          %p674 = pneg %p450
        $region78: #{tpu_custom_call.1} parent=11 // pred_check_branch
          %676 = sbr.rel (%p674) target = $region80
        $region79: #{tpu_custom_call.1} parent=11 // pred_region
          _
        $region80: #{tpu_custom_call.1} parent=11 // pred_fallthru
          _
        // Predicated region
        $region81: #{tpu_custom_call.1} parent=11 // pred_check
          %p677 = pneg %p471
        $region82: #{tpu_custom_call.1} parent=11 // pred_check_branch
          %679 = sbr.rel (%p677) target = $region84
        $region83: #{tpu_custom_call.1} parent=11 // pred_region
          %s681 = ssub.s32 16, 16
          %682 = vsyncadd [#allocation24], %s681
          %s684 = sshll.u32 [#allocation25], 4
          %s685 = int_to_ptr.vmem [resolvable:$true] %s684
          %687 = dma.hbm_to_vmem [thread:$0]  %s19, 16, %s685, [#allocation24]
        $region84: #{tpu_custom_call.1} parent=11 // pred_fallthru
          _
      $region12: #{tpu_custom_call.1} parent=5 // pred_fallthru
        _
      %p688 = scmp.lt.s32.totalorder %s41, 2
      // Predicated region
      $region85: #{tpu_custom_call.1} parent=5 // pred_check
        %p689 = pneg %p688
      $region86: #{tpu_custom_call.1} parent=5 // pred_check_branch
        %691 = sbr.rel (%p689) target = $region88
      $region87: #{tpu_custom_call.1} parent=5 // pred_region
        // Predicated region
        $region89: #{tpu_custom_call.1} parent=87 // pred_check
          %p692 = pneg %p61
        $region90: #{tpu_custom_call.1} parent=87 // pred_check_branch
          %694 = sbr.rel (%p692) target = $region92
        $region91: #{tpu_custom_call.1} parent=87 // pred_region
          %s695 = sand.u32 %s51, 1
          %s696 = scalar_lea.sflag [#allocation3], %s695
          %s697 = sand.u32 %s51, 1
          %s698 = smul.addr %s697, 8
          %s699 = scalar_lea.vmem [#allocation2], %s698
          %s701 = ssub.s32 128, 128
          %702 = vsyncadd %s696, %s701
          %s703 = smul.addr %s41, 128
          %s704 = scalar_lea.hbm %s0, %s703
          %s706 = sshll.u32 %s699, 4
          %s707 = int_to_ptr.vmem [resolvable:$true] %s706
          %709 = dma.hbm_to_vmem [thread:$0]  %s704, 128, %s707, %s696
        $region92: #{tpu_custom_call.1} parent=87 // pred_fallthru
          _
        // Predicated region
        $region93: #{tpu_custom_call.1} parent=87 // pred_check
          %p710 = pneg %p87
        $region94: #{tpu_custom_call.1} parent=87 // pred_check_branch
          %712 = sbr.rel (%p710) target = $region96
        $region95: #{tpu_custom_call.1} parent=87 // pred_region
          %s713 = sand.u32 %s41, 1
          %s714 = scalar_lea.sflag [#allocation6], %s713
          %s715 = sand.u32 %s77, 1
          %s716 = scalar_lea.vmem [#allocation5], %s715
          %s718 = ssub.s32 16, 16
          %719 = vsyncadd %s714, %s718
          %s720 = smul.addr %s41, 16
          %s721 = scalar_lea.hbm %s1, %s720
          %s723 = sshll.u32 %s716, 4
          %s724 = int_to_ptr.vmem [resolvable:$true] %s723
          %726 = dma.hbm_to_vmem [thread:$0]  %s721, 16, %s724, %s714
        $region96: #{tpu_custom_call.1} parent=87 // pred_fallthru
          _
      $region88: #{tpu_custom_call.1} parent=5 // pred_fallthru
        _
      %p727 = scmp.le.s32.totalorder 1, %s41
      %p728 = scmp.lt.s32.totalorder %s41, 3
      %p729 = pnand %p727, %p728
      %p730 = pneg %p729
      // Predicated region
      $region97: #{tpu_custom_call.1} parent=5 // pred_check
        _
      $region98: #{tpu_custom_call.1} parent=5 // pred_check_branch
        %732 = sbr.rel (%p729) target = $region100
      $region99: #{tpu_custom_call.1} parent=5 // pred_region
        %s733 = ssub.s32 %s41, 1
        %s734 = sand.u32 %s54, 1
        %s735 = scalar_lea.sflag [#allocation3], %s734
        %s736 = sand.u32 %s54, 1
        %s737 = smul.addr %s736, 8
        %s738 = scalar_lea.vmem [#allocation2], %s737
        // Predicated region
        $region101: #{tpu_custom_call.1} parent=99 // pred_check
          %p739 = pneg %p67
        $region102: #{tpu_custom_call.1} parent=99 // pred_check_branch
          %741 = sbr.rel (%p739) target = $region104
        $region103: #{tpu_custom_call.1} parent=99 // pred_region
          %742 = dma.done %s735, 128
        $region104: #{tpu_custom_call.1} parent=99 // pred_fallthru
          _
        %s743 = sand.u32 %s46, 1
        %s744 = scalar_lea.sflag [#allocation6], %s743
        %s745 = sand.u32 %s80, 1
        %s746 = scalar_lea.vmem [#allocation5], %s745
        // Predicated region
        $region105: #{tpu_custom_call.1} parent=99 // pred_check
          %p747 = pneg %p93
        $region106: #{tpu_custom_call.1} parent=99 // pred_check_branch
          %749 = sbr.rel (%p747) target = $region108
        $region107: #{tpu_custom_call.1} parent=99 // pred_region
          %750 = dma.done %s744, 16
        $region108: #{tpu_custom_call.1} parent=99 // pred_fallthru
          _
        // Predicated region
        $region109: #{tpu_custom_call.1} parent=99 // pred_check
          %p751 = pneg %p114
        $region110: #{tpu_custom_call.1} parent=99 // pred_check_branch
          %753 = sbr.rel (%p751) target = $region112
        $region111: #{tpu_custom_call.1} parent=99 // pred_region
          %754 = dma.done [#allocation6], 16
        $region112: #{tpu_custom_call.1} parent=99 // pred_fallthru
          _
        // Predicated region
        $region113: #{tpu_custom_call.1} parent=99 // pred_check
          %p755 = pneg %p135
        $region114: #{tpu_custom_call.1} parent=99 // pred_check_branch
          %757 = sbr.rel (%p755) target = $region116
        $region115: #{tpu_custom_call.1} parent=99 // pred_region
          %758 = dma.done [#allocation9], 16
        $region116: #{tpu_custom_call.1} parent=99 // pred_fallthru
          _
        // Predicated region
        $region117: #{tpu_custom_call.1} parent=99 // pred_check
          %p759 = pneg %p177
        $region118: #{tpu_custom_call.1} parent=99 // pred_check_branch
          %761 = sbr.rel (%p759) target = $region120
        $region119: #{tpu_custom_call.1} parent=99 // pred_region
          %762 = dma.done [#allocation9], 32
        $region120: #{tpu_custom_call.1} parent=99 // pred_fallthru
          _
        // Predicated region
        $region121: #{tpu_custom_call.1} parent=99 // pred_check
          %p763 = pneg %p219
        $region122: #{tpu_custom_call.1} parent=99 // pred_check_branch
          %765 = sbr.rel (%p763) target = $region124
        $region123: #{tpu_custom_call.1} parent=99 // pred_region
          %766 = dma.done [#allocation12], 32
        $region124: #{tpu_custom_call.1} parent=99 // pred_fallthru
          _
        // Predicated region
        $region125: #{tpu_custom_call.1} parent=99 // pred_check
          %p767 = pneg %p240
        $region126: #{tpu_custom_call.1} parent=99 // pred_check_branch
          %769 = sbr.rel (%p767) target = $region128
        $region127: #{tpu_custom_call.1} parent=99 // pred_region
          %770 = dma.done [#allocation12], 32
        $region128: #{tpu_custom_call.1} parent=99 // pred_fallthru
          _
        // Predicated region
        $region129: #{tpu_custom_call.1} parent=99 // pred_check
          %p771 = pneg %p261
        $region130: #{tpu_custom_call.1} parent=99 // pred_check_branch
          %773 = sbr.rel (%p771) target = $region132
        $region131: #{tpu_custom_call.1} parent=99 // pred_region
          %774 = dma.done [#allocation15], 32
        $region132: #{tpu_custom_call.1} parent=99 // pred_fallthru
          _
        // Predicated region
        $region133: #{tpu_custom_call.1} parent=99 // pred_check
          %p775 = pneg %p303
        $region134: #{tpu_custom_call.1} parent=99 // pred_check_branch
          %777 = sbr.rel (%p775) target = $region136
        $region135: #{tpu_custom_call.1} parent=99 // pred_region
          %778 = dma.done [#allocation15], 32
        $region136: #{tpu_custom_call.1} parent=99 // pred_fallthru
          _
        // Predicated region
        $region137: #{tpu_custom_call.1} parent=99 // pred_check
          %p779 = pneg %p345
        $region138: #{tpu_custom_call.1} parent=99 // pred_check_branch
          %781 = sbr.rel (%p779) target = $region140
        $region139: #{tpu_custom_call.1} parent=99 // pred_region
          %782 = dma.done [#allocation18], 32
        $region140: #{tpu_custom_call.1} parent=99 // pred_fallthru
          _
        // Predicated region
        $region141: #{tpu_custom_call.1} parent=99 // pred_check
          %p783 = pneg %p366
        $region142: #{tpu_custom_call.1} parent=99 // pred_check_branch
          %785 = sbr.rel (%p783) target = $region144
        $region143: #{tpu_custom_call.1} parent=99 // pred_region
          %786 = dma.done [#allocation18], 32
        $region144: #{tpu_custom_call.1} parent=99 // pred_fallthru
          _
        // Predicated region
        $region145: #{tpu_custom_call.1} parent=99 // pred_check
          %p787 = pneg %p387
        $region146: #{tpu_custom_call.1} parent=99 // pred_check_branch
          %789 = sbr.rel (%p787) target = $region148
        $region147: #{tpu_custom_call.1} parent=99 // pred_region
          %790 = dma.done [#allocation21], 32
        $region148: #{tpu_custom_call.1} parent=99 // pred_fallthru
          _
        // Predicated region
        $region149: #{tpu_custom_call.1} parent=99 // pred_check
          %p791 = pneg %p408
        $region150: #{tpu_custom_call.1} parent=99 // pred_check_branch
          %793 = sbr.rel (%p791) target = $region152
        $region151: #{tpu_custom_call.1} parent=99 // pred_region
          %794 = dma.done [#allocation21], 512
        $region152: #{tpu_custom_call.1} parent=99 // pred_fallthru
          _
        // Predicated region
        $region153: #{tpu_custom_call.1} parent=99 // pred_check
          %p795 = pneg %p429
        $region154: #{tpu_custom_call.1} parent=99 // pred_check_branch
          %797 = sbr.rel (%p795) target = $region156
        $region155: #{tpu_custom_call.1} parent=99 // pred_region
          %798 = dma.done [#allocation24], 16
        $region156: #{tpu_custom_call.1} parent=99 // pred_fallthru
          _
        // Predicated region
        $region157: #{tpu_custom_call.1} parent=99 // pred_check
          %p799 = pneg %p471
        $region158: #{tpu_custom_call.1} parent=99 // pred_check_branch
          %801 = sbr.rel (%p799) target = $region160
        $region159: #{tpu_custom_call.1} parent=99 // pred_region
          %802 = dma.done [#allocation24], 16
        $region160: #{tpu_custom_call.1} parent=99 // pred_fallthru
          _
        %s803 = sand.u32 %s54, 1
        %s804 = scalar_lea.sflag [#allocation3], %s803
        %s805 = sand.u32 %s54, 1
        %s806 = smul.addr %s805, 8
        %s807 = scalar_lea.vmem [#allocation2], %s806
        %p808 = pneg %p67
        %p809 = pneg %p64
        %s810 = sand.u32 %s46, 1
        %s811 = scalar_lea.sflag [#allocation6], %s810
        %s812 = sand.u32 %s80, 1
        %s813 = scalar_lea.vmem [#allocation5], %s812
        %p814 = pneg %p93
        %p815 = pneg %p90
        %p816 = pneg %p114
        %p817 = pneg %p111
        %p818 = pneg %p135
        %p819 = pneg %p132
        %p820 = pneg %p156
        %p821 = pneg %p153
        %p822 = pneg %p177
        %p823 = pneg %p174
        %p824 = pneg %p198
        %p825 = pneg %p195
        %p826 = pneg %p219
        %p827 = pneg %p216
        %p828 = pneg %p240
        %p829 = pneg %p237
        %p830 = pneg %p261
        %p831 = pneg %p258
        %p832 = pneg %p282
        %p833 = pneg %p279
        %p834 = pneg %p303
        %p835 = pneg %p300
        %p836 = pneg %p324
        %p837 = pneg %p321
        %p838 = pneg %p345
        %p839 = pneg %p342
        %p840 = pneg %p366
        %p841 = pneg %p363
        %p842 = pneg %p387
        %p843 = pneg %p384
        %p844 = pneg %p408
        %p845 = pneg %p405
        %p846 = pneg %p429
        %p847 = pneg %p426
        %p848 = pneg %p450
        %p849 = pneg %p447
        %p850 = pneg %p471
        %p851 = pneg %p468
        %p852 = pneg %p497
        %p853 = pneg %p494
        %s854 = sand.u32 %s484, 1
        %s855 = scalar_lea.sflag [#allocation4], %s854
        %s856 = sand.u32 %s484, 1
        %s857 = scalar_lea.vmem [#allocation26], %s856
        %v859 = vld [vmem:[%s738] sm:$0xff]
        %v860 = vld [vmem:[#allocation7] sm:$0x1]
        %v861 = vld [vmem:[#allocation8] sm:$0x1]
        %vm862 = vcmask 261120
        %v863 = vsel %vm862, %v859, 0.0
        %864 = vadd.xlane.f32.xlu0 %v863
        %v865 = vpop.xlane.xlu0 %864
        %v866 = vrcp.pop 32.0
        %v867 = vmul.f32 %v865, %v866
        %v868 = vsub.f32 %v859, %v867
        %v869 = vmul.f32 %v868, %v868
        %v870 = vsel %vm862, %v869, 0.0
        %871 = vadd.xlane.f32.xlu0 %v870
        %v872 = vpop.xlane.xlu0 %871
        %v873 = vmul.f32 %v872, %v866
        %v874 = vadd.f32 %v873, 1e-12
        %v875 = vrsqrt.pop %v874
        %v876 = vmul.f32 %v868, %v875
        %v878 = vlaneseq
        %v879 = vshrl.u32 %v878, 7
        %v880 = vsub.s32 0, %v879
        %v881 = vrot.slane %v860, %v880
        %v883 = vmul.f32 %v876, %v881
        %v885 = vlaneseq
        %v886 = vshrl.u32 %v885, 7
        %v887 = vsub.s32 0, %v886
        %v888 = vrot.slane %v861, %v887
        %v890 = vadd.f32 %v883, %v888
        %v891 = vld [vmem:[%s746] sm:$0x1]
        %v893 = vlaneseq
        %v894 = vshrl.u32 %v893, 7
        %v895 = vsub.s32 0, %v894
        %v896 = vrot.slane %v891, %v895
        %v898 = vpack.c.bf16 %v890, %v890
        %v899 = vld [vmem:[%s4] sm:$0xff]
        %v900 = vld [vmem:[%s4 + $0x8] sm:$0xff]
        %v901 = vld [vmem:[%s4 + $0x10] sm:$0xff]
        %v902 = vld [vmem:[%s4 + $0x18] sm:$0xff]
        %v903 = vpack.c.bf16 %v900, %v899
        %v904 = vpack.c.bf16 %v902, %v901
        %v905 = vld [vmem:[#allocation10] sm:$0x1]
        %v907 = vlaneseq
        %v908 = vshrl.u32 %v907, 7
        %v909 = vsub.s32 0, %v908
        %v910 = vrot.slane %v905, %v909
        %v913 = vsel %vm862, %v898, 0
        %915 = vmatprep.subr.bf16.mxu0 0
        %916 = vmatpush1.bf16.msra.mxu0 0
        %917 = vmatprep.subr.bf16.mxu0 0
        %918 = vmatpush1.bf16.msra.mxu0 0
        %919 = vmatprep.subr.bf16.mxu0 0
        %920 = vmatpush1.bf16.msra.mxu0 0
        %921 = vmatprep.subr.bf16.mxu0 0
        %922 = vmatpush1.bf16.msra.mxu0 0
        %923 = vmatprep.subr.bf16.mxu0 0
        %924 = vmatpush1.bf16.msra.mxu0 0
        %925 = vmatprep.subr.bf16.mxu0 0
        %926 = vmatpush1.bf16.msra.mxu0 0
        %927 = vmatprep.subr.bf16.mxu0 0
        %928 = vmatpush1.bf16.msra.mxu0 %v904
        %929 = vmatprep.subr.bf16.mxu0 0
        %930 = vmatpush1.bf16.msra.mxu0 %v903
        %931 = vmatprep.subr.bf16.mxu0 0
        %932 = vmatpush2.bf16.msra.mxu0 0
        %933 = vmatprep.subr.bf16.mxu0 0
        %934 = vmatpush2.bf16.msra.mxu0 0
        %935 = vmatprep.subr.bf16.mxu0 0
        %936 = vmatpush2.bf16.msra.mxu0 0
        %937 = vmatprep.subr.bf16.mxu0 0
        %938 = vmatpush2.bf16.msra.mxu0 0
        %939 = vmatprep.subr.bf16.mxu0 0
        %940 = vmatpush2.bf16.msra.mxu0 0
        %941 = vmatprep.subr.bf16.mxu0 0
        %942 = vmatpush2.bf16.msra.mxu0 0
        %943 = vmatprep.subr.bf16.mxu0 0
        %944 = vmatpush2.bf16.msra.mxu0 0
        %945 = vmatprep.subr.bf16.mxu0 0
        %946 = vmatpush2.bf16.msra.mxu0 0
        %947 = vmatprep.mubr.bf16.mxu0 0
        %948 = vmatmul.mubr.bf16.gmra.mxu0 %v913
        %v949 = vpop.f32.mrf.mxu0
        %v950 = vadd.f32 %v910, %v949
        %v951 = vpop.f32.mrf.mxu0
        %v952 = vpop.f32.mrf.mxu0
        %v953 = vpop.f32.mrf.mxu0
        %954 = vdwg.mxu0
        %956 = vrot.lane.b32.xlu0 %v950, 120
        %v957 = vpop.permute.xlu0 %956
        %959 = vrot.lane.b32.xlu0 %v950, 112
        %v960 = vpop.permute.xlu0 %959
        %962 = vrot.lane.b32.xlu0 %v950, 104
        %v963 = vpop.permute.xlu0 %962
        %v965 = vpack.c.bf16 %v950, %v950
        %v966 = vpack.c.bf16 %v957, %v957
        %v967 = vpack.c.bf16 %v960, %v960
        %v968 = vpack.c.bf16 %v963, %v963
        %970 = vrot.lane.b32.xlu0 %v965, 96
        %v971 = vpop.permute.xlu0 %970
        %vm972 = vcmask 64512
        %v974 = vsel %vm972, %v965, 0
        %v977 = vsel %vm972, %v971, 0
        %979 = vmatprep.subr.bf16.mxu0 0
        %980 = vmatpush1.bf16.xpose.msra.mxu0 0
        %981 = vmatprep.subr.bf16.mxu0 0
        %982 = vmatpush1.bf16.xpose.msra.mxu0 0
        %983 = vmatprep.subr.bf16.mxu0 0
        %984 = vmatpush1.bf16.xpose.msra.mxu0 0
        %985 = vmatprep.subr.bf16.mxu0 0
        %986 = vmatpush1.bf16.xpose.msra.mxu0 0
        %987 = vmatprep.subr.bf16.mxu0 0
        %988 = vmatpush1.bf16.xpose.msra.mxu0 0
        %989 = vmatprep.subr.bf16.mxu0 0
        %990 = vmatpush1.bf16.xpose.msra.mxu0 0
        %991 = vmatprep.subr.bf16.mxu0 0
        %992 = vmatpush1.bf16.xpose.msra.mxu0 0
        %993 = vmatprep.subr.bf16.mxu0 0
        %994 = vmatpush1.bf16.xpose.msra.mxu0 %v977
        %995 = vmatprep.subr.bf16.mxu0 0
        %996 = vmatpush2.bf16.xpose.msra.mxu0 0
        %997 = vmatprep.subr.bf16.mxu0 0
        %998 = vmatpush2.bf16.xpose.msra.mxu0 0
        %999 = vmatprep.subr.bf16.mxu0 0
        %1000 = vmatpush2.bf16.xpose.msra.mxu0 0
        %1001 = vmatprep.subr.bf16.mxu0 0
        %1002 = vmatpush2.bf16.xpose.msra.mxu0 0
        %1003 = vmatprep.subr.bf16.mxu0 0
        %1004 = vmatpush2.bf16.xpose.msra.mxu0 0
        %1005 = vmatprep.subr.bf16.mxu0 0
        %1006 = vmatpush2.bf16.xpose.msra.mxu0 0
        %1007 = vmatprep.subr.bf16.mxu0 0
        %1008 = vmatpush2.bf16.xpose.msra.mxu0 0
        %1009 = vmatprep.subr.bf16.mxu0 0
        %1010 = vmatpush2.bf16.xpose.msra.mxu0 0
        %1011 = vmatprep.mubr.bf16.mxu0 0
        %1012 = vmatmul.mubr.bf16.gmra.mxu0 %v974
        %v1013 = vpop.f32.mrf.mxu0
        %v1014 = vadd.f32 %v896, %v1013
        %v1015 = vpop.f32.mrf.mxu0
        %v1016 = vpop.f32.mrf.mxu0
        %v1017 = vpop.f32.mrf.mxu0
        %1018 = vdwg.mxu0
        %1020 = vrot.lane.b32.xlu0 %v966, 96
        %v1021 = vpop.permute.xlu0 %1020
        %v1023 = vsel %vm972, %v966, 0
        %v1026 = vsel %vm972, %v1021, 0
        %1028 = vmatprep.subr.bf16.mxu0 0
        %1029 = vmatpush1.bf16.xpose.msra.mxu0 0
        %1030 = vmatprep.subr.bf16.mxu0 0
        %1031 = vmatpush1.bf16.xpose.msra.mxu0 0
        %1032 = vmatprep.subr.bf16.mxu0 0
        %1033 = vmatpush1.bf16.xpose.msra.mxu0 0
        %1034 = vmatprep.subr.bf16.mxu0 0
        %1035 = vmatpush1.bf16.xpose.msra.mxu0 0
        %1036 = vmatprep.subr.bf16.mxu0 0
        %1037 = vmatpush1.bf16.xpose.msra.mxu0 0
        %1038 = vmatprep.subr.bf16.mxu0 0
        %1039 = vmatpush1.bf16.xpose.msra.mxu0 0
        %1040 = vmatprep.subr.bf16.mxu0 0
        %1041 = vmatpush1.bf16.xpose.msra.mxu0 0
        %1042 = vmatprep.subr.bf16.mxu0 0
        %1043 = vmatpush1.bf16.xpose.msra.mxu0 %v1026
        %1044 = vmatprep.subr.bf16.mxu0 0
        %1045 = vmatpush2.bf16.xpose.msra.mxu0 0
        %1046 = vmatprep.subr.bf16.mxu0 0
        %1047 = vmatpush2.bf16.xpose.msra.mxu0 0
        %1048 = vmatprep.subr.bf16.mxu0 0
        %1049 = vmatpush2.bf16.xpose.msra.mxu0 0
        %1050 = vmatprep.subr.bf16.mxu0 0
        %1051 = vmatpush2.bf16.xpose.msra.mxu0 0
        %1052 = vmatprep.subr.bf16.mxu0 0
        %1053 = vmatpush2.bf16.xpose.msra.mxu0 0
        %1054 = vmatprep.subr.bf16.mxu0 0
        %1055 = vmatpush2.bf16.xpose.msra.mxu0 0
        %1056 = vmatprep.subr.bf16.mxu0 0
        %1057 = vmatpush2.bf16.xpose.msra.mxu0 0
        %1058 = vmatprep.subr.bf16.mxu0 0
        %1059 = vmatpush2.bf16.xpose.msra.mxu0 0
        %1060 = vmatprep.mubr.bf16.mxu0 0
        %1061 = vmatmul.mubr.bf16.gmra.mxu0 %v1023
        %v1062 = vpop.f32.mrf.mxu0
        %v1063 = vadd.f32 %v896, %v1062
        %v1064 = vpop.f32.mrf.mxu0
        %v1065 = vpop.f32.mrf.mxu0
        %v1066 = vpop.f32.mrf.mxu0
        %1067 = vdwg.mxu0
        %1069 = vrot.lane.b32.xlu0 %v967, 96
        %v1070 = vpop.permute.xlu0 %1069
        %v1072 = vsel %vm972, %v967, 0
        %v1075 = vsel %vm972, %v1070, 0
        %1077 = vmatprep.subr.bf16.mxu0 0
        %1078 = vmatpush1.bf16.xpose.msra.mxu0 0
        %1079 = vmatprep.subr.bf16.mxu0 0
        %1080 = vmatpush1.bf16.xpose.msra.mxu0 0
        %1081 = vmatprep.subr.bf16.mxu0 0
        %1082 = vmatpush1.bf16.xpose.msra.mxu0 0
        %1083 = vmatprep.subr.bf16.mxu0 0
        %1084 = vmatpush1.bf16.xpose.msra.mxu0 0
        %1085 = vmatprep.subr.bf16.mxu0 0
        %1086 = vmatpush1.bf16.xpose.msra.mxu0 0
        %1087 = vmatprep.subr.bf16.mxu0 0
        %1088 = vmatpush1.bf16.xpose.msra.mxu0 0
        %1089 = vmatprep.subr.bf16.mxu0 0
        %1090 = vmatpush1.bf16.xpose.msra.mxu0 0
        %1091 = vmatprep.subr.bf16.mxu0 0
        %1092 = vmatpush1.bf16.xpose.msra.mxu0 %v1075
        %1093 = vmatprep.subr.bf16.mxu0 0
        %1094 = vmatpush2.bf16.xpose.msra.mxu0 0
        %1095 = vmatprep.subr.bf16.mxu0 0
        %1096 = vmatpush2.bf16.xpose.msra.mxu0 0
        %1097 = vmatprep.subr.bf16.mxu0 0
        %1098 = vmatpush2.bf16.xpose.msra.mxu0 0
        %1099 = vmatprep.subr.bf16.mxu0 0
        %1100 = vmatpush2.bf16.xpose.msra.mxu0 0
        %1101 = vmatprep.subr.bf16.mxu0 0
        %1102 = vmatpush2.bf16.xpose.msra.mxu0 0
        %1103 = vmatprep.subr.bf16.mxu0 0
        %1104 = vmatpush2.bf16.xpose.msra.mxu0 0
        %1105 = vmatprep.subr.bf16.mxu0 0
        %1106 = vmatpush2.bf16.xpose.msra.mxu0 0
        %1107 = vmatprep.subr.bf16.mxu0 0
        %1108 = vmatpush2.bf16.xpose.msra.mxu0 0
        %1109 = vmatprep.mubr.bf16.mxu0 0
        %1110 = vmatmul.mubr.bf16.gmra.mxu0 %v1072
        %v1111 = vpop.f32.mrf.mxu0
        %v1112 = vadd.f32 %v896, %v1111
        %v1113 = vpop.f32.mrf.mxu0
        %v1114 = vpop.f32.mrf.mxu0
        %v1115 = vpop.f32.mrf.mxu0
        %1116 = vdwg.mxu0
        %1118 = vrot.lane.b32.xlu0 %v968, 96
        %v1119 = vpop.permute.xlu0 %1118
        %v1121 = vsel %vm972, %v968, 0
        %v1124 = vsel %vm972, %v1119, 0
        %1126 = vmatprep.subr.bf16.mxu0 0
        %1127 = vmatpush1.bf16.xpose.msra.mxu0 0
        %1128 = vmatprep.subr.bf16.mxu0 0
        %1129 = vmatpush1.bf16.xpose.msra.mxu0 0
        %1130 = vmatprep.subr.bf16.mxu0 0
        %1131 = vmatpush1.bf16.xpose.msra.mxu0 0
        %1132 = vmatprep.subr.bf16.mxu0 0
        %1133 = vmatpush1.bf16.xpose.msra.mxu0 0
        %1134 = vmatprep.subr.bf16.mxu0 0
        %1135 = vmatpush1.bf16.xpose.msra.mxu0 0
        %1136 = vmatprep.subr.bf16.mxu0 0
        %1137 = vmatpush1.bf16.xpose.msra.mxu0 0
        %1138 = vmatprep.subr.bf16.mxu0 0
        %1139 = vmatpush1.bf16.xpose.msra.mxu0 0
        %1140 = vmatprep.subr.bf16.mxu0 0
        %1141 = vmatpush1.bf16.xpose.msra.mxu0 %v1124
        %1142 = vmatprep.subr.bf16.mxu0 0
        %1143 = vmatpush2.bf16.xpose.msra.mxu0 0
        %1144 = vmatprep.subr.bf16.mxu0 0
        %1145 = vmatpush2.bf16.xpose.msra.mxu0 0
        %1146 = vmatprep.subr.bf16.mxu0 0
        %1147 = vmatpush2.bf16.xpose.msra.mxu0 0
        %1148 = vmatprep.subr.bf16.mxu0 0
        %1149 = vmatpush2.bf16.xpose.msra.mxu0 0
        %1150 = vmatprep.subr.bf16.mxu0 0
        %1151 = vmatpush2.bf16.xpose.msra.mxu0 0
        %1152 = vmatprep.subr.bf16.mxu0 0
        %1153 = vmatpush2.bf16.xpose.msra.mxu0 0
        %1154 = vmatprep.subr.bf16.mxu0 0
        %1155 = vmatpush2.bf16.xpose.msra.mxu0 0
        %1156 = vmatprep.subr.bf16.mxu0 0
        %1157 = vmatpush2.bf16.xpose.msra.mxu0 0
        %1158 = vmatprep.mubr.bf16.mxu0 0
        %1159 = vmatmul.mubr.bf16.gmra.mxu0 %v1121
        %v1160 = vpop.f32.mrf.mxu0
        %v1161 = vadd.f32 %v896, %v1160
        %v1162 = vpop.f32.mrf.mxu0
        %v1163 = vpop.f32.mrf.mxu0
        %v1164 = vpop.f32.mrf.mxu0
        %1165 = vdwg.mxu0
        %v1166 = vsel %vm972, %v1014, -inf
        %1167 = vmax.xlane.f32.xlu0 %v1166
        %v1168 = vpop.xlane.xlu0 %1167
        %v1169 = vsel %vm972, %v1063, -inf
        %1170 = vmax.xlane.f32.xlu0 %v1169
        %v1171 = vpop.xlane.xlu0 %1170
        %v1172 = vsel %vm972, %v1112, -inf
        %1173 = vmax.xlane.f32.xlu0 %v1172
        %v1174 = vpop.xlane.xlu0 %1173
        %v1175 = vsel %vm972, %v1161, -inf
        %1176 = vmax.xlane.f32.xlu0 %v1175
        %v1177 = vpop.xlane.xlu0 %1176
        %v1178 = vsub.f32 %v1014, %v1168
        %v1179 = vsub.f32 %v1063, %v1171
        %v1180 = vsub.f32 %v1112, %v1174
        %v1181 = vsub.f32 %v1161, %v1177
        %v1182 = vmul.f32 %v1178, 1.442695
        %v1183 = vpow.pop %v1182
        %v1184 = vmul.f32 %v1179, 1.442695
        %v1185 = vpow.pop %v1184
        %v1186 = vmul.f32 %v1180, 1.442695
        %v1187 = vpow.pop %v1186
        %v1188 = vmul.f32 %v1181, 1.442695
        %v1189 = vpow.pop %v1188
        %v1190 = vsel %vm972, %v1183, 0.0
        %1191 = vadd.xlane.f32.xlu0 %v1190
        %v1192 = vpop.xlane.xlu0 %1191
        %v1193 = vsel %vm972, %v1185, 0.0
        %1194 = vadd.xlane.f32.xlu0 %v1193
        %v1195 = vpop.xlane.xlu0 %1194
        %v1196 = vsel %vm972, %v1187, 0.0
        %1197 = vadd.xlane.f32.xlu0 %v1196
        %v1198 = vpop.xlane.xlu0 %1197
        %v1199 = vsel %vm972, %v1189, 0.0
        %1200 = vadd.xlane.f32.xlu0 %v1199
        %v1201 = vpop.xlane.xlu0 %1200
        %v1202 = vrcp.pop %v1192
        %v1203 = vrcp.pop %v1195
        %v1204 = vrcp.pop %v1198
        %v1205 = vrcp.pop %v1201
        %v1206 = vmul.f32 %v1183, %v1202
        %v1207 = vmul.f32 %v1185, %v1203
        %v1208 = vmul.f32 %v1187, %v1204
        %v1209 = vmul.f32 %v1189, %v1205
        %v1210 = vpack.c.bf16 %v1206, %v1206
        %v1211 = vpack.c.bf16 %v1207, %v1207
        %v1212 = vpack.c.bf16 %v1208, %v1208
        %v1213 = vpack.c.bf16 %v1209, %v1209
        %1214 = vrot.lane.b32.xlu0 %v965, 64
        %v1215 = vpop.permute.xlu0 %1214
        %v1217 = vsel %vm972, %v1210, 0
        %vm1219 = vcmask 1043456
        %v1221 = vsel %vm1219, %v1215, 0
        %1223 = vmatprep.subr.bf16.mxu0 0
        %1224 = vmatpush1.bf16.msra.mxu0 0
        %1225 = vmatprep.subr.bf16.mxu0 0
        %1226 = vmatpush1.bf16.msra.mxu0 0
        %1227 = vmatprep.subr.bf16.mxu0 0
        %1228 = vmatpush1.bf16.msra.mxu0 0
        %1229 = vmatprep.subr.bf16.mxu0 0
        %1230 = vmatpush1.bf16.msra.mxu0 0
        %1231 = vmatprep.subr.bf16.mxu0 0
        %1232 = vmatpush1.bf16.msra.mxu0 0
        %1233 = vmatprep.subr.bf16.mxu0 0
        %1234 = vmatpush1.bf16.msra.mxu0 0
        %1235 = vmatprep.subr.bf16.mxu0 0
        %1236 = vmatpush1.bf16.msra.mxu0 0
        %1237 = vmatprep.subr.bf16.mxu0 0
        %1238 = vmatpush1.bf16.msra.mxu0 %v1221
        %1239 = vmatprep.subr.bf16.mxu0 0
        %1240 = vmatpush2.bf16.msra.mxu0 0
        %1241 = vmatprep.subr.bf16.mxu0 0
        %1242 = vmatpush2.bf16.msra.mxu0 0
        %1243 = vmatprep.subr.bf16.mxu0 0
        %1244 = vmatpush2.bf16.msra.mxu0 0
        %1245 = vmatprep.subr.bf16.mxu0 0
        %1246 = vmatpush2.bf16.msra.mxu0 0
        %1247 = vmatprep.subr.bf16.mxu0 0
        %1248 = vmatpush2.bf16.msra.mxu0 0
        %1249 = vmatprep.subr.bf16.mxu0 0
        %1250 = vmatpush2.bf16.msra.mxu0 0
        %1251 = vmatprep.subr.bf16.mxu0 0
        %1252 = vmatpush2.bf16.msra.mxu0 0
        %1253 = vmatprep.subr.bf16.mxu0 0
        %1254 = vmatpush2.bf16.msra.mxu0 0
        %1255 = vmatprep.mubr.bf16.mxu0 0
        %1256 = vmatmul.mubr.bf16.gmra.mxu0 %v1217
        %v1257 = vpop.f32.mrf.mxu0
        %v1258 = vadd.f32 0.0, %v1257
        %v1259 = vpop.f32.mrf.mxu0
        %v1260 = vpop.f32.mrf.mxu0
        %v1261 = vpop.f32.mrf.mxu0
        %1262 = vdwg.mxu0
        %1263 = vrot.lane.b32.xlu0 %v966, 64
        %v1264 = vpop.permute.xlu0 %1263
        %v1266 = vsel %vm972, %v1211, 0
        %v1269 = vsel %vm1219, %v1264, 0
        %1271 = vmatprep.subr.bf16.mxu0 0
        %1272 = vmatpush1.bf16.msra.mxu0 0
        %1273 = vmatprep.subr.bf16.mxu0 0
        %1274 = vmatpush1.bf16.msra.mxu0 0
        %1275 = vmatprep.subr.bf16.mxu0 0
        %1276 = vmatpush1.bf16.msra.mxu0 0
        %1277 = vmatprep.subr.bf16.mxu0 0
        %1278 = vmatpush1.bf16.msra.mxu0 0
        %1279 = vmatprep.subr.bf16.mxu0 0
        %1280 = vmatpush1.bf16.msra.mxu0 0
        %1281 = vmatprep.subr.bf16.mxu0 0
        %1282 = vmatpush1.bf16.msra.mxu0 0
        %1283 = vmatprep.subr.bf16.mxu0 0
        %1284 = vmatpush1.bf16.msra.mxu0 0
        %1285 = vmatprep.subr.bf16.mxu0 0
        %1286 = vmatpush1.bf16.msra.mxu0 %v1269
        %1287 = vmatprep.subr.bf16.mxu0 0
        %1288 = vmatpush2.bf16.msra.mxu0 0
        %1289 = vmatprep.subr.bf16.mxu0 0
        %1290 = vmatpush2.bf16.msra.mxu0 0
        %1291 = vmatprep.subr.bf16.mxu0 0
        %1292 = vmatpush2.bf16.msra.mxu0 0
        %1293 = vmatprep.subr.bf16.mxu0 0
        %1294 = vmatpush2.bf16.msra.mxu0 0
        %1295 = vmatprep.subr.bf16.mxu0 0
        %1296 = vmatpush2.bf16.msra.mxu0 0
        %1297 = vmatprep.subr.bf16.mxu0 0
        %1298 = vmatpush2.bf16.msra.mxu0 0
        %1299 = vmatprep.subr.bf16.mxu0 0
        %1300 = vmatpush2.bf16.msra.mxu0 0
        %1301 = vmatprep.subr.bf16.mxu0 0
        %1302 = vmatpush2.bf16.msra.mxu0 0
        %1303 = vmatprep.mubr.bf16.mxu0 0
        %1304 = vmatmul.mubr.bf16.gmra.mxu0 %v1266
        %v1305 = vpop.f32.mrf.mxu0
        %v1306 = vadd.f32 0.0, %v1305
        %v1307 = vpop.f32.mrf.mxu0
        %v1308 = vpop.f32.mrf.mxu0
        %v1309 = vpop.f32.mrf.mxu0
        %1310 = vdwg.mxu0
        %1311 = vrot.lane.b32.xlu0 %v967, 64
        %v1312 = vpop.permute.xlu0 %1311
        %v1314 = vsel %vm972, %v1212, 0
        %v1317 = vsel %vm1219, %v1312, 0
        %1319 = vmatprep.subr.bf16.mxu0 0
        %1320 = vmatpush1.bf16.msra.mxu0 0
        %1321 = vmatprep.subr.bf16.mxu0 0
        %1322 = vmatpush1.bf16.msra.mxu0 0
        %1323 = vmatprep.subr.bf16.mxu0 0
        %1324 = vmatpush1.bf16.msra.mxu0 0
        %1325 = vmatprep.subr.bf16.mxu0 0
        %1326 = vmatpush1.bf16.msra.mxu0 0
        %1327 = vmatprep.subr.bf16.mxu0 0
        %1328 = vmatpush1.bf16.msra.mxu0 0
        %1329 = vmatprep.subr.bf16.mxu0 0
        %1330 = vmatpush1.bf16.msra.mxu0 0
        %1331 = vmatprep.subr.bf16.mxu0 0
        %1332 = vmatpush1.bf16.msra.mxu0 0
        %1333 = vmatprep.subr.bf16.mxu0 0
        %1334 = vmatpush1.bf16.msra.mxu0 %v1317
        %1335 = vmatprep.subr.bf16.mxu0 0
        %1336 = vmatpush2.bf16.msra.mxu0 0
        %1337 = vmatprep.subr.bf16.mxu0 0
        %1338 = vmatpush2.bf16.msra.mxu0 0
        %1339 = vmatprep.subr.bf16.mxu0 0
        %1340 = vmatpush2.bf16.msra.mxu0 0
        %1341 = vmatprep.subr.bf16.mxu0 0
        %1342 = vmatpush2.bf16.msra.mxu0 0
        %1343 = vmatprep.subr.bf16.mxu0 0
        %1344 = vmatpush2.bf16.msra.mxu0 0
        %1345 = vmatprep.subr.bf16.mxu0 0
        %1346 = vmatpush2.bf16.msra.mxu0 0
        %1347 = vmatprep.subr.bf16.mxu0 0
        %1348 = vmatpush2.bf16.msra.mxu0 0
        %1349 = vmatprep.subr.bf16.mxu0 0
        %1350 = vmatpush2.bf16.msra.mxu0 0
        %1351 = vmatprep.mubr.bf16.mxu0 0
        %1352 = vmatmul.mubr.bf16.gmra.mxu0 %v1314
        %v1353 = vpop.f32.mrf.mxu0
        %v1354 = vadd.f32 0.0, %v1353
        %v1355 = vpop.f32.mrf.mxu0
        %v1356 = vpop.f32.mrf.mxu0
        %v1357 = vpop.f32.mrf.mxu0
        %1358 = vdwg.mxu0
        %1359 = vrot.lane.b32.xlu0 %v968, 64
        %v1360 = vpop.permute.xlu0 %1359
        %v1362 = vsel %vm972, %v1213, 0
        %v1365 = vsel %vm1219, %v1360, 0
        %1367 = vmatprep.subr.bf16.mxu0 0
        %1368 = vmatpush1.bf16.msra.mxu0 0
        %1369 = vmatprep.subr.bf16.mxu0 0
        %1370 = vmatpush1.bf16.msra.mxu0 0
        %1371 = vmatprep.subr.bf16.mxu0 0
        %1372 = vmatpush1.bf16.msra.mxu0 0
        %1373 = vmatprep.subr.bf16.mxu0 0
        %1374 = vmatpush1.bf16.msra.mxu0 0
        %1375 = vmatprep.subr.bf16.mxu0 0
        %1376 = vmatpush1.bf16.msra.mxu0 0
        %1377 = vmatprep.subr.bf16.mxu0 0
        %1378 = vmatpush1.bf16.msra.mxu0 0
        %1379 = vmatprep.subr.bf16.mxu0 0
        %1380 = vmatpush1.bf16.msra.mxu0 0
        %1381 = vmatprep.subr.bf16.mxu0 0
        %1382 = vmatpush1.bf16.msra.mxu0 %v1365
        %1383 = vmatprep.subr.bf16.mxu0 0
        %1384 = vmatpush2.bf16.msra.mxu0 0
        %1385 = vmatprep.subr.bf16.mxu0 0
        %1386 = vmatpush2.bf16.msra.mxu0 0
        %1387 = vmatprep.subr.bf16.mxu0 0
        %1388 = vmatpush2.bf16.msra.mxu0 0
        %1389 = vmatprep.subr.bf16.mxu0 0
        %1390 = vmatpush2.bf16.msra.mxu0 0
        %1391 = vmatprep.subr.bf16.mxu0 0
        %1392 = vmatpush2.bf16.msra.mxu0 0
        %1393 = vmatprep.subr.bf16.mxu0 0
        %1394 = vmatpush2.bf16.msra.mxu0 0
        %1395 = vmatprep.subr.bf16.mxu0 0
        %1396 = vmatpush2.bf16.msra.mxu0 0
        %1397 = vmatprep.subr.bf16.mxu0 0
        %1398 = vmatpush2.bf16.msra.mxu0 0
        %1399 = vmatprep.mubr.bf16.mxu0 0
        %1400 = vmatmul.mubr.bf16.gmra.mxu0 %v1362
        %v1401 = vpop.f32.mrf.mxu0
        %v1402 = vadd.f32 0.0, %v1401
        %v1403 = vpop.f32.mrf.mxu0
        %v1404 = vpop.f32.mrf.mxu0
        %v1405 = vpop.f32.mrf.mxu0
        %1406 = vdwg.mxu0
        %1408 = vrot.lane.b32.xlu0 %v1306, 8
        %v1409 = vpop.permute.xlu0 %1408
        %1412 = vrot.lane.b32.xlu0 %v1354, 16
        %v1413 = vpop.permute.xlu0 %1412
        %1416 = vrot.lane.b32.xlu0 %v1402, 24
        %v1417 = vpop.permute.xlu0 %1416
        %v1419 = vsel %vm972, %v1258, %v1409
        %vm1420 = vcmask 130048
        %v1421 = vsel %vm1420, %v1419, %v1413
        %vm1422 = vcmask 195584
        %v1423 = vsel %vm1422, %v1421, %v1417
        %v1424 = vpack.c.bf16 %v1423, %v1423
        %v1425 = vld [vmem:[%s6] sm:$0xff]
        %v1426 = vld [vmem:[%s6 + $0x8] sm:$0xff]
        %v1427 = vld [vmem:[%s6 + $0x10] sm:$0xff]
        %v1428 = vld [vmem:[%s6 + $0x18] sm:$0xff]
        %v1429 = vpack.c.bf16 %v1426, %v1425
        %v1430 = vpack.c.bf16 %v1428, %v1427
        %v1431 = vld [vmem:[#allocation11] sm:$0x1]
        %v1433 = vlaneseq
        %v1434 = vshrl.u32 %v1433, 7
        %v1435 = vsub.s32 0, %v1434
        %v1436 = vrot.slane %v1431, %v1435
        %v1439 = vsel %vm862, %v1424, 0
        %1441 = vmatprep.subr.bf16.mxu0 0
        %1442 = vmatpush1.bf16.msra.mxu0 0
        %1443 = vmatprep.subr.bf16.mxu0 0
        %1444 = vmatpush1.bf16.msra.mxu0 0
        %1445 = vmatprep.subr.bf16.mxu0 0
        %1446 = vmatpush1.bf16.msra.mxu0 0
        %1447 = vmatprep.subr.bf16.mxu0 0
        %1448 = vmatpush1.bf16.msra.mxu0 0
        %1449 = vmatprep.subr.bf16.mxu0 0
        %1450 = vmatpush1.bf16.msra.mxu0 0
        %1451 = vmatprep.subr.bf16.mxu0 0
        %1452 = vmatpush1.bf16.msra.mxu0 0
        %1453 = vmatprep.subr.bf16.mxu0 0
        %1454 = vmatpush1.bf16.msra.mxu0 %v1430
        %1455 = vmatprep.subr.bf16.mxu0 0
        %1456 = vmatpush1.bf16.msra.mxu0 %v1429
        %1457 = vmatprep.subr.bf16.mxu0 0
        %1458 = vmatpush2.bf16.msra.mxu0 0
        %1459 = vmatprep.subr.bf16.mxu0 0
        %1460 = vmatpush2.bf16.msra.mxu0 0
        %1461 = vmatprep.subr.bf16.mxu0 0
        %1462 = vmatpush2.bf16.msra.mxu0 0
        %1463 = vmatprep.subr.bf16.mxu0 0
        %1464 = vmatpush2.bf16.msra.mxu0 0
        %1465 = vmatprep.subr.bf16.mxu0 0
        %1466 = vmatpush2.bf16.msra.mxu0 0
        %1467 = vmatprep.subr.bf16.mxu0 0
        %1468 = vmatpush2.bf16.msra.mxu0 0
        %1469 = vmatprep.subr.bf16.mxu0 0
        %1470 = vmatpush2.bf16.msra.mxu0 0
        %1471 = vmatprep.subr.bf16.mxu0 0
        %1472 = vmatpush2.bf16.msra.mxu0 0
        %1473 = vmatprep.mubr.bf16.mxu0 0
        %1474 = vmatmul.mubr.bf16.gmra.mxu0 %v1439
        %v1475 = vpop.f32.mrf.mxu0
        %v1476 = vadd.f32 %v1436, %v1475
        %v1477 = vpop.f32.mrf.mxu0
        %v1478 = vpop.f32.mrf.mxu0
        %v1479 = vpop.f32.mrf.mxu0
        %1480 = vdwg.mxu0
        %v1481 = vadd.f32 %v1476, %v890
        %v1482 = vld [vmem:[#allocation13] sm:$0x1]
        %v1483 = vld [vmem:[#allocation14] sm:$0x1]
        %v1484 = vsel %vm862, %v1481, 0.0
        %1485 = vadd.xlane.f32.xlu0 %v1484
        %v1486 = vpop.xlane.xlu0 %1485
        %v1487 = vmul.f32 %v1486, %v866
        %v1488 = vsub.f32 %v1481, %v1487
        %v1489 = vmul.f32 %v1488, %v1488
        %v1490 = vsel %vm862, %v1489, 0.0
        %1491 = vadd.xlane.f32.xlu0 %v1490
        %v1492 = vpop.xlane.xlu0 %1491
        %v1493 = vmul.f32 %v1492, %v866
        %v1494 = vadd.f32 %v1493, 1e-12
        %v1495 = vrsqrt.pop %v1494
        %v1496 = vmul.f32 %v1488, %v1495
        %v1498 = vlaneseq
        %v1499 = vshrl.u32 %v1498, 7
        %v1500 = vsub.s32 0, %v1499
        %v1501 = vrot.slane %v1482, %v1500
        %v1503 = vmul.f32 %v1496, %v1501
        %v1505 = vlaneseq
        %v1506 = vshrl.u32 %v1505, 7
        %v1507 = vsub.s32 0, %v1506
        %v1508 = vrot.slane %v1483, %v1507
        %v1510 = vadd.f32 %v1503, %v1508
        %v1511 = vpack.c.bf16 %v1510, %v1510
        %v1512 = vld [vmem:[%s10] sm:$0xff]
        %v1513 = vld [vmem:[%s10 + $0x8] sm:$0xff]
        %v1514 = vld [vmem:[%s10 + $0x10] sm:$0xff]
        %v1515 = vld [vmem:[%s10 + $0x18] sm:$0xff]
        %v1516 = vpack.c.bf16 %v1513, %v1512
        %v1517 = vpack.c.bf16 %v1515, %v1514
        %v1518 = vld [vmem:[#allocation16] sm:$0x1]
        %v1520 = vlaneseq
        %v1521 = vshrl.u32 %v1520, 7
        %v1522 = vsub.s32 0, %v1521
        %v1523 = vrot.slane %v1518, %v1522
        %v1526 = vsel %vm862, %v1511, 0
        %1528 = vmatprep.subr.bf16.mxu0 0
        %1529 = vmatpush1.bf16.msra.mxu0 0
        %1530 = vmatprep.subr.bf16.mxu0 0
        %1531 = vmatpush1.bf16.msra.mxu0 0
        %1532 = vmatprep.subr.bf16.mxu0 0
        %1533 = vmatpush1.bf16.msra.mxu0 0
        %1534 = vmatprep.subr.bf16.mxu0 0
        %1535 = vmatpush1.bf16.msra.mxu0 0
        %1536 = vmatprep.subr.bf16.mxu0 0
        %1537 = vmatpush1.bf16.msra.mxu0 0
        %1538 = vmatprep.subr.bf16.mxu0 0
        %1539 = vmatpush1.bf16.msra.mxu0 0
        %1540 = vmatprep.subr.bf16.mxu0 0
        %1541 = vmatpush1.bf16.msra.mxu0 %v1517
        %1542 = vmatprep.subr.bf16.mxu0 0
        %1543 = vmatpush1.bf16.msra.mxu0 %v1516
        %1544 = vmatprep.subr.bf16.mxu0 0
        %1545 = vmatpush2.bf16.msra.mxu0 0
        %1546 = vmatprep.subr.bf16.mxu0 0
        %1547 = vmatpush2.bf16.msra.mxu0 0
        %1548 = vmatprep.subr.bf16.mxu0 0
        %1549 = vmatpush2.bf16.msra.mxu0 0
        %1550 = vmatprep.subr.bf16.mxu0 0
        %1551 = vmatpush2.bf16.msra.mxu0 0
        %1552 = vmatprep.subr.bf16.mxu0 0
        %1553 = vmatpush2.bf16.msra.mxu0 0
        %1554 = vmatprep.subr.bf16.mxu0 0
        %1555 = vmatpush2.bf16.msra.mxu0 0
        %1556 = vmatprep.subr.bf16.mxu0 0
        %1557 = vmatpush2.bf16.msra.mxu0 0
        %1558 = vmatprep.subr.bf16.mxu0 0
        %1559 = vmatpush2.bf16.msra.mxu0 0
        %1560 = vmatprep.mubr.bf16.mxu0 0
        %1561 = vmatmul.mubr.bf16.gmra.mxu0 %v1526
        %v1562 = vpop.f32.mrf.mxu0
        %v1563 = vadd.f32 %v1523, %v1562
        %v1564 = vpop.f32.mrf.mxu0
        %v1565 = vpop.f32.mrf.mxu0
        %v1566 = vpop.f32.mrf.mxu0
        %1567 = vdwg.mxu0
        %v1568 = vmul.f32 %v1563, 0.5
        %v1569 = vmul.f32 %v1563, 0.044715
        %v1570 = vmul.f32 %v1569, %v1563
        %v1571 = vmul.f32 %v1570, %v1563
        %v1572 = vadd.f32 %v1563, %v1571
        %v1573 = vmul.f32 %v1572, 0.7978846
        %v1574 = vtanh.pop %v1573
        %v1575 = vadd.f32 %v1574, 1.0
        %v1576 = vmul.f32 %v1568, %v1575
        %v1577 = vpack.c.bf16 %v1576, %v1576
        %v1578 = vld [vmem:[%s12] sm:$0xff]
        %v1579 = vld [vmem:[%s12 + $0x8] sm:$0xff]
        %v1580 = vld [vmem:[%s12 + $0x10] sm:$0xff]
        %v1581 = vld [vmem:[%s12 + $0x18] sm:$0xff]
        %v1582 = vld [vmem:[%s12 + $0x20] sm:$0xff]
        %v1583 = vld [vmem:[%s12 + $0x28] sm:$0xff]
        %v1584 = vld [vmem:[%s12 + $0x30] sm:$0xff]
        %v1585 = vld [vmem:[%s12 + $0x38] sm:$0xff]
        %v1586 = vpack.c.bf16 %v1579, %v1578
        %v1587 = vpack.c.bf16 %v1581, %v1580
        %v1588 = vpack.c.bf16 %v1583, %v1582
        %v1589 = vpack.c.bf16 %v1585, %v1584
        %v1590 = vld [vmem:[#allocation17] sm:$0x1]
        %v1592 = vlaneseq
        %v1593 = vshrl.u32 %v1592, 7
        %v1594 = vsub.s32 0, %v1593
        %v1595 = vrot.slane %v1590, %v1594
        %vm1597 = vcmask 523264
        %v1599 = vsel %vm1597, %v1577, 0
        %1601 = vmatprep.subr.bf16.mxu0 0
        %1602 = vmatpush1.bf16.msra.mxu0 0
        %1603 = vmatprep.subr.bf16.mxu0 0
        %1604 = vmatpush1.bf16.msra.mxu0 0
        %1605 = vmatprep.subr.bf16.mxu0 0
        %1606 = vmatpush1.bf16.msra.mxu0 0
        %1607 = vmatprep.subr.bf16.mxu0 0
        %1608 = vmatpush1.bf16.msra.mxu0 0
        %1609 = vmatprep.subr.bf16.mxu0 0
        %1610 = vmatpush1.bf16.msra.mxu0 %v1589
        %1611 = vmatprep.subr.bf16.mxu0 0
        %1612 = vmatpush1.bf16.msra.mxu0 %v1588
        %1613 = vmatprep.subr.bf16.mxu0 0
        %1614 = vmatpush1.bf16.msra.mxu0 %v1587
        %1615 = vmatprep.subr.bf16.mxu0 0
        %1616 = vmatpush1.bf16.msra.mxu0 %v1586
        %1617 = vmatprep.subr.bf16.mxu0 0
        %1618 = vmatpush2.bf16.msra.mxu0 0
        %1619 = vmatprep.subr.bf16.mxu0 0
        %1620 = vmatpush2.bf16.msra.mxu0 0
        %1621 = vmatprep.subr.bf16.mxu0 0
        %1622 = vmatpush2.bf16.msra.mxu0 0
        %1623 = vmatprep.subr.bf16.mxu0 0
        %1624 = vmatpush2.bf16.msra.mxu0 0
        %1625 = vmatprep.subr.bf16.mxu0 0
        %1626 = vmatpush2.bf16.msra.mxu0 0
        %1627 = vmatprep.subr.bf16.mxu0 0
        %1628 = vmatpush2.bf16.msra.mxu0 0
        %1629 = vmatprep.subr.bf16.mxu0 0
        %1630 = vmatpush2.bf16.msra.mxu0 0
        %1631 = vmatprep.subr.bf16.mxu0 0
        %1632 = vmatpush2.bf16.msra.mxu0 0
        %1633 = vmatprep.mubr.bf16.mxu0 0
        %1634 = vmatmul.mubr.bf16.gmra.mxu0 %v1599
        %v1635 = vpop.f32.mrf.mxu0
        %v1636 = vadd.f32 %v1595, %v1635
        %v1637 = vpop.f32.mrf.mxu0
        %v1638 = vpop.f32.mrf.mxu0
        %v1639 = vpop.f32.mrf.mxu0
        %1640 = vdwg.mxu0
        %v1641 = vadd.f32 %v1636, %v1510
        %v1642 = vld [vmem:[#allocation19] sm:$0x1]
        %v1643 = vld [vmem:[#allocation20] sm:$0x1]
        %v1644 = vsel %vm862, %v1641, 0.0
        %1645 = vadd.xlane.f32.xlu0 %v1644
        %v1646 = vpop.xlane.xlu0 %1645
        %v1647 = vmul.f32 %v1646, %v866
        %v1648 = vsub.f32 %v1641, %v1647
        %v1649 = vmul.f32 %v1648, %v1648
        %v1650 = vsel %vm862, %v1649, 0.0
        %1651 = vadd.xlane.f32.xlu0 %v1650
        %v1652 = vpop.xlane.xlu0 %1651
        %v1653 = vmul.f32 %v1652, %v866
        %v1654 = vadd.f32 %v1653, 1e-12
        %v1655 = vrsqrt.pop %v1654
        %v1656 = vmul.f32 %v1648, %v1655
        %v1658 = vlaneseq
        %v1659 = vshrl.u32 %v1658, 7
        %v1660 = vsub.s32 0, %v1659
        %v1661 = vrot.slane %v1642, %v1660
        %v1663 = vmul.f32 %v1656, %v1661
        %v1665 = vlaneseq
        %v1666 = vshrl.u32 %v1665, 7
        %v1667 = vsub.s32 0, %v1666
        %v1668 = vrot.slane %v1643, %v1667
        %v1670 = vadd.f32 %v1663, %v1668
        %v1671 = vpack.c.bf16 %v1670, %v1670
        %s1672 = scalar_lea.vmem %s4, 32
        %v1673 = vld [vmem:[%s1672] sm:$0xff]
        %v1674 = vld [vmem:[%s1672 + $0x8] sm:$0xff]
        %v1675 = vld [vmem:[%s1672 + $0x10] sm:$0xff]
        %v1676 = vld [vmem:[%s1672 + $0x18] sm:$0xff]
        %v1677 = vpack.c.bf16 %v1674, %v1673
        %v1678 = vpack.c.bf16 %v1676, %v1675
        %s1679 = scalar_lea.vmem [#allocation10], 1
        %v1680 = vld [vmem:[%s1679] sm:$0x1]
        %v1682 = vlaneseq
        %v1683 = vshrl.u32 %v1682, 7
        %v1684 = vsub.s32 0, %v1683
        %v1685 = vrot.slane %v1680, %v1684
        %v1688 = vsel %vm862, %v1671, 0
        %1690 = vmatprep.subr.bf16.mxu0 0
        %1691 = vmatpush1.bf16.msra.mxu0 0
        %1692 = vmatprep.subr.bf16.mxu0 0
        %1693 = vmatpush1.bf16.msra.mxu0 0
        %1694 = vmatprep.subr.bf16.mxu0 0
        %1695 = vmatpush1.bf16.msra.mxu0 0
        %1696 = vmatprep.subr.bf16.mxu0 0
        %1697 = vmatpush1.bf16.msra.mxu0 0
        %1698 = vmatprep.subr.bf16.mxu0 0
        %1699 = vmatpush1.bf16.msra.mxu0 0
        %1700 = vmatprep.subr.bf16.mxu0 0
        %1701 = vmatpush1.bf16.msra.mxu0 0
        %1702 = vmatprep.subr.bf16.mxu0 0
        %1703 = vmatpush1.bf16.msra.mxu0 %v1678
        %1704 = vmatprep.subr.bf16.mxu0 0
        %1705 = vmatpush1.bf16.msra.mxu0 %v1677
        %1706 = vmatprep.subr.bf16.mxu0 0
        %1707 = vmatpush2.bf16.msra.mxu0 0
        %1708 = vmatprep.subr.bf16.mxu0 0
        %1709 = vmatpush2.bf16.msra.mxu0 0
        %1710 = vmatprep.subr.bf16.mxu0 0
        %1711 = vmatpush2.bf16.msra.mxu0 0
        %1712 = vmatprep.subr.bf16.mxu0 0
        %1713 = vmatpush2.bf16.msra.mxu0 0
        %1714 = vmatprep.subr.bf16.mxu0 0
        %1715 = vmatpush2.bf16.msra.mxu0 0
        %1716 = vmatprep.subr.bf16.mxu0 0
        %1717 = vmatpush2.bf16.msra.mxu0 0
        %1718 = vmatprep.subr.bf16.mxu0 0
        %1719 = vmatpush2.bf16.msra.mxu0 0
        %1720 = vmatprep.subr.bf16.mxu0 0
        %1721 = vmatpush2.bf16.msra.mxu0 0
        %1722 = vmatprep.mubr.bf16.mxu0 0
        %1723 = vmatmul.mubr.bf16.gmra.mxu0 %v1688
        %v1724 = vpop.f32.mrf.mxu0
        %v1725 = vadd.f32 %v1685, %v1724
        %v1726 = vpop.f32.mrf.mxu0
        %v1727 = vpop.f32.mrf.mxu0
        %v1728 = vpop.f32.mrf.mxu0
        %1729 = vdwg.mxu0
        %1731 = vrot.lane.b32.xlu0 %v1725, 120
        %v1732 = vpop.permute.xlu0 %1731
        %1734 = vrot.lane.b32.xlu0 %v1725, 112
        %v1735 = vpop.permute.xlu0 %1734
        %1737 = vrot.lane.b32.xlu0 %v1725, 104
        %v1738 = vpop.permute.xlu0 %1737
        %v1740 = vpack.c.bf16 %v1725, %v1725
        %v1741 = vpack.c.bf16 %v1732, %v1732
        %v1742 = vpack.c.bf16 %v1735, %v1735
        %v1743 = vpack.c.bf16 %v1738, %v1738
        %1745 = vrot.lane.b32.xlu0 %v1740, 96
        %v1746 = vpop.permute.xlu0 %1745
        %v1748 = vsel %vm972, %v1740, 0
        %v1751 = vsel %vm972, %v1746, 0
        %1753 = vmatprep.subr.bf16.mxu0 0
        %1754 = vmatpush1.bf16.xpose.msra.mxu0 0
        %1755 = vmatprep.subr.bf16.mxu0 0
        %1756 = vmatpush1.bf16.xpose.msra.mxu0 0
        %1757 = vmatprep.subr.bf16.mxu0 0
        %1758 = vmatpush1.bf16.xpose.msra.mxu0 0
        %1759 = vmatprep.subr.bf16.mxu0 0
        %1760 = vmatpush1.bf16.xpose.msra.mxu0 0
        %1761 = vmatprep.subr.bf16.mxu0 0
        %1762 = vmatpush1.bf16.xpose.msra.mxu0 0
        %1763 = vmatprep.subr.bf16.mxu0 0
        %1764 = vmatpush1.bf16.xpose.msra.mxu0 0
        %1765 = vmatprep.subr.bf16.mxu0 0
        %1766 = vmatpush1.bf16.xpose.msra.mxu0 0
        %1767 = vmatprep.subr.bf16.mxu0 0
        %1768 = vmatpush1.bf16.xpose.msra.mxu0 %v1751
        %1769 = vmatprep.subr.bf16.mxu0 0
        %1770 = vmatpush2.bf16.xpose.msra.mxu0 0
        %1771 = vmatprep.subr.bf16.mxu0 0
        %1772 = vmatpush2.bf16.xpose.msra.mxu0 0
        %1773 = vmatprep.subr.bf16.mxu0 0
        %1774 = vmatpush2.bf16.xpose.msra.mxu0 0
        %1775 = vmatprep.subr.bf16.mxu0 0
        %1776 = vmatpush2.bf16.xpose.msra.mxu0 0
        %1777 = vmatprep.subr.bf16.mxu0 0
        %1778 = vmatpush2.bf16.xpose.msra.mxu0 0
        %1779 = vmatprep.subr.bf16.mxu0 0
        %1780 = vmatpush2.bf16.xpose.msra.mxu0 0
        %1781 = vmatprep.subr.bf16.mxu0 0
        %1782 = vmatpush2.bf16.xpose.msra.mxu0 0
        %1783 = vmatprep.subr.bf16.mxu0 0
        %1784 = vmatpush2.bf16.xpose.msra.mxu0 0
        %1785 = vmatprep.mubr.bf16.mxu0 0
        %1786 = vmatmul.mubr.bf16.gmra.mxu0 %v1748
        %v1787 = vpop.f32.mrf.mxu0
        %v1788 = vadd.f32 %v896, %v1787
        %v1789 = vpop.f32.mrf.mxu0
        %v1790 = vpop.f32.mrf.mxu0
        %v1791 = vpop.f32.mrf.mxu0
        %1792 = vdwg.mxu0
        %1794 = vrot.lane.b32.xlu0 %v1741, 96
        %v1795 = vpop.permute.xlu0 %1794
        %v1797 = vsel %vm972, %v1741, 0
        %v1800 = vsel %vm972, %v1795, 0
        %1802 = vmatprep.subr.bf16.mxu0 0
        %1803 = vmatpush1.bf16.xpose.msra.mxu0 0
        %1804 = vmatprep.subr.bf16.mxu0 0
        %1805 = vmatpush1.bf16.xpose.msra.mxu0 0
        %1806 = vmatprep.subr.bf16.mxu0 0
        %1807 = vmatpush1.bf16.xpose.msra.mxu0 0
        %1808 = vmatprep.subr.bf16.mxu0 0
        %1809 = vmatpush1.bf16.xpose.msra.mxu0 0
        %1810 = vmatprep.subr.bf16.mxu0 0
        %1811 = vmatpush1.bf16.xpose.msra.mxu0 0
        %1812 = vmatprep.subr.bf16.mxu0 0
        %1813 = vmatpush1.bf16.xpose.msra.mxu0 0
        %1814 = vmatprep.subr.bf16.mxu0 0
        %1815 = vmatpush1.bf16.xpose.msra.mxu0 0
        %1816 = vmatprep.subr.bf16.mxu0 0
        %1817 = vmatpush1.bf16.xpose.msra.mxu0 %v1800
        %1818 = vmatprep.subr.bf16.mxu0 0
        %1819 = vmatpush2.bf16.xpose.msra.mxu0 0
        %1820 = vmatprep.subr.bf16.mxu0 0
        %1821 = vmatpush2.bf16.xpose.msra.mxu0 0
        %1822 = vmatprep.subr.bf16.mxu0 0
        %1823 = vmatpush2.bf16.xpose.msra.mxu0 0
        %1824 = vmatprep.subr.bf16.mxu0 0
        %1825 = vmatpush2.bf16.xpose.msra.mxu0 0
        %1826 = vmatprep.subr.bf16.mxu0 0
        %1827 = vmatpush2.bf16.xpose.msra.mxu0 0
        %1828 = vmatprep.subr.bf16.mxu0 0
        %1829 = vmatpush2.bf16.xpose.msra.mxu0 0
        %1830 = vmatprep.subr.bf16.mxu0 0
        %1831 = vmatpush2.bf16.xpose.msra.mxu0 0
        %1832 = vmatprep.subr.bf16.mxu0 0
        %1833 = vmatpush2.bf16.xpose.msra.mxu0 0
        %1834 = vmatprep.mubr.bf16.mxu0 0
        %1835 = vmatmul.mubr.bf16.gmra.mxu0 %v1797
        %v1836 = vpop.f32.mrf.mxu0
        %v1837 = vadd.f32 %v896, %v1836
        %v1838 = vpop.f32.mrf.mxu0
        %v1839 = vpop.f32.mrf.mxu0
        %v1840 = vpop.f32.mrf.mxu0
        %1841 = vdwg.mxu0
        %1843 = vrot.lane.b32.xlu0 %v1742, 96
        %v1844 = vpop.permute.xlu0 %1843
        %v1846 = vsel %vm972, %v1742, 0
        %v1849 = vsel %vm972, %v1844, 0
        %1851 = vmatprep.subr.bf16.mxu0 0
        %1852 = vmatpush1.bf16.xpose.msra.mxu0 0
        %1853 = vmatprep.subr.bf16.mxu0 0
        %1854 = vmatpush1.bf16.xpose.msra.mxu0 0
        %1855 = vmatprep.subr.bf16.mxu0 0
        %1856 = vmatpush1.bf16.xpose.msra.mxu0 0
        %1857 = vmatprep.subr.bf16.mxu0 0
        %1858 = vmatpush1.bf16.xpose.msra.mxu0 0
        %1859 = vmatprep.subr.bf16.mxu0 0
        %1860 = vmatpush1.bf16.xpose.msra.mxu0 0
        %1861 = vmatprep.subr.bf16.mxu0 0
        %1862 = vmatpush1.bf16.xpose.msra.mxu0 0
        %1863 = vmatprep.subr.bf16.mxu0 0
        %1864 = vmatpush1.bf16.xpose.msra.mxu0 0
        %1865 = vmatprep.subr.bf16.mxu0 0
        %1866 = vmatpush1.bf16.xpose.msra.mxu0 %v1849
        %1867 = vmatprep.subr.bf16.mxu0 0
        %1868 = vmatpush2.bf16.xpose.msra.mxu0 0
        %1869 = vmatprep.subr.bf16.mxu0 0
        %1870 = vmatpush2.bf16.xpose.msra.mxu0 0
        %1871 = vmatprep.subr.bf16.mxu0 0
        %1872 = vmatpush2.bf16.xpose.msra.mxu0 0
        %1873 = vmatprep.subr.bf16.mxu0 0
        %1874 = vmatpush2.bf16.xpose.msra.mxu0 0
        %1875 = vmatprep.subr.bf16.mxu0 0
        %1876 = vmatpush2.bf16.xpose.msra.mxu0 0
        %1877 = vmatprep.subr.bf16.mxu0 0
        %1878 = vmatpush2.bf16.xpose.msra.mxu0 0
        %1879 = vmatprep.subr.bf16.mxu0 0
        %1880 = vmatpush2.bf16.xpose.msra.mxu0 0
        %1881 = vmatprep.subr.bf16.mxu0 0
        %1882 = vmatpush2.bf16.xpose.msra.mxu0 0
        %1883 = vmatprep.mubr.bf16.mxu0 0
        %1884 = vmatmul.mubr.bf16.gmra.mxu0 %v1846
        %v1885 = vpop.f32.mrf.mxu0
        %v1886 = vadd.f32 %v896, %v1885
        %v1887 = vpop.f32.mrf.mxu0
        %v1888 = vpop.f32.mrf.mxu0
        %v1889 = vpop.f32.mrf.mxu0
        %1890 = vdwg.mxu0
        %1892 = vrot.lane.b32.xlu0 %v1743, 96
        %v1893 = vpop.permute.xlu0 %1892
        %v1895 = vsel %vm972, %v1743, 0
        %v1898 = vsel %vm972, %v1893, 0
        %1900 = vmatprep.subr.bf16.mxu0 0
        %1901 = vmatpush1.bf16.xpose.msra.mxu0 0
        %1902 = vmatprep.subr.bf16.mxu0 0
        %1903 = vmatpush1.bf16.xpose.msra.mxu0 0
        %1904 = vmatprep.subr.bf16.mxu0 0
        %1905 = vmatpush1.bf16.xpose.msra.mxu0 0
        %1906 = vmatprep.subr.bf16.mxu0 0
        %1907 = vmatpush1.bf16.xpose.msra.mxu0 0
        %1908 = vmatprep.subr.bf16.mxu0 0
        %1909 = vmatpush1.bf16.xpose.msra.mxu0 0
        %1910 = vmatprep.subr.bf16.mxu0 0
        %1911 = vmatpush1.bf16.xpose.msra.mxu0 0
        %1912 = vmatprep.subr.bf16.mxu0 0
        %1913 = vmatpush1.bf16.xpose.msra.mxu0 0
        %1914 = vmatprep.subr.bf16.mxu0 0
        %1915 = vmatpush1.bf16.xpose.msra.mxu0 %v1898
        %1916 = vmatprep.subr.bf16.mxu0 0
        %1917 = vmatpush2.bf16.xpose.msra.mxu0 0
        %1918 = vmatprep.subr.bf16.mxu0 0
        %1919 = vmatpush2.bf16.xpose.msra.mxu0 0
        %1920 = vmatprep.subr.bf16.mxu0 0
        %1921 = vmatpush2.bf16.xpose.msra.mxu0 0
        %1922 = vmatprep.subr.bf16.mxu0 0
        %1923 = vmatpush2.bf16.xpose.msra.mxu0 0
        %1924 = vmatprep.subr.bf16.mxu0 0
        %1925 = vmatpush2.bf16.xpose.msra.mxu0 0
        %1926 = vmatprep.subr.bf16.mxu0 0
        %1927 = vmatpush2.bf16.xpose.msra.mxu0 0
        %1928 = vmatprep.subr.bf16.mxu0 0
        %1929 = vmatpush2.bf16.xpose.msra.mxu0 0
        %1930 = vmatprep.subr.bf16.mxu0 0
        %1931 = vmatpush2.bf16.xpose.msra.mxu0 0
        %1932 = vmatprep.mubr.bf16.mxu0 0
        %1933 = vmatmul.mubr.bf16.gmra.mxu0 %v1895
        %v1934 = vpop.f32.mrf.mxu0
        %v1935 = vadd.f32 %v896, %v1934
        %v1936 = vpop.f32.mrf.mxu0
        %v1937 = vpop.f32.mrf.mxu0
        %v1938 = vpop.f32.mrf.mxu0
        %1939 = vdwg.mxu0
        %v1940 = vsel %vm972, %v1788, -inf
        %1941 = vmax.xlane.f32.xlu0 %v1940
        %v1942 = vpop.xlane.xlu0 %1941
        %v1943 = vsel %vm972, %v1837, -inf
        %1944 = vmax.xlane.f32.xlu0 %v1943
        %v1945 = vpop.xlane.xlu0 %1944
        %v1946 = vsel %vm972, %v1886, -inf
        %1947 = vmax.xlane.f32.xlu0 %v1946
        %v1948 = vpop.xlane.xlu0 %1947
        %v1949 = vsel %vm972, %v1935, -inf
        %1950 = vmax.xlane.f32.xlu0 %v1949
        %v1951 = vpop.xlane.xlu0 %1950
        %v1952 = vsub.f32 %v1788, %v1942
        %v1953 = vsub.f32 %v1837, %v1945
        %v1954 = vsub.f32 %v1886, %v1948
        %v1955 = vsub.f32 %v1935, %v1951
        %v1956 = vmul.f32 %v1952, 1.442695
        %v1957 = vpow.pop %v1956
        %v1958 = vmul.f32 %v1953, 1.442695
        %v1959 = vpow.pop %v1958
        %v1960 = vmul.f32 %v1954, 1.442695
        %v1961 = vpow.pop %v1960
        %v1962 = vmul.f32 %v1955, 1.442695
        %v1963 = vpow.pop %v1962
        %v1964 = vsel %vm972, %v1957, 0.0
        %1965 = vadd.xlane.f32.xlu0 %v1964
        %v1966 = vpop.xlane.xlu0 %1965
        %v1967 = vsel %vm972, %v1959, 0.0
        %1968 = vadd.xlane.f32.xlu0 %v1967
        %v1969 = vpop.xlane.xlu0 %1968
        %v1970 = vsel %vm972, %v1961, 0.0
        %1971 = vadd.xlane.f32.xlu0 %v1970
        %v1972 = vpop.xlane.xlu0 %1971
        %v1973 = vsel %vm972, %v1963, 0.0
        %1974 = vadd.xlane.f32.xlu0 %v1973
        %v1975 = vpop.xlane.xlu0 %1974
        %v1976 = vrcp.pop %v1966
        %v1977 = vrcp.pop %v1969
        %v1978 = vrcp.pop %v1972
        %v1979 = vrcp.pop %v1975
        %v1980 = vmul.f32 %v1957, %v1976
        %v1981 = vmul.f32 %v1959, %v1977
        %v1982 = vmul.f32 %v1961, %v1978
        %v1983 = vmul.f32 %v1963, %v1979
        %v1984 = vpack.c.bf16 %v1980, %v1980
        %v1985 = vpack.c.bf16 %v1981, %v1981
        %v1986 = vpack.c.bf16 %v1982, %v1982
        %v1987 = vpack.c.bf16 %v1983, %v1983
        %1988 = vrot.lane.b32.xlu0 %v1740, 64
        %v1989 = vpop.permute.xlu0 %1988
        %v1991 = vsel %vm972, %v1984, 0
        %v1994 = vsel %vm1219, %v1989, 0
        %1996 = vmatprep.subr.bf16.mxu0 0
        %1997 = vmatpush1.bf16.msra.mxu0 0
        %1998 = vmatprep.subr.bf16.mxu0 0
        %1999 = vmatpush1.bf16.msra.mxu0 0
        %2000 = vmatprep.subr.bf16.mxu0 0
        %2001 = vmatpush1.bf16.msra.mxu0 0
        %2002 = vmatprep.subr.bf16.mxu0 0
        %2003 = vmatpush1.bf16.msra.mxu0 0
        %2004 = vmatprep.subr.bf16.mxu0 0
        %2005 = vmatpush1.bf16.msra.mxu0 0
        %2006 = vmatprep.subr.bf16.mxu0 0
        %2007 = vmatpush1.bf16.msra.mxu0 0
        %2008 = vmatprep.subr.bf16.mxu0 0
        %2009 = vmatpush1.bf16.msra.mxu0 0
        %2010 = vmatprep.subr.bf16.mxu0 0
        %2011 = vmatpush1.bf16.msra.mxu0 %v1994
        %2012 = vmatprep.subr.bf16.mxu0 0
        %2013 = vmatpush2.bf16.msra.mxu0 0
        %2014 = vmatprep.subr.bf16.mxu0 0
        %2015 = vmatpush2.bf16.msra.mxu0 0
        %2016 = vmatprep.subr.bf16.mxu0 0
        %2017 = vmatpush2.bf16.msra.mxu0 0
        %2018 = vmatprep.subr.bf16.mxu0 0
        %2019 = vmatpush2.bf16.msra.mxu0 0
        %2020 = vmatprep.subr.bf16.mxu0 0
        %2021 = vmatpush2.bf16.msra.mxu0 0
        %2022 = vmatprep.subr.bf16.mxu0 0
        %2023 = vmatpush2.bf16.msra.mxu0 0
        %2024 = vmatprep.subr.bf16.mxu0 0
        %2025 = vmatpush2.bf16.msra.mxu0 0
        %2026 = vmatprep.subr.bf16.mxu0 0
        %2027 = vmatpush2.bf16.msra.mxu0 0
        %2028 = vmatprep.mubr.bf16.mxu0 0
        %2029 = vmatmul.mubr.bf16.gmra.mxu0 %v1991
        %v2030 = vpop.f32.mrf.mxu0
        %v2031 = vadd.f32 0.0, %v2030
        %v2032 = vpop.f32.mrf.mxu0
        %v2033 = vpop.f32.mrf.mxu0
        %v2034 = vpop.f32.mrf.mxu0
        %2035 = vdwg.mxu0
        %2036 = vrot.lane.b32.xlu0 %v1741, 64
        %v2037 = vpop.permute.xlu0 %2036
        %v2039 = vsel %vm972, %v1985, 0
        %v2042 = vsel %vm1219, %v2037, 0
        %2044 = vmatprep.subr.bf16.mxu0 0
        %2045 = vmatpush1.bf16.msra.mxu0 0
        %2046 = vmatprep.subr.bf16.mxu0 0
        %2047 = vmatpush1.bf16.msra.mxu0 0
        %2048 = vmatprep.subr.bf16.mxu0 0
        %2049 = vmatpush1.bf16.msra.mxu0 0
        %2050 = vmatprep.subr.bf16.mxu0 0
        %2051 = vmatpush1.bf16.msra.mxu0 0
        %2052 = vmatprep.subr.bf16.mxu0 0
        %2053 = vmatpush1.bf16.msra.mxu0 0
        %2054 = vmatprep.subr.bf16.mxu0 0
        %2055 = vmatpush1.bf16.msra.mxu0 0
        %2056 = vmatprep.subr.bf16.mxu0 0
        %2057 = vmatpush1.bf16.msra.mxu0 0
        %2058 = vmatprep.subr.bf16.mxu0 0
        %2059 = vmatpush1.bf16.msra.mxu0 %v2042
        %2060 = vmatprep.subr.bf16.mxu0 0
        %2061 = vmatpush2.bf16.msra.mxu0 0
        %2062 = vmatprep.subr.bf16.mxu0 0
        %2063 = vmatpush2.bf16.msra.mxu0 0
        %2064 = vmatprep.subr.bf16.mxu0 0
        %2065 = vmatpush2.bf16.msra.mxu0 0
        %2066 = vmatprep.subr.bf16.mxu0 0
        %2067 = vmatpush2.bf16.msra.mxu0 0
        %2068 = vmatprep.subr.bf16.mxu0 0
        %2069 = vmatpush2.bf16.msra.mxu0 0
        %2070 = vmatprep.subr.bf16.mxu0 0
        %2071 = vmatpush2.bf16.msra.mxu0 0
        %2072 = vmatprep.subr.bf16.mxu0 0
        %2073 = vmatpush2.bf16.msra.mxu0 0
        %2074 = vmatprep.subr.bf16.mxu0 0
        %2075 = vmatpush2.bf16.msra.mxu0 0
        %2076 = vmatprep.mubr.bf16.mxu0 0
        %2077 = vmatmul.mubr.bf16.gmra.mxu0 %v2039
        %v2078 = vpop.f32.mrf.mxu0
        %v2079 = vadd.f32 0.0, %v2078
        %v2080 = vpop.f32.mrf.mxu0
        %v2081 = vpop.f32.mrf.mxu0
        %v2082 = vpop.f32.mrf.mxu0
        %2083 = vdwg.mxu0
        %2084 = vrot.lane.b32.xlu0 %v1742, 64
        %v2085 = vpop.permute.xlu0 %2084
        %v2087 = vsel %vm972, %v1986, 0
        %v2090 = vsel %vm1219, %v2085, 0
        %2092 = vmatprep.subr.bf16.mxu0 0
        %2093 = vmatpush1.bf16.msra.mxu0 0
        %2094 = vmatprep.subr.bf16.mxu0 0
        %2095 = vmatpush1.bf16.msra.mxu0 0
        %2096 = vmatprep.subr.bf16.mxu0 0
        %2097 = vmatpush1.bf16.msra.mxu0 0
        %2098 = vmatprep.subr.bf16.mxu0 0
        %2099 = vmatpush1.bf16.msra.mxu0 0
        %2100 = vmatprep.subr.bf16.mxu0 0
        %2101 = vmatpush1.bf16.msra.mxu0 0
        %2102 = vmatprep.subr.bf16.mxu0 0
        %2103 = vmatpush1.bf16.msra.mxu0 0
        %2104 = vmatprep.subr.bf16.mxu0 0
        %2105 = vmatpush1.bf16.msra.mxu0 0
        %2106 = vmatprep.subr.bf16.mxu0 0
        %2107 = vmatpush1.bf16.msra.mxu0 %v2090
        %2108 = vmatprep.subr.bf16.mxu0 0
        %2109 = vmatpush2.bf16.msra.mxu0 0
        %2110 = vmatprep.subr.bf16.mxu0 0
        %2111 = vmatpush2.bf16.msra.mxu0 0
        %2112 = vmatprep.subr.bf16.mxu0 0
        %2113 = vmatpush2.bf16.msra.mxu0 0
        %2114 = vmatprep.subr.bf16.mxu0 0
        %2115 = vmatpush2.bf16.msra.mxu0 0
        %2116 = vmatprep.subr.bf16.mxu0 0
        %2117 = vmatpush2.bf16.msra.mxu0 0
        %2118 = vmatprep.subr.bf16.mxu0 0
        %2119 = vmatpush2.bf16.msra.mxu0 0
        %2120 = vmatprep.subr.bf16.mxu0 0
        %2121 = vmatpush2.bf16.msra.mxu0 0
        %2122 = vmatprep.subr.bf16.mxu0 0
        %2123 = vmatpush2.bf16.msra.mxu0 0
        %2124 = vmatprep.mubr.bf16.mxu0 0
        %2125 = vmatmul.mubr.bf16.gmra.mxu0 %v2087
        %v2126 = vpop.f32.mrf.mxu0
        %v2127 = vadd.f32 0.0, %v2126
        %v2128 = vpop.f32.mrf.mxu0
        %v2129 = vpop.f32.mrf.mxu0
        %v2130 = vpop.f32.mrf.mxu0
        %2131 = vdwg.mxu0
        %2132 = vrot.lane.b32.xlu0 %v1743, 64
        %v2133 = vpop.permute.xlu0 %2132
        %v2135 = vsel %vm972, %v1987, 0
        %v2138 = vsel %vm1219, %v2133, 0
        %2140 = vmatprep.subr.bf16.mxu0 0
        %2141 = vmatpush1.bf16.msra.mxu0 0
        %2142 = vmatprep.subr.bf16.mxu0 0
        %2143 = vmatpush1.bf16.msra.mxu0 0
        %2144 = vmatprep.subr.bf16.mxu0 0
        %2145 = vmatpush1.bf16.msra.mxu0 0
        %2146 = vmatprep.subr.bf16.mxu0 0
        %2147 = vmatpush1.bf16.msra.mxu0 0
        %2148 = vmatprep.subr.bf16.mxu0 0
        %2149 = vmatpush1.bf16.msra.mxu0 0
        %2150 = vmatprep.subr.bf16.mxu0 0
        %2151 = vmatpush1.bf16.msra.mxu0 0
        %2152 = vmatprep.subr.bf16.mxu0 0
        %2153 = vmatpush1.bf16.msra.mxu0 0
        %2154 = vmatprep.subr.bf16.mxu0 0
        %2155 = vmatpush1.bf16.msra.mxu0 %v2138
        %2156 = vmatprep.subr.bf16.mxu0 0
        %2157 = vmatpush2.bf16.msra.mxu0 0
        %2158 = vmatprep.subr.bf16.mxu0 0
        %2159 = vmatpush2.bf16.msra.mxu0 0
        %2160 = vmatprep.subr.bf16.mxu0 0
        %2161 = vmatpush2.bf16.msra.mxu0 0
        %2162 = vmatprep.subr.bf16.mxu0 0
        %2163 = vmatpush2.bf16.msra.mxu0 0
        %2164 = vmatprep.subr.bf16.mxu0 0
        %2165 = vmatpush2.bf16.msra.mxu0 0
        %2166 = vmatprep.subr.bf16.mxu0 0
        %2167 = vmatpush2.bf16.msra.mxu0 0
        %2168 = vmatprep.subr.bf16.mxu0 0
        %2169 = vmatpush2.bf16.msra.mxu0 0
        %2170 = vmatprep.subr.bf16.mxu0 0
        %2171 = vmatpush2.bf16.msra.mxu0 0
        %2172 = vmatprep.mubr.bf16.mxu0 0
        %2173 = vmatmul.mubr.bf16.gmra.mxu0 %v2135
        %v2174 = vpop.f32.mrf.mxu0
        %v2175 = vadd.f32 0.0, %v2174
        %v2176 = vpop.f32.mrf.mxu0
        %v2177 = vpop.f32.mrf.mxu0
        %v2178 = vpop.f32.mrf.mxu0
        %2179 = vdwg.mxu0
        %2181 = vrot.lane.b32.xlu0 %v2079, 8
        %v2182 = vpop.permute.xlu0 %2181
        %2185 = vrot.lane.b32.xlu0 %v2127, 16
        %v2186 = vpop.permute.xlu0 %2185
        %2189 = vrot.lane.b32.xlu0 %v2175, 24
        %v2190 = vpop.permute.xlu0 %2189
        %v2192 = vsel %vm972, %v2031, %v2182
        %v2193 = vsel %vm1420, %v2192, %v2186
        %v2194 = vsel %vm1422, %v2193, %v2190
        %v2195 = vpack.c.bf16 %v2194, %v2194
        %s2196 = scalar_lea.vmem %s6, 32
        %v2197 = vld [vmem:[%s2196] sm:$0xff]
        %v2198 = vld [vmem:[%s2196 + $0x8] sm:$0xff]
        %v2199 = vld [vmem:[%s2196 + $0x10] sm:$0xff]
        %v2200 = vld [vmem:[%s2196 + $0x18] sm:$0xff]
        %v2201 = vpack.c.bf16 %v2198, %v2197
        %v2202 = vpack.c.bf16 %v2200, %v2199
        %s2203 = scalar_lea.vmem [#allocation11], 1
        %v2204 = vld [vmem:[%s2203] sm:$0x1]
        %v2206 = vlaneseq
        %v2207 = vshrl.u32 %v2206, 7
        %v2208 = vsub.s32 0, %v2207
        %v2209 = vrot.slane %v2204, %v2208
        %v2212 = vsel %vm862, %v2195, 0
        %2214 = vmatprep.subr.bf16.mxu0 0
        %2215 = vmatpush1.bf16.msra.mxu0 0
        %2216 = vmatprep.subr.bf16.mxu0 0
        %2217 = vmatpush1.bf16.msra.mxu0 0
        %2218 = vmatprep.subr.bf16.mxu0 0
        %2219 = vmatpush1.bf16.msra.mxu0 0
        %2220 = vmatprep.subr.bf16.mxu0 0
        %2221 = vmatpush1.bf16.msra.mxu0 0
        %2222 = vmatprep.subr.bf16.mxu0 0
        %2223 = vmatpush1.bf16.msra.mxu0 0
        %2224 = vmatprep.subr.bf16.mxu0 0
        %2225 = vmatpush1.bf16.msra.mxu0 0
        %2226 = vmatprep.subr.bf16.mxu0 0
        %2227 = vmatpush1.bf16.msra.mxu0 %v2202
        %2228 = vmatprep.subr.bf16.mxu0 0
        %2229 = vmatpush1.bf16.msra.mxu0 %v2201
        %2230 = vmatprep.subr.bf16.mxu0 0
        %2231 = vmatpush2.bf16.msra.mxu0 0
        %2232 = vmatprep.subr.bf16.mxu0 0
        %2233 = vmatpush2.bf16.msra.mxu0 0
        %2234 = vmatprep.subr.bf16.mxu0 0
        %2235 = vmatpush2.bf16.msra.mxu0 0
        %2236 = vmatprep.subr.bf16.mxu0 0
        %2237 = vmatpush2.bf16.msra.mxu0 0
        %2238 = vmatprep.subr.bf16.mxu0 0
        %2239 = vmatpush2.bf16.msra.mxu0 0
        %2240 = vmatprep.subr.bf16.mxu0 0
        %2241 = vmatpush2.bf16.msra.mxu0 0
        %2242 = vmatprep.subr.bf16.mxu0 0
        %2243 = vmatpush2.bf16.msra.mxu0 0
        %2244 = vmatprep.subr.bf16.mxu0 0
        %2245 = vmatpush2.bf16.msra.mxu0 0
        %2246 = vmatprep.mubr.bf16.mxu0 0
        %2247 = vmatmul.mubr.bf16.gmra.mxu0 %v2212
        %v2248 = vpop.f32.mrf.mxu0
        %v2249 = vadd.f32 %v2209, %v2248
        %v2250 = vpop.f32.mrf.mxu0
        %v2251 = vpop.f32.mrf.mxu0
        %v2252 = vpop.f32.mrf.mxu0
        %2253 = vdwg.mxu0
        %v2254 = vadd.f32 %v2249, %v1670
        %s2255 = scalar_lea.vmem [#allocation13], 1
        %v2256 = vld [vmem:[%s2255] sm:$0x1]
        %s2257 = scalar_lea.vmem [#allocation14], 1
        %v2258 = vld [vmem:[%s2257] sm:$0x1]
        %v2259 = vsel %vm862, %v2254, 0.0
        %2260 = vadd.xlane.f32.xlu0 %v2259
        %v2261 = vpop.xlane.xlu0 %2260
        %v2262 = vmul.f32 %v2261, %v866
        %v2263 = vsub.f32 %v2254, %v2262
        %v2264 = vmul.f32 %v2263, %v2263
        %v2265 = vsel %vm862, %v2264, 0.0
        %2266 = vadd.xlane.f32.xlu0 %v2265
        %v2267 = vpop.xlane.xlu0 %2266
        %v2268 = vmul.f32 %v2267, %v866
        %v2269 = vadd.f32 %v2268, 1e-12
        %v2270 = vrsqrt.pop %v2269
        %v2271 = vmul.f32 %v2263, %v2270
        %v2273 = vlaneseq
        %v2274 = vshrl.u32 %v2273, 7
        %v2275 = vsub.s32 0, %v2274
        %v2276 = vrot.slane %v2256, %v2275
        %v2278 = vmul.f32 %v2271, %v2276
        %v2280 = vlaneseq
        %v2281 = vshrl.u32 %v2280, 7
        %v2282 = vsub.s32 0, %v2281
        %v2283 = vrot.slane %v2258, %v2282
        %v2285 = vadd.f32 %v2278, %v2283
        %v2286 = vpack.c.bf16 %v2285, %v2285
        %s2287 = scalar_lea.vmem %s10, 32
        %v2288 = vld [vmem:[%s2287] sm:$0xff]
        %v2289 = vld [vmem:[%s2287 + $0x8] sm:$0xff]
        %v2290 = vld [vmem:[%s2287 + $0x10] sm:$0xff]
        %v2291 = vld [vmem:[%s2287 + $0x18] sm:$0xff]
        %v2292 = vpack.c.bf16 %v2289, %v2288
        %v2293 = vpack.c.bf16 %v2291, %v2290
        %s2294 = scalar_lea.vmem [#allocation16], 1
        %v2295 = vld [vmem:[%s2294] sm:$0x1]
        %v2297 = vlaneseq
        %v2298 = vshrl.u32 %v2297, 7
        %v2299 = vsub.s32 0, %v2298
        %v2300 = vrot.slane %v2295, %v2299
        %v2303 = vsel %vm862, %v2286, 0
        %2305 = vmatprep.subr.bf16.mxu0 0
        %2306 = vmatpush1.bf16.msra.mxu0 0
        %2307 = vmatprep.subr.bf16.mxu0 0
        %2308 = vmatpush1.bf16.msra.mxu0 0
        %2309 = vmatprep.subr.bf16.mxu0 0
        %2310 = vmatpush1.bf16.msra.mxu0 0
        %2311 = vmatprep.subr.bf16.mxu0 0
        %2312 = vmatpush1.bf16.msra.mxu0 0
        %2313 = vmatprep.subr.bf16.mxu0 0
        %2314 = vmatpush1.bf16.msra.mxu0 0
        %2315 = vmatprep.subr.bf16.mxu0 0
        %2316 = vmatpush1.bf16.msra.mxu0 0
        %2317 = vmatprep.subr.bf16.mxu0 0
        %2318 = vmatpush1.bf16.msra.mxu0 %v2293
        %2319 = vmatprep.subr.bf16.mxu0 0
        %2320 = vmatpush1.bf16.msra.mxu0 %v2292
        %2321 = vmatprep.subr.bf16.mxu0 0
        %2322 = vmatpush2.bf16.msra.mxu0 0
        %2323 = vmatprep.subr.bf16.mxu0 0
        %2324 = vmatpush2.bf16.msra.mxu0 0
        %2325 = vmatprep.subr.bf16.mxu0 0
        %2326 = vmatpush2.bf16.msra.mxu0 0
        %2327 = vmatprep.subr.bf16.mxu0 0
        %2328 = vmatpush2.bf16.msra.mxu0 0
        %2329 = vmatprep.subr.bf16.mxu0 0
        %2330 = vmatpush2.bf16.msra.mxu0 0
        %2331 = vmatprep.subr.bf16.mxu0 0
        %2332 = vmatpush2.bf16.msra.mxu0 0
        %2333 = vmatprep.subr.bf16.mxu0 0
        %2334 = vmatpush2.bf16.msra.mxu0 0
        %2335 = vmatprep.subr.bf16.mxu0 0
        %2336 = vmatpush2.bf16.msra.mxu0 0
        %2337 = vmatprep.mubr.bf16.mxu0 0
        %2338 = vmatmul.mubr.bf16.gmra.mxu0 %v2303
        %v2339 = vpop.f32.mrf.mxu0
        %v2340 = vadd.f32 %v2300, %v2339
        %v2341 = vpop.f32.mrf.mxu0
        %v2342 = vpop.f32.mrf.mxu0
        %v2343 = vpop.f32.mrf.mxu0
        %2344 = vdwg.mxu0
        %v2345 = vmul.f32 %v2340, 0.5
        %v2346 = vmul.f32 %v2340, 0.044715
        %v2347 = vmul.f32 %v2346, %v2340
        %v2348 = vmul.f32 %v2347, %v2340
        %v2349 = vadd.f32 %v2340, %v2348
        %v2350 = vmul.f32 %v2349, 0.7978846
        %v2351 = vtanh.pop %v2350
        %v2352 = vadd.f32 %v2351, 1.0
        %v2353 = vmul.f32 %v2345, %v2352
        %v2354 = vpack.c.bf16 %v2353, %v2353
        %s2355 = scalar_lea.vmem %s12, 64
        %v2356 = vld [vmem:[%s2355] sm:$0xff]
        %v2357 = vld [vmem:[%s2355 + $0x8] sm:$0xff]
        %v2358 = vld [vmem:[%s2355 + $0x10] sm:$0xff]
        %v2359 = vld [vmem:[%s2355 + $0x18] sm:$0xff]
        %v2360 = vld [vmem:[%s2355 + $0x20] sm:$0xff]
        %v2361 = vld [vmem:[%s2355 + $0x28] sm:$0xff]
        %v2362 = vld [vmem:[%s2355 + $0x30] sm:$0xff]
        %v2363 = vld [vmem:[%s2355 + $0x38] sm:$0xff]
        %v2364 = vpack.c.bf16 %v2357, %v2356
        %v2365 = vpack.c.bf16 %v2359, %v2358
        %v2366 = vpack.c.bf16 %v2361, %v2360
        %v2367 = vpack.c.bf16 %v2363, %v2362
        %s2368 = scalar_lea.vmem [#allocation17], 1
        %v2369 = vld [vmem:[%s2368] sm:$0x1]
        %v2371 = vlaneseq
        %v2372 = vshrl.u32 %v2371, 7
        %v2373 = vsub.s32 0, %v2372
        %v2374 = vrot.slane %v2369, %v2373
        %v2377 = vsel %vm1597, %v2354, 0
        %2379 = vmatprep.subr.bf16.mxu0 0
        %2380 = vmatpush1.bf16.msra.mxu0 0
        %2381 = vmatprep.subr.bf16.mxu0 0
        %2382 = vmatpush1.bf16.msra.mxu0 0
        %2383 = vmatprep.subr.bf16.mxu0 0
        %2384 = vmatpush1.bf16.msra.mxu0 0
        %2385 = vmatprep.subr.bf16.mxu0 0
        %2386 = vmatpush1.bf16.msra.mxu0 0
        %2387 = vmatprep.subr.bf16.mxu0 0
        %2388 = vmatpush1.bf16.msra.mxu0 %v2367
        %2389 = vmatprep.subr.bf16.mxu0 0
        %2390 = vmatpush1.bf16.msra.mxu0 %v2366
        %2391 = vmatprep.subr.bf16.mxu0 0
        %2392 = vmatpush1.bf16.msra.mxu0 %v2365
        %2393 = vmatprep.subr.bf16.mxu0 0
        %2394 = vmatpush1.bf16.msra.mxu0 %v2364
        %2395 = vmatprep.subr.bf16.mxu0 0
        %2396 = vmatpush2.bf16.msra.mxu0 0
        %2397 = vmatprep.subr.bf16.mxu0 0
        %2398 = vmatpush2.bf16.msra.mxu0 0
        %2399 = vmatprep.subr.bf16.mxu0 0
        %2400 = vmatpush2.bf16.msra.mxu0 0
        %2401 = vmatprep.subr.bf16.mxu0 0
        %2402 = vmatpush2.bf16.msra.mxu0 0
        %2403 = vmatprep.subr.bf16.mxu0 0
        %2404 = vmatpush2.bf16.msra.mxu0 0
        %2405 = vmatprep.subr.bf16.mxu0 0
        %2406 = vmatpush2.bf16.msra.mxu0 0
        %2407 = vmatprep.subr.bf16.mxu0 0
        %2408 = vmatpush2.bf16.msra.mxu0 0
        %2409 = vmatprep.subr.bf16.mxu0 0
        %2410 = vmatpush2.bf16.msra.mxu0 0
        %2411 = vmatprep.mubr.bf16.mxu0 0
        %2412 = vmatmul.mubr.bf16.gmra.mxu0 %v2377
        %v2413 = vpop.f32.mrf.mxu0
        %v2414 = vadd.f32 %v2374, %v2413
        %v2415 = vpop.f32.mrf.mxu0
        %v2416 = vpop.f32.mrf.mxu0
        %v2417 = vpop.f32.mrf.mxu0
        %2418 = vdwg.mxu0
        %v2419 = vadd.f32 %v2414, %v2285
        %s2420 = scalar_lea.vmem [#allocation19], 1
        %v2421 = vld [vmem:[%s2420] sm:$0x1]
        %s2422 = scalar_lea.vmem [#allocation20], 1
        %v2423 = vld [vmem:[%s2422] sm:$0x1]
        %v2424 = vsel %vm862, %v2419, 0.0
        %2425 = vadd.xlane.f32.xlu0 %v2424
        %v2426 = vpop.xlane.xlu0 %2425
        %v2427 = vmul.f32 %v2426, %v866
        %v2428 = vsub.f32 %v2419, %v2427
        %v2429 = vmul.f32 %v2428, %v2428
        %v2430 = vsel %vm862, %v2429, 0.0
        %2431 = vadd.xlane.f32.xlu0 %v2430
        %v2432 = vpop.xlane.xlu0 %2431
        %v2433 = vmul.f32 %v2432, %v866
        %v2434 = vadd.f32 %v2433, 1e-12
        %v2435 = vrsqrt.pop %v2434
        %v2436 = vmul.f32 %v2428, %v2435
        %v2438 = vlaneseq
        %v2439 = vshrl.u32 %v2438, 7
        %v2440 = vsub.s32 0, %v2439
        %v2441 = vrot.slane %v2421, %v2440
        %v2443 = vmul.f32 %v2436, %v2441
        %v2445 = vlaneseq
        %v2446 = vshrl.u32 %v2445, 7
        %v2447 = vsub.s32 0, %v2446
        %v2448 = vrot.slane %v2423, %v2447
        %v2450 = vadd.f32 %v2443, %v2448
        %v2451 = vpack.c.bf16 %v2450, %v2450
        %v2452 = vld [vmem:[#allocation22] sm:$0xff]
        %v2453 = vld [vmem:[#allocation22 + $0x8] sm:$0xff]
        %v2454 = vld [vmem:[#allocation22 + $0x10] sm:$0xff]
        %v2455 = vld [vmem:[#allocation22 + $0x18] sm:$0xff]
        %v2456 = vpack.c.bf16 %v2453, %v2452
        %v2457 = vpack.c.bf16 %v2455, %v2454
        %v2458 = vld [vmem:[#allocation23] sm:$0x1]
        %v2460 = vsel %vm862, %v2451, 0
        %2462 = vmatprep.subr.bf16.mxu0 0
        %2463 = vmatpush1.bf16.msra.mxu0 0
        %2464 = vmatprep.subr.bf16.mxu0 0
        %2465 = vmatpush1.bf16.msra.mxu0 0
        %2466 = vmatprep.subr.bf16.mxu0 0
        %2467 = vmatpush1.bf16.msra.mxu0 0
        %2468 = vmatprep.subr.bf16.mxu0 0
        %2469 = vmatpush1.bf16.msra.mxu0 0
        %2470 = vmatprep.subr.bf16.mxu0 0
        %2471 = vmatpush1.bf16.msra.mxu0 0
        %2472 = vmatprep.subr.bf16.mxu0 0
        %2473 = vmatpush1.bf16.msra.mxu0 0
        %2474 = vmatprep.subr.bf16.mxu0 0
        %2475 = vmatpush1.bf16.msra.mxu0 %v2457
        %2476 = vmatprep.subr.bf16.mxu0 0
        %2477 = vmatpush1.bf16.msra.mxu0 %v2456
        %2478 = vmatprep.subr.bf16.mxu0 0
        %2479 = vmatpush2.bf16.msra.mxu0 0
        %2480 = vmatprep.subr.bf16.mxu0 0
        %2481 = vmatpush2.bf16.msra.mxu0 0
        %2482 = vmatprep.subr.bf16.mxu0 0
        %2483 = vmatpush2.bf16.msra.mxu0 0
        %2484 = vmatprep.subr.bf16.mxu0 0
        %2485 = vmatpush2.bf16.msra.mxu0 0
        %2486 = vmatprep.subr.bf16.mxu0 0
        %2487 = vmatpush2.bf16.msra.mxu0 0
        %2488 = vmatprep.subr.bf16.mxu0 0
        %2489 = vmatpush2.bf16.msra.mxu0 0
        %2490 = vmatprep.subr.bf16.mxu0 0
        %2491 = vmatpush2.bf16.msra.mxu0 0
        %2492 = vmatprep.subr.bf16.mxu0 0
        %2493 = vmatpush2.bf16.msra.mxu0 0
        %2494 = vmatprep.mubr.bf16.mxu0 0
        %2495 = vmatmul.mubr.bf16.gmra.mxu0 %v2460
        %v2496 = vpop.f32.mrf.mxu0
        %v2497 = vadd.f32 %v2458, %v2496
        %v2498 = vpop.f32.mrf.mxu0
        %v2499 = vpop.f32.mrf.mxu0
        %v2500 = vpop.f32.mrf.mxu0
        %2501 = vdwg.mxu0
        %v2502 = vtanh.pop %v2497
        %v2503 = vpack.c.bf16 %v2502, %v2502
        %v2504 = vld [vmem:[%s18] sm:$0xff]
        %v2505 = vld [vmem:[%s18 + $0x8] sm:$0xff]
        %v2506 = vld [vmem:[%s18 + $0x10] sm:$0xff]
        %v2507 = vld [vmem:[%s18 + $0x18] sm:$0xff]
        %v2508 = vpack.c.bf16 %v2505, %v2504
        %v2509 = vpack.c.bf16 %v2507, %v2506
        %v2510 = vld [vmem:[#allocation25] sm:$0x1]
        %v2512 = vsel %vm862, %v2503, 0
        %2514 = vmatprep.subr.bf16.mxu0 0
        %2515 = vmatpush1.bf16.msra.mxu0 0
        %2516 = vmatprep.subr.bf16.mxu0 0
        %2517 = vmatpush1.bf16.msra.mxu0 0
        %2518 = vmatprep.subr.bf16.mxu0 0
        %2519 = vmatpush1.bf16.msra.mxu0 0
        %2520 = vmatprep.subr.bf16.mxu0 0
        %2521 = vmatpush1.bf16.msra.mxu0 0
        %2522 = vmatprep.subr.bf16.mxu0 0
        %2523 = vmatpush1.bf16.msra.mxu0 0
        %2524 = vmatprep.subr.bf16.mxu0 0
        %2525 = vmatpush1.bf16.msra.mxu0 0
        %2526 = vmatprep.subr.bf16.mxu0 0
        %2527 = vmatpush1.bf16.msra.mxu0 %v2509
        %2528 = vmatprep.subr.bf16.mxu0 0
        %2529 = vmatpush1.bf16.msra.mxu0 %v2508
        %2530 = vmatprep.subr.bf16.mxu0 0
        %2531 = vmatpush2.bf16.msra.mxu0 0
        %2532 = vmatprep.subr.bf16.mxu0 0
        %2533 = vmatpush2.bf16.msra.mxu0 0
        %2534 = vmatprep.subr.bf16.mxu0 0
        %2535 = vmatpush2.bf16.msra.mxu0 0
        %2536 = vmatprep.subr.bf16.mxu0 0
        %2537 = vmatpush2.bf16.msra.mxu0 0
        %2538 = vmatprep.subr.bf16.mxu0 0
        %2539 = vmatpush2.bf16.msra.mxu0 0
        %2540 = vmatprep.subr.bf16.mxu0 0
        %2541 = vmatpush2.bf16.msra.mxu0 0
        %2542 = vmatprep.subr.bf16.mxu0 0
        %2543 = vmatpush2.bf16.msra.mxu0 0
        %2544 = vmatprep.subr.bf16.mxu0 0
        %2545 = vmatpush2.bf16.msra.mxu0 0
        %2546 = vmatprep.mubr.bf16.mxu0 0
        %2547 = vmatmul.mubr.bf16.gmra.mxu0 %v2512
        %v2548 = vpop.f32.mrf.mxu0
        %v2549 = vadd.f32 %v2510, %v2548
        %v2550 = vpop.f32.mrf.mxu0
        %v2551 = vpop.f32.mrf.mxu0
        %v2552 = vpop.f32.mrf.mxu0
        %2553 = vdwg.mxu0
        %2554 = vst [vmem:[%s857] sm:$0x1] %v2549
        %s2555 = sand.u32 %s484, 1
        %s2556 = scalar_lea.sflag [#allocation4], %s2555
        %s2557 = sand.u32 %s484, 1
        %s2558 = scalar_lea.vmem [#allocation26], %s2557
        // Predicated region
        $region161: #{tpu_custom_call.1} parent=99 // pred_check
          %p2559 = pneg %p494
        $region162: #{tpu_custom_call.1} parent=99 // pred_check_branch
          %2561 = sbr.rel (%p2559) target = $region164
        $region163: #{tpu_custom_call.1} parent=99 // pred_region
          %s2563 = ssub.s32 16, 16
          %2564 = vsyncadd %s2556, %s2563
          %s2565 = smul.addr %s46, 16
          %s2566 = scalar_lea.hbm %s20, %s2565
          %s2568 = sshll.u32 %s2558, 4
          %s2569 = int_to_ptr.vmem [resolvable:$true] %s2568
          %2571 = dma.vmem_to_hbm [thread:$0]  %s2569, 16, %s2566, %s2556
        $region164: #{tpu_custom_call.1} parent=99 // pred_fallthru
          _
      $region100: #{tpu_custom_call.1} parent=5 // pred_fallthru
        _
      %p2572 = scmp.le.s32.totalorder 2, %s41
      // Predicated region
      $region165: #{tpu_custom_call.1} parent=5 // pred_check
        %p2573 = pneg %p2572
      $region166: #{tpu_custom_call.1} parent=5 // pred_check_branch
        %2575 = sbr.rel (%p2573) target = $region168
      $region167: #{tpu_custom_call.1} parent=5 // pred_region
        %s2576 = ssub.s32 %s41, 2
        // Predicated region
        $region169: #{tpu_custom_call.1} parent=167 // pred_check
          %p2577 = pneg %p500
        $region170: #{tpu_custom_call.1} parent=167 // pred_check_branch
          %2579 = sbr.rel (%p2577) target = $region172
        $region171: #{tpu_custom_call.1} parent=167 // pred_region
          %s2580 = sand.u32 %s485, 1
          %s2581 = scalar_lea.sflag [#allocation4], %s2580
          %s2582 = sand.u32 %s485, 1
          %s2583 = scalar_lea.vmem [#allocation26], %s2582
          %2584 = dma.done %s2581, 16
        $region172: #{tpu_custom_call.1} parent=167 // pred_fallthru
          _
      $region168: #{tpu_custom_call.1} parent=5 // pred_fallthru
        _
    $region6: #{tpu_custom_call.1} parent=1 // loop_footer
      %s45 = sadd.s32 1, %s41
    $region7: #{tpu_custom_call.1} parent=1 // loop_footer_branch
      %40 = sbr.rel target = $region3
    $region8: #{tpu_custom_call.1} parent=1 // loop_exit
      _
    %2585 = vsyncpa [#allocation3], 1
    %s2586 = scalar_lea.sflag [#allocation3], 1
    %2587 = vsyncpa %s2586, 1
    %2588 = vsyncpa [#allocation6], 1
    %s2589 = scalar_lea.sflag [#allocation6], 1
    %2590 = vsyncpa %s2589, 1
    %2591 = vsyncpa [#allocation9], 1
    %2592 = vsyncpa [#allocation12], 1
    %2593 = vsyncpa [#allocation15], 1
    %2594 = vsyncpa [#allocation18], 1
    %2595 = vsyncpa [#allocation21], 1
    %2596 = vsyncpa [#allocation24], 1
    %2597 = vsyncpa [#allocation4], 1
    %s2598 = scalar_lea.sflag [#allocation4], 1
    %2599 = vsyncpa %s2598, 1

</llo_original>
